<compile_context>
chip_gen: v7x
topology: tpu7x:2x2x1
jax: 0.10.0
libtpu: 0.0.40
codegen_flags: <defaults>
</compile_context>

<pallas_src>
import functools
import math

import jax
import jax.numpy as jnp
from jax.experimental import pallas as pl
from jax.experimental.pallas import tpu as pltpu


ENC_N_LAYERS = 3
KERNEL_SIZE = 4
STRIDE = 2
LN_EPS = 1e-6                  # nn.LayerNorm(eps=1e-6) everywhere in the module
MATMUL_DTYPE = jnp.bfloat16    # MXU operand dtype (f32 accumulate)
ACT_DTYPE = jnp.bfloat16       # inter-kernel activation dtype
VMEM_LIMIT = 32 * 1024 * 1024  # explicit scoped-VMEM limit (safe on v5e/v6e/v7x)


# ---------------------------------------------------------------------------
# small helpers
# ---------------------------------------------------------------------------

def _const2d(a):
    # full-array (revisited across the 1-D batch grid) BlockSpec for a 2-D constant
    return pl.BlockSpec(a.shape, lambda b: (0, 0))


def _layernorm(x, g, b, eps):
    mu = jnp.mean(x, axis=-1, keepdims=True)
    var = jnp.mean(jnp.square(x - mu), axis=-1, keepdims=True)
    return (x - mu) * jax.lax.rsqrt(var + eps) * g + b


def _sigmoid(x):
    # reciprocal on the EUP (free slot) instead of a VALU divide
    return pl.reciprocal(1.0 + jnp.exp(-x), approx=True)


# ---------------------------------------------------------------------------
# Pallas kernels
# ---------------------------------------------------------------------------

def _encoder_block_kernel(x_ref, w1_ref, b1_ref, w2_ref, b2_ref, o_ref):
    """Fused encoder block, one batch element per grid step.

    Input is the stride-pairs reshape (Lh, S*Cin) of the (Lp, Cin) signal
    (free reshape outside).  Output position t uses rows t and t+1, so im2col is
    two static slices + a split matmul (no HBM patch array, no lane concat).
    """
    cdt = w1_ref.dtype
    xr = x_ref[0]                                   # (Lh, S*Cin)
    lh, sc = xr.shape
    lout = lh - 1
    a = xr[:lout, :].astype(cdt)                    # taps k = 0, 1
    b = xr[1:lh, :].astype(cdt)                     # taps k = 2, 3
    w1 = w1_ref[...]                                # (2*sc, H), k-major rows
    h = (jnp.dot(a, w1[:sc, :], preferred_element_type=jnp.float32)
         + jnp.dot(b, w1[sc:, :], preferred_element_type=jnp.float32)
         + b1_ref[...])
    h = jnp.maximum(h, 0.0)                         # Conv+BN+ReLU
    y = jnp.dot(h.astype(cdt), w2_ref[...],
                preferred_element_type=jnp.float32) + b2_ref[...]
    hh = y.shape[-1] // 2
    o_ref[0] = (y[:, :hh] * _sigmoid(y[:, hh:])).astype(o_ref.dtype)   # GLU


def _tsfm_layer_kernel(*refs, nh, dk, eps, scale, has_pre):
    """Fully fused transformer encoder layer, one batch element per grid step.

    If has_pre: also applies tsfm_conv1 (1x1) + the TransformerEncoder's leading
    LayerNorm before the layer (positional encoding is identity, dropouts are 0/eval).
    """
    if has_pre:
        (x_ref, pw_ref, pb_ref, g0_ref, b0_ref,
         wqkv_ref, wo_ref, g1_ref, be1_ref,
         w1_ref, b1_ref, w2_ref, b2_ref, g2_ref, be2_ref, o_ref) = refs
    else:
        (x_ref, wqkv_ref, wo_ref, g1_ref, be1_ref,
         w1_ref, b1_ref, w2_ref, b2_ref, g2_ref, be2_ref, o_ref) = refs

    cdt = wqkv_ref.dtype
    xin = x_ref[0]                                                    # (L, Din)
    if has_pre:
        xp = jnp.dot(xin.astype(cdt), pw_ref[...],
                     preferred_element_type=jnp.float32) + pb_ref[...]
        x = _layernorm(xp, g0_ref[...], b0_ref[...], eps)             # (L, D) f32
    else:
        x = xin.astype(jnp.float32)

    qkv = jnp.dot(x.astype(cdt), wqkv_ref[...],
                  preferred_element_type=jnp.float32)                 # (L, 3*nh*dk)
    d3 = nh * dk

    heads = []
    for h in range(nh):                                               # static unroll
        c = h * dk
        qh = qkv[:, c:c + dk]
        kh = qkv[:, d3 + c:d3 + c + dk]
        vh = qkv[:, 2 * d3 + c:2 * d3 + c + dk]
        s = jax.lax.dot_general(qh.astype(cdt), kh.astype(cdt),
                                (((1,), (1,)), ((), ())),
                                preferred_element_type=jnp.float32) * scale   # (L, L)
        s = s - jnp.max(s, axis=-1, keepdims=True)
        e = jnp.exp(s)
        p = e * pl.reciprocal(jnp.sum(e, axis=-1, keepdims=True), approx=True)
        heads.append(jnp.dot(p.astype(cdt), vh.astype(cdt),
                             preferred_element_type=jnp.float32))     # (L, dk)
    ho = jnp.concatenate(heads, axis=-1)                              # (L, nh*dk)
    o = jnp.dot(ho.astype(cdt), wo_ref[...],
                preferred_element_type=jnp.float32)                   # single out-proj

    x1 = _layernorm(o + x, g1_ref[...], be1_ref[...], eps)            # MHA res + LN
    hmid = jnp.dot(x1.astype(cdt), w1_ref[...],
                   preferred_element_type=jnp.float32) + b1_ref[...]
    hmid = jnp.maximum(hmid, 0.0)
    y2 = jnp.dot(hmid.astype(cdt), w2_ref[...],
                 preferred_element_type=jnp.float32) + b2_ref[...]
    o_ref[0] = _layernorm(y2 + x1, g2_ref[...], be2_ref[...], eps).astype(o_ref.dtype)


def _decoder_block_kernel(*refs, has_proj, use_relu):
    """Fused decoder block, one batch element per grid step.

    (optional tsfm_conv2 1x1 projection) -> skip-add -> 1x1 conv + bias -> GLU ->
    transposed conv (K=4, S=2) as two matmuls whose overlap-add is resolved in
    registers in the (Lin+1, 2*Cout) "pair" layout -> bias (+ BN + ReLU) -> ONE store.
    Interleaving pairs back to length order is a free reshape outside.
    """
    if has_proj:
        (x_ref, skip_ref, pw_ref, pb_ref,
         w1_ref, b1_ref, wt_ref, btp_ref, o_ref) = refs
    else:
        (x_ref, skip_ref, w1_ref, b1_ref, wt_ref, btp_ref, o_ref) = refs

    cdt = w1_ref.dtype
    xin = x_ref[0]                                                    # (Lin, Din)
    if has_proj:
        x = jnp.dot(xin.astype(cdt), pw_ref[...],
                    preferred_element_type=jnp.float32) + pb_ref[...]  # tsfm_conv2
    else:
        x = xin.astype(jnp.float32)
    x = x + skip_ref[0].astype(jnp.float32)                           # skip-add

    y = jnp.dot(x.astype(cdt), w1_ref[...],
                preferred_element_type=jnp.float32) + b1_ref[...]     # (Lin, 2H)
    hh = y.shape[-1] // 2
    u = (y[:, :hh] * _sigmoid(y[:, hh:])).astype(cdt)                 # GLU, (Lin, H)

    wt = wt_ref[...]                                                  # (H, 4*Cout)
    c2 = wt.shape[-1] // 2
    top = jnp.dot(u, wt[:, :c2], preferred_element_type=jnp.float32)  # taps k=0,1
    bot = jnp.dot(u, wt[:, c2:], preferred_element_type=jnp.float32)  # taps k=2,3

    z = jnp.zeros((1, c2), jnp.float32)
    out = (btp_ref[...]
           + jnp.concatenate([top, z], axis=0)     # pair j gets top[j]
           + jnp.concatenate([z, bot], axis=0))    # pair j gets bot[j-1]
    if use_relu:
        out = jnp.maximum(out, 0.0)
    o_ref[0] = out.astype(o_ref.dtype)             # single store, no RMW


# ---------------------------------------------------------------------------
# Pallas wrappers
# ---------------------------------------------------------------------------

def encoder_block(x, blk, S=STRIDE):
    B, Lp, Cin = x.shape
    assert Lp % S == 0
    Lh = Lp // S
    Lout = Lh - 1
    H = blk["b1"].shape[-1]
    xr = x.reshape(B, Lh, S * Cin)                  # free contiguous reshape
    return pl.pallas_call(
        _encoder_block_kernel,
        grid=(B,),
        in_specs=[pl.BlockSpec((1, Lh, S * Cin), lambda b: (b, 0, 0)),
                  _const2d(blk["w1"]), _const2d(blk["b1"]),
                  _const2d(blk["w2"]), _const2d(blk["b2"])],
        out_specs=pl.BlockSpec((1, Lout, H), lambda b: (b, 0, 0)),
        out_shape=jax.ShapeDtypeStruct((B, Lout, H), ACT_DTYPE),
        compiler_params=pltpu.CompilerParams(dimension_semantics=("parallel",),
                                             vmem_limit_bytes=VMEM_LIMIT),
    )(xr, blk["w1"], blk["b1"], blk["w2"], blk["b2"])


def transformer_layer(x, lp, pre=None, eps=LN_EPS):
    B, L, Din = x.shape
    nh, dk = lp["n_head"], lp["d_k"]
    D = lp["wo"].shape[-1]
    has_pre = pre is not None

    args = [x]
    in_specs = [pl.BlockSpec((1, L, Din), lambda b: (b, 0, 0))]
    if has_pre:
        pre_args = [pre["w"], pre["b"], pre["ln_g"], pre["ln_b"]]
        args += pre_args
        in_specs += [_const2d(a) for a in pre_args]
    consts = [lp["wqkv"], lp["wo"], lp["ln1_g"], lp["ln1_b"],
              lp["w1"], lp["b1"], lp["w2"], lp["b2"], lp["ln2_g"], lp["ln2_b"]]
    args += consts
    in_specs += [_const2d(a) for a in consts]

    return pl.pallas_call(
        functools.partial(_tsfm_layer_kernel, nh=nh, dk=dk, eps=eps,
                          scale=1.0 / (dk ** 0.5), has_pre=has_pre),
        grid=(B,),
        in_specs=in_specs,
        out_specs=pl.BlockSpec((1, L, D), lambda b: (b, 0, 0)),
        out_shape=jax.ShapeDtypeStruct((B, L, D), ACT_DTYPE),
        compiler_params=pltpu.CompilerParams(dimension_semantics=("parallel",),
                                             vmem_limit_bytes=VMEM_LIMIT),
    )(*args)


def decoder_block(x, skip, blk, proj=None, out_dtype=ACT_DTYPE):
    B, Lin, Din = x.shape
    H = skip.shape[-1]
    C2 = blk["bt_pair"].shape[-1]
    Cout = C2 // 2
    has_proj = proj is not None

    args = [x, skip]
    in_specs = [pl.BlockSpec((1, Lin, Din), lambda b: (b, 0, 0)),
                pl.BlockSpec((1, Lin, H), lambda b: (b, 0, 0))]
    if has_proj:
        args += [proj[0], proj[1]]
        in_specs += [_const2d(proj[0]), _const2d(proj[1])]
    consts = [blk["w1"], blk["b1"], blk["wt"], blk["bt_pair"]]
    args += consts
    in_specs += [_const2d(a) for a in consts]

    out = pl.pallas_call(
        functools.partial(_decoder_block_kernel, has_proj=has_proj,
                          use_relu=(blk["act"] == "relu")),
        grid=(B,),
        in_specs=in_specs,
        out_specs=pl.BlockSpec((1, Lin + 1, C2), lambda b: (b, 0, 0)),
        out_shape=jax.ShapeDtypeStruct((B, Lin + 1, C2), out_dtype),
        compiler_params=pltpu.CompilerParams(dimension_semantics=("parallel",),
                                             vmem_limit_bytes=VMEM_LIMIT),
    )(*args)
    # interleave even/odd output positions: (B, Lin+1, 2*Cout) -> (B, 2*Lin+2, Cout)
    return out.reshape(B, 2 * (Lin + 1), Cout)


# ---------------------------------------------------------------------------
# Full CleanUNet forward
# ---------------------------------------------------------------------------

def padded_length(L, D, K, S):
    for _ in range(D):
        L = 1 if L < K else 1 + math.ceil((L - K) / S)
    for _ in range(D):
        L = (L - 1) * S + K
    return int(L)


def clean_unet_forward(params, noisy_audio):
    # noisy_audio: (B, C, L) NCL, exactly like the PyTorch module.
    B, C, L = noisy_audio.shape
    Lpad = padded_length(L, ENC_N_LAYERS, KERNEL_SIZE, STRIDE)
    x = jnp.pad(noisy_audio.astype(jnp.float32), ((0, 0), (0, 0), (0, Lpad - L)))
    x = jnp.transpose(x, (0, 2, 1)).astype(ACT_DTYPE)   # channels-last (B, L, C)

    skips = []
    for blk in params["encoder"]:
        x = encoder_block(x, blk)                       # fused conv+BN+ReLU+1x1+BN+GLU
        skips.append(x)
    skips = skips[::-1]

    layers = params["tsfm"]["layers"]
    assert len(layers) >= 1, "tsfm_n_layers >= 1 required (conv1/LN0 fused into layer 0)"
    for li, lp in enumerate(layers):
        pre = params["tsfm"]["pre"] if li == 0 else None
        x = transformer_layer(x, lp, pre=pre)           # one fused kernel per layer

    n_dec = len(params["decoder"])
    for i, blk in enumerate(params["decoder"]):
        skip = skips[i][:, : x.shape[1], :]
        proj = (params["tc2_w"], params["tc2_b"]) if i == 0 else None   # fuse tsfm_conv2
        out_dtype = jnp.float32 if i == n_dec - 1 else ACT_DTYPE
        x = decoder_block(x, skip, blk, proj=proj, out_dtype=out_dtype)

    x = x[:, :L, :]
    return jnp.transpose(x, (0, 2, 1))                  # back to NCL


# ---------------------------------------------------------------------------
# Deterministic parameter construction (synthetic init, no checkpoint)
# ---------------------------------------------------------------------------

def _init_conv(key, cout, cin, K):
    kw, kb = jax.random.split(key)
    w = 0.1 * jax.random.normal(kw, (cout, cin, K), jnp.float32)
    b = 0.1 * jax.random.normal(kb, (cout,), jnp.float32)
    scale = 1.0 / jnp.sqrt(10.0 * jnp.std(w))            # weight_scaling_init
    return w * scale, b * scale


def _init_convT(key, cin, cout, K):
    kw, kb = jax.random.split(key)
    w = 0.1 * jax.random.normal(kw, (cin, cout, K), jnp.float32)
    b = 0.1 * jax.random.normal(kb, (cout,), jnp.float32)
    scale = 1.0 / jnp.sqrt(10.0 * jnp.std(w))            # weight_scaling_init
    return w * scale, b * scale


def _init_bn_affine(key, c, eps=1e-5):
    # Eval-mode BatchNorm1d as a per-channel affine y = s*x + t (running stats).
    kg, kb = jax.random.split(key)
    gamma = 1.0 + 0.05 * jax.random.normal(kg, (c,), jnp.float32)
    beta = 0.05 * jax.random.normal(kb, (c,), jnp.float32)
    rm = jnp.zeros((c,), jnp.float32)
    rv = jnp.ones((c,), jnp.float32)
    s = gamma / jnp.sqrt(rv + eps)
    t = beta - s * rm
    return s, t


def _init_linear(key, din, dout, bias=True):
    kw, kb = jax.random.split(key)
    w = jax.random.normal(kw, (din, dout), jnp.float32) * (din ** -0.5)
    b = 0.01 * jax.random.normal(kb, (dout,), jnp.float32) if bias else None
    return w, b


def _init_ln(key, d):
    kg, kb = jax.random.split(key)
    g = 1.0 + 0.05 * jax.random.normal(kg, (d,), jnp.float32)
    b = 0.05 * jax.random.normal(kb, (d,), jnp.float32)
    return g, b


def build_params(channels_input=3, channels_output=3, channels_H=8, max_H=256,
                 encoder_n_layers=ENC_N_LAYERS, kernel_size=KERNEL_SIZE,
                 tsfm_n_layers=1, tsfm_n_head=4, tsfm_d_model=64,
                 tsfm_d_inner=128, seed=0):
    keys = iter(jax.random.split(jax.random.PRNGKey(seed), 256))
    nk = lambda: next(keys)
    mdt = MATMUL_DTYPE

    enc, dec = [], []
    cin, cout, cH = channels_input, channels_output, channels_H
    for i in range(encoder_n_layers):
        H = cH
        # encoder block: Conv(K,S)+BN+ReLU, Conv1x1+BN+GLU  (BN folded into conv)
        w1, b1 = _init_conv(nk(), H, cin, kernel_size)
        s1, t1 = _init_bn_affine(nk(), H)
        w1f = (w1 * s1[:, None, None]).transpose(2, 1, 0).reshape(kernel_size * cin, H)
        b1f = (s1 * b1 + t1).reshape(1, H)
        w2, b2 = _init_conv(nk(), 2 * H, H, 1)
        s2, t2 = _init_bn_affine(nk(), 2 * H)
        w2f = (w2 * s2[:, None, None])[:, :, 0].T
        b2f = (s2 * b2 + t2).reshape(1, 2 * H)
        enc.append(dict(w1=w1f.astype(mdt), b1=b1f, w2=w2f.astype(mdt), b2=b2f))

        # matching decoder block: Conv1x1+BN+GLU, ConvT(K,S) [+BN+ReLU if i>0]
        wd, bd = _init_conv(nk(), 2 * H, H, 1)
        sd, td = _init_bn_affine(nk(), 2 * H)
        wdf = (wd * sd[:, None, None])[:, :, 0].T
        bdf = (sd * bd + td).reshape(1, 2 * H)
        wt, bt = _init_convT(nk(), H, cout, kernel_size)
        if i == 0:
            st = jnp.ones((cout,), jnp.float32)
            tt = jnp.zeros((cout,), jnp.float32)
            act = "none"
        else:
            st, tt = _init_bn_affine(nk(), cout)
            act = "relu"
        wtf = (wt * st[None, :, None]).transpose(0, 2, 1).reshape(H, kernel_size * cout)
        btf = st * bt + tt
        bt_pair = jnp.concatenate([btf, btf]).reshape(1, 2 * cout)   # bias in pair layout
        block = dict(w1=wdf.astype(mdt), b1=bdf, wt=wtf.astype(mdt),
                     bt_pair=bt_pair, act=act)
        if i == 0:
            dec.append(block)
        else:
            dec.insert(0, block)

        cin, cout = H, H
        cH = min(H * 2, max_H)

    tw1, tb1 = _init_conv(nk(), tsfm_d_model, cout, 1)
    tw2, tb2 = _init_conv(nk(), cout, tsfm_d_model, 1)
    tc1_w = tw1[:, :, 0].T.astype(mdt)
    tc1_b = tb1.reshape(1, tsfm_d_model)
    tc2_w = tw2[:, :, 0].T.astype(mdt)
    tc2_b = tb2.reshape(1, cout)

    d_k = tsfm_d_model // tsfm_n_head
    layers = []
    for _ in range(tsfm_n_layers):
        wq, _ = _init_linear(nk(), tsfm_d_model, tsfm_n_head * d_k, bias=False)
        wk, _ = _init_linear(nk(), tsfm_d_model, tsfm_n_head * d_k, bias=False)
        wv, _ = _init_linear(nk(), tsfm_d_model, tsfm_n_head * d_k, bias=False)
        wo, _ = _init_linear(nk(), tsfm_n_head * d_k, tsfm_d_model, bias=False)
        ln1_g, ln1_b = _init_ln(nk(), tsfm_d_model)
        w1, bb1 = _init_linear(nk(), tsfm_d_model, tsfm_d_inner, bias=True)
        w2, bb2 = _init_linear(nk(), tsfm_d_inner, tsfm_d_model, bias=True)
        ln2_g, ln2_b = _init_ln(nk(), tsfm_d_model)
        layers.append(dict(
            n_head=tsfm_n_head, d_k=d_k,
            wqkv=jnp.concatenate([wq, wk, wv], axis=1).astype(mdt),
            wo=wo.astype(mdt),
            ln1_g=ln1_g.reshape(1, -1), ln1_b=ln1_b.reshape(1, -1),
            w1=w1.astype(mdt), b1=bb1.reshape(1, -1),
            w2=w2.astype(mdt), b2=bb2.reshape(1, -1),
            ln2_g=ln2_g.reshape(1, -1), ln2_b=ln2_b.reshape(1, -1)))
    ln0_g, ln0_b = _init_ln(nk(), tsfm_d_model)

    return dict(encoder=enc, decoder=dec,
                tc2_w=tc2_w, tc2_b=tc2_b,
                tsfm=dict(pre=dict(w=tc1_w, b=tc1_b,
                                   ln_g=ln0_g.reshape(1, -1), ln_b=ln0_b.reshape(1, -1)),
                          layers=layers))


if __name__ == "__main__":
    B, C_IN, L = 2, 3, 78        # L=78 -> encoder lengths 38, 18, 8 (no extra pad)
    params = build_params()
    noisy = jax.random.normal(jax.random.PRNGKey(0), (B, C_IN, L), jnp.float32)

    fwd = jax.jit(lambda audio: clean_unet_forward(params, audio))
    out = fwd(noisy)
    out = jax.block_until_ready(out)

    assert out.shape == (B, 3, L), out.shape
    assert bool(jnp.all(jnp.isfinite(out)))
    print("KERNEL_OK")
</pallas_src>

<mosaic_0001>
module attributes {stable_mosaic.version = 11 : i64} {
  func.func @_encoder_block_kernel(%arg0: i32, %arg1: memref<1x9x32xbf16, #tpu.memory_space<vmem>>, %arg2: memref<64x32xbf16, #tpu.memory_space<vmem>>, %arg3: memref<1x32xf32, #tpu.memory_space<vmem>>, %arg4: memref<32x64xbf16, #tpu.memory_space<vmem>>, %arg5: memref<1x64xf32, #tpu.memory_space<vmem>>, %arg6: memref<1x8x32xbf16, #tpu.memory_space<vmem>>) attributes {dimension_semantics = [#tpu.dimension_semantics<parallel>], iteration_bounds = array<i64: 2>, scalar_prefetch = 0 : i64, scratch_operands = 0 : i64, tpu.core_type = #tpu.core_type<tc>, window_params = [{transform_indices = @transform_0, window_bounds = array<i64: 1, 9, 32>}, {pipeline_mode = #tpu.pipeline_mode<synchronous>, transform_indices = @transform_1, window_bounds = array<i64: 64, 32>}, {pipeline_mode = #tpu.pipeline_mode<synchronous>, transform_indices = @transform_2, window_bounds = array<i64: 1, 32>}, {pipeline_mode = #tpu.pipeline_mode<synchronous>, transform_indices = @transform_3, window_bounds = array<i64: 32, 64>}, {pipeline_mode = #tpu.pipeline_mode<synchronous>, transform_indices = @transform_4, window_bounds = array<i64: 1, 64>}, {transform_indices = @transform_5, window_bounds = array<i64: 1, 8, 32>}]} {
    %c0 = arith.constant 0 : index
    %c0_0 = arith.constant 0 : index
    %c0_1 = arith.constant 0 : index
    %0 = vector.load %arg1[%c0, %c0_0, %c0_1] : memref<1x9x32xbf16, #tpu.memory_space<vmem>>, vector<1x9x32xbf16>
    %1 = vector.shape_cast %0 : vector<1x9x32xbf16> to vector<9x32xbf16>
    %2 = vector.extract_strided_slice %1 {offsets = [0, 0], sizes = [8, 32], strides = [1, 1]} : vector<9x32xbf16> to vector<8x32xbf16>
    %3 = vector.extract_strided_slice %1 {offsets = [1, 0], sizes = [8, 32], strides = [1, 1]} : vector<9x32xbf16> to vector<8x32xbf16>
    %c0_2 = arith.constant 0 : index
    %c0_3 = arith.constant 0 : index
    %4 = vector.load %arg2[%c0_2, %c0_3] : memref<64x32xbf16, #tpu.memory_space<vmem>>, vector<64x32xbf16>
    %5 = vector.extract_strided_slice %4 {offsets = [0, 0], sizes = [32, 32], strides = [1, 1]} : vector<64x32xbf16> to vector<32x32xbf16>
    %cst = arith.constant dense<0.000000e+00> : vector<8x32xf32>
    %6 = tpu.matmul %2, %5, %cst {dimension_numbers = #tpu.dot_dimension_numbers<[1], [0], [0], [1], [0, 0, 1, 1], [], []>} : vector<8x32xbf16>, vector<32x32xbf16>, vector<8x32xf32> -> vector<8x32xf32>
    %7 = vector.extract_strided_slice %4 {offsets = [32, 0], sizes = [32, 32], strides = [1, 1]} : vector<64x32xbf16> to vector<32x32xbf16>
    %cst_4 = arith.constant dense<0.000000e+00> : vector<8x32xf32>
    %8 = tpu.matmul %3, %7, %cst_4 {dimension_numbers = #tpu.dot_dimension_numbers<[1], [0], [0], [1], [0, 0, 1, 1], [], []>} : vector<8x32xbf16>, vector<32x32xbf16>, vector<8x32xf32> -> vector<8x32xf32>
    %9 = arith.addf %6, %8 : vector<8x32xf32>
    %c0_5 = arith.constant 0 : index
    %c0_6 = arith.constant 0 : index
    %10 = vector.load %arg3[%c0_5, %c0_6] : memref<1x32xf32, #tpu.memory_space<vmem>>, vector<1x32xf32>
    %11 = vector.broadcast %10 : vector<1x32xf32> to vector<8x32xf32>
    %12 = arith.addf %9, %11 : vector<8x32xf32>
    %cst_7 = arith.constant 0.000000e+00 : f32
    %13 = vector.broadcast %cst_7 : f32 to vector<8x32xf32>
    %14 = arith.maximumf %12, %13 : vector<8x32xf32>
    %15 = arith.truncf %14 : vector<8x32xf32> to vector<8x32xbf16>
    %c0_8 = arith.constant 0 : index
    %c0_9 = arith.constant 0 : index
    %16 = vector.load %arg4[%c0_8, %c0_9] : memref<32x64xbf16, #tpu.memory_space<vmem>>, vector<32x64xbf16>
    %cst_10 = arith.constant dense<0.000000e+00> : vector<8x64xf32>
    %17 = tpu.matmul %15, %16, %cst_10 {dimension_numbers = #tpu.dot_dimension_numbers<[1], [0], [0], [1], [0, 0, 1, 1], [], []>} : vector<8x32xbf16>, vector<32x64xbf16>, vector<8x64xf32> -> vector<8x64xf32>
    %c0_11 = arith.constant 0 : index
    %c0_12 = arith.constant 0 : index
    %18 = vector.load %arg5[%c0_11, %c0_12] : memref<1x64xf32, #tpu.memory_space<vmem>>, vector<1x64xf32>
    %19 = vector.broadcast %18 : vector<1x64xf32> to vector<8x64xf32>
    %20 = arith.addf %17, %19 : vector<8x64xf32>
    %21 = vector.extract_strided_slice %20 {offsets = [0, 0], sizes = [8, 32], strides = [1, 1]} : vector<8x64xf32> to vector<8x32xf32>
    %22 = vector.extract_strided_slice %20 {offsets = [0, 32], sizes = [8, 32], strides = [1, 1]} : vector<8x64xf32> to vector<8x32xf32>
    %cst_13 = arith.constant 0.000000e+00 : f32
    %23 = vector.broadcast %cst_13 : f32 to vector<8x32xf32>
    %24 = arith.subf %23, %22 : vector<8x32xf32>
    %25 = math.exp %24 : vector<8x32xf32>
    %cst_14 = arith.constant 1.000000e+00 : f32
    %26 = vector.broadcast %cst_14 : f32 to vector<8x32xf32>
    %27 = arith.addf %26, %25 : vector<8x32xf32>
    %28 = tpu.reciprocal %27 {approx = true} : vector<8x32xf32> -> vector<8x32xf32>
    %29 = arith.mulf %21, %28 : vector<8x32xf32>
    %30 = arith.truncf %29 : vector<8x32xf32> to vector<8x32xbf16>
    %c0_15 = arith.constant 0 : index
    %c0_16 = arith.constant 0 : index
    %c0_17 = arith.constant 0 : index
    %31 = vector.load %arg6[%c0_15, %c0_16, %c0_17] : memref<1x8x32xbf16, #tpu.memory_space<vmem>>, vector<1x8x32xbf16>
    %32 = vector.shape_cast %31 : vector<1x8x32xbf16> to vector<8x32xbf16>
    %33 = vector.shape_cast %30 : vector<8x32xbf16> to vector<1x8x32xbf16>
    tpu.vector_store %arg6[%c0_15, %c0_16, %c0_17], %33 {strides = array<i32>} : memref<1x8x32xbf16, #tpu.memory_space<vmem>>, vector<1x8x32xbf16>,
    return
  }
  func.func @transform_0(%arg0: i32) -> (i32, i32, i32) {
    %c0_i32 = arith.constant 0 : i32
    %c0_i32_0 = arith.constant 0 : i32
    %c0_i32_1 = arith.constant 0 : i32
    return %arg0, %c0_i32, %c0_i32_0 : i32, i32, i32
  }
  func.func @transform_1(%arg0: i32) -> (i32, i32) {
    %c0_i32 = arith.constant 0 : i32
    %c0_i32_0 = arith.constant 0 : i32
    %c0_i32_1 = arith.constant 0 : i32
    return %c0_i32, %c0_i32_0 : i32, i32
  }
  func.func @transform_2(%arg0: i32) -> (i32, i32) {
    %c0_i32 = arith.constant 0 : i32
    %c0_i32_0 = arith.constant 0 : i32
    %c0_i32_1 = arith.constant 0 : i32
    return %c0_i32, %c0_i32_0 : i32, i32
  }
  func.func @transform_3(%arg0: i32) -> (i32, i32) {
    %c0_i32 = arith.constant 0 : i32
    %c0_i32_0 = arith.constant 0 : i32
    %c0_i32_1 = arith.constant 0 : i32
    return %c0_i32, %c0_i32_0 : i32, i32
  }
  func.func @transform_4(%arg0: i32) -> (i32, i32) {
    %c0_i32 = arith.constant 0 : i32
    %c0_i32_0 = arith.constant 0 : i32
    %c0_i32_1 = arith.constant 0 : i32
    return %c0_i32, %c0_i32_0 : i32, i32
  }
  func.func @transform_5(%arg0: i32) -> (i32, i32, i32) {
    %c0_i32 = arith.constant 0 : i32
    %c0_i32_0 = arith.constant 0 : i32
    %c0_i32_1 = arith.constant 0 : i32
    return %arg0, %c0_i32, %c0_i32_0 : i32, i32, i32
  }
}

module attributes {stable_mosaic.version = 11 : i64} {
  func.func @_encoder_block_kernel(%arg0: i32, %arg1: memref<1x19x16xbf16, #tpu.memory_space<vmem>>, %arg2: memref<32x16xbf16, #tpu.memory_space<vmem>>, %arg3: memref<1x16xf32, #tpu.memory_space<vmem>>, %arg4: memref<16x32xbf16, #tpu.memory_space<vmem>>, %arg5: memref<1x32xf32, #tpu.memory_space<vmem>>, %arg6: memref<1x18x16xbf16, #tpu.memory_space<vmem>>) attributes {dimension_semantics = [#tpu.dimension_semantics<parallel>], iteration_bounds = array<i64: 2>, scalar_prefetch = 0 : i64, scratch_operands = 0 : i64, tpu.core_type = #tpu.core_type<tc>, window_params = [{transform_indices = @transform_0, window_bounds = array<i64: 1, 19, 16>}, {pipeline_mode = #tpu.pipeline_mode<synchronous>, transform_indices = @transform_1, window_bounds = array<i64: 32, 16>}, {pipeline_mode = #tpu.pipeline_mode<synchronous>, transform_indices = @transform_2, window_bounds = array<i64: 1, 16>}, {pipeline_mode = #tpu.pipeline_mode<synchronous>, transform_indices = @transform_3, window_bounds = array<i64: 16, 32>}, {pipeline_mode = #tpu.pipeline_mode<synchronous>, transform_indices = @transform_4, window_bounds = array<i64: 1, 32>}, {transform_indices = @transform_5, window_bounds = array<i64: 1, 18, 16>}]} {
    %c0 = arith.constant 0 : index
    %c0_0 = arith.constant 0 : index
    %c0_1 = arith.constant 0 : index
    %0 = vector.load %arg1[%c0, %c0_0, %c0_1] : memref<1x19x16xbf16, #tpu.memory_space<vmem>>, vector<1x19x16xbf16>
    %1 = vector.shape_cast %0 : vector<1x19x16xbf16> to vector<19x16xbf16>
    %2 = vector.extract_strided_slice %1 {offsets = [0, 0], sizes = [18, 16], strides = [1, 1]} : vector<19x16xbf16> to vector<18x16xbf16>
    %3 = vector.extract_strided_slice %1 {offsets = [1, 0], sizes = [18, 16], strides = [1, 1]} : vector<19x16xbf16> to vector<18x16xbf16>
    %c0_2 = arith.constant 0 : index
    %c0_3 = arith.constant 0 : index
    %4 = vector.load %arg2[%c0_2, %c0_3] : memref<32x16xbf16, #tpu.memory_space<vmem>>, vector<32x16xbf16>
    %5 = vector.extract_strided_slice %4 {offsets = [0, 0], sizes = [16, 16], strides = [1, 1]} : vector<32x16xbf16> to vector<16x16xbf16>
    %cst = arith.constant dense<0.000000e+00> : vector<18x16xf32>
    %6 = tpu.matmul %2, %5, %cst {dimension_numbers = #tpu.dot_dimension_numbers<[1], [0], [0], [1], [0, 0, 1, 1], [], []>} : vector<18x16xbf16>, vector<16x16xbf16>, vector<18x16xf32> -> vector<18x16xf32>
    %7 = vector.extract_strided_slice %4 {offsets = [16, 0], sizes = [16, 16], strides = [1, 1]} : vector<32x16xbf16> to vector<16x16xbf16>
    %cst_4 = arith.constant dense<0.000000e+00> : vector<18x16xf32>
    %8 = tpu.matmul %3, %7, %cst_4 {dimension_numbers = #tpu.dot_dimension_numbers<[1], [0], [0], [1], [0, 0, 1, 1], [], []>} : vector<18x16xbf16>, vector<16x16xbf16>, vector<18x16xf32> -> vector<18x16xf32>
    %9 = arith.addf %6, %8 : vector<18x16xf32>
    %c0_5 = arith.constant 0 : index
    %c0_6 = arith.constant 0 : index
    %10 = vector.load %arg3[%c0_5, %c0_6] : memref<1x16xf32, #tpu.memory_space<vmem>>, vector<1x16xf32>
    %11 = vector.broadcast %10 : vector<1x16xf32> to vector<18x16xf32>
    %12 = arith.addf %9, %11 : vector<18x16xf32>
    %cst_7 = arith.constant 0.000000e+00 : f32
    %13 = vector.broadcast %cst_7 : f32 to vector<18x16xf32>
    %14 = arith.maximumf %12, %13 : vector<18x16xf32>
    %15 = arith.truncf %14 : vector<18x16xf32> to vector<18x16xbf16>
    %c0_8 = arith.constant 0 : index
    %c0_9 = arith.constant 0 : index
    %16 = vector.load %arg4[%c0_8, %c0_9] : memref<16x32xbf16, #tpu.memory_space<vmem>>, vector<16x32xbf16>
    %cst_10 = arith.constant dense<0.000000e+00> : vector<18x32xf32>
    %17 = tpu.matmul %15, %16, %cst_10 {dimension_numbers = #tpu.dot_dimension_numbers<[1], [0], [0], [1], [0, 0, 1, 1], [], []>} : vector<18x16xbf16>, vector<16x32xbf16>, vector<18x32xf32> -> vector<18x32xf32>
    %c0_11 = arith.constant 0 : index
    %c0_12 = arith.constant 0 : index
    %18 = vector.load %arg5[%c0_11, %c0_12] : memref<1x32xf32, #tpu.memory_space<vmem>>, vector<1x32xf32>
    %19 = vector.broadcast %18 : vector<1x32xf32> to vector<18x32xf32>
    %20 = arith.addf %17, %19 : vector<18x32xf32>
    %21 = vector.extract_strided_slice %20 {offsets = [0, 0], sizes = [18, 16], strides = [1, 1]} : vector<18x32xf32> to vector<18x16xf32>
    %22 = vector.extract_strided_slice %20 {offsets = [0, 16], sizes = [18, 16], strides = [1, 1]} : vector<18x32xf32> to vector<18x16xf32>
    %cst_13 = arith.constant 0.000000e+00 : f32
    %23 = vector.broadcast %cst_13 : f32 to vector<18x16xf32>
    %24 = arith.subf %23, %22 : vector<18x16xf32>
    %25 = math.exp %24 : vector<18x16xf32>
    %cst_14 = arith.constant 1.000000e+00 : f32
    %26 = vector.broadcast %cst_14 : f32 to vector<18x16xf32>
    %27 = arith.addf %26, %25 : vector<18x16xf32>
    %28 = tpu.reciprocal %27 {approx = true} : vector<18x16xf32> -> vector<18x16xf32>
    %29 = arith.mulf %21, %28 : vector<18x16xf32>
    %30 = arith.truncf %29 : vector<18x16xf32> to vector<18x16xbf16>
    %c0_15 = arith.constant 0 : index
    %c0_16 = arith.constant 0 : index
    %c0_17 = arith.constant 0 : index
    %31 = vector.load %arg6[%c0_15, %c0_16, %c0_17] : memref<1x18x16xbf16, #tpu.memory_space<vmem>>, vector<1x18x16xbf16>
    %32 = vector.shape_cast %31 : vector<1x18x16xbf16> to vector<18x16xbf16>
    %33 = vector.shape_cast %30 : vector<18x16xbf16> to vector<1x18x16xbf16>
    tpu.vector_store %arg6[%c0_15, %c0_16, %c0_17], %33 {strides = array<i32>} : memref<1x18x16xbf16, #tpu.memory_space<vmem>>, vector<1x18x16xbf16>,
    return
  }
  func.func @transform_0(%arg0: i32) -> (i32, i32, i32) {
    %c0_i32 = arith.constant 0 : i32
    %c0_i32_0 = arith.constant 0 : i32
    %c0_i32_1 = arith.constant 0 : i32
    return %arg0, %c0_i32, %c0_i32_0 : i32, i32, i32
  }
  func.func @transform_1(%arg0: i32) -> (i32, i32) {
    %c0_i32 = arith.constant 0 : i32
    %c0_i32_0 = arith.constant 0 : i32
    %c0_i32_1 = arith.constant 0 : i32
    return %c0_i32, %c0_i32_0 : i32, i32
  }
  func.func @transform_2(%arg0: i32) -> (i32, i32) {
    %c0_i32 = arith.constant 0 : i32
    %c0_i32_0 = arith.constant 0 : i32
    %c0_i32_1 = arith.constant 0 : i32
    return %c0_i32, %c0_i32_0 : i32, i32
  }
  func.func @transform_3(%arg0: i32) -> (i32, i32) {
    %c0_i32 = arith.constant 0 : i32
    %c0_i32_0 = arith.constant 0 : i32
    %c0_i32_1 = arith.constant 0 : i32
    return %c0_i32, %c0_i32_0 : i32, i32
  }
  func.func @transform_4(%arg0: i32) -> (i32, i32) {
    %c0_i32 = arith.constant 0 : i32
    %c0_i32_0 = arith.constant 0 : i32
    %c0_i32_1 = arith.constant 0 : i32
    return %c0_i32, %c0_i32_0 : i32, i32
  }
  func.func @transform_5(%arg0: i32) -> (i32, i32, i32) {
    %c0_i32 = arith.constant 0 : i32
    %c0_i32_0 = arith.constant 0 : i32
    %c0_i32_1 = arith.constant 0 : i32
    return %arg0, %c0_i32, %c0_i32_0 : i32, i32, i32
  }
}

module attributes {stable_mosaic.version = 11 : i64} {
  func.func @_encoder_block_kernel(%arg0: i32, %arg1: memref<1x39x6xbf16, #tpu.memory_space<vmem>>, %arg2: memref<12x8xbf16, #tpu.memory_space<vmem>>, %arg3: memref<1x8xf32, #tpu.memory_space<vmem>>, %arg4: memref<8x16xbf16, #tpu.memory_space<vmem>>, %arg5: memref<1x16xf32, #tpu.memory_space<vmem>>, %arg6: memref<1x38x8xbf16, #tpu.memory_space<vmem>>) attributes {dimension_semantics = [#tpu.dimension_semantics<parallel>], iteration_bounds = array<i64: 2>, scalar_prefetch = 0 : i64, scratch_operands = 0 : i64, tpu.core_type = #tpu.core_type<tc>, window_params = [{transform_indices = @transform_0, window_bounds = array<i64: 1, 39, 6>}, {pipeline_mode = #tpu.pipeline_mode<synchronous>, transform_indices = @transform_1, window_bounds = array<i64: 12, 8>}, {pipeline_mode = #tpu.pipeline_mode<synchronous>, transform_indices = @transform_2, window_bounds = array<i64: 1, 8>}, {pipeline_mode = #tpu.pipeline_mode<synchronous>, transform_indices = @transform_3, window_bounds = array<i64: 8, 16>}, {pipeline_mode = #tpu.pipeline_mode<synchronous>, transform_indices = @transform_4, window_bounds = array<i64: 1, 16>}, {transform_indices = @transform_5, window_bounds = array<i64: 1, 38, 8>}]} {
    %c0 = arith.constant 0 : index
    %c0_0 = arith.constant 0 : index
    %c0_1 = arith.constant 0 : index
    %0 = vector.load %arg1[%c0, %c0_0, %c0_1] : memref<1x39x6xbf16, #tpu.memory_space<vmem>>, vector<1x39x6xbf16>
    %1 = vector.shape_cast %0 : vector<1x39x6xbf16> to vector<39x6xbf16>
    %2 = vector.extract_strided_slice %1 {offsets = [0, 0], sizes = [38, 6], strides = [1, 1]} : vector<39x6xbf16> to vector<38x6xbf16>
    %3 = vector.extract_strided_slice %1 {offsets = [1, 0], sizes = [38, 6], strides = [1, 1]} : vector<39x6xbf16> to vector<38x6xbf16>
    %c0_2 = arith.constant 0 : index
    %c0_3 = arith.constant 0 : index
    %4 = vector.load %arg2[%c0_2, %c0_3] : memref<12x8xbf16, #tpu.memory_space<vmem>>, vector<12x8xbf16>
    %5 = vector.extract_strided_slice %4 {offsets = [0, 0], sizes = [6, 8], strides = [1, 1]} : vector<12x8xbf16> to vector<6x8xbf16>
    %cst = arith.constant dense<0.000000e+00> : vector<38x8xf32>
    %6 = tpu.matmul %2, %5, %cst {dimension_numbers = #tpu.dot_dimension_numbers<[1], [0], [0], [1], [0, 0, 1, 1], [], []>} : vector<38x6xbf16>, vector<6x8xbf16>, vector<38x8xf32> -> vector<38x8xf32>
    %7 = vector.extract_strided_slice %4 {offsets = [6, 0], sizes = [6, 8], strides = [1, 1]} : vector<12x8xbf16> to vector<6x8xbf16>
    %cst_4 = arith.constant dense<0.000000e+00> : vector<38x8xf32>
    %8 = tpu.matmul %3, %7, %cst_4 {dimension_numbers = #tpu.dot_dimension_numbers<[1], [0], [0], [1], [0, 0, 1, 1], [], []>} : vector<38x6xbf16>, vector<6x8xbf16>, vector<38x8xf32> -> vector<38x8xf32>
    %9 = arith.addf %6, %8 : vector<38x8xf32>
    %c0_5 = arith.constant 0 : index
    %c0_6 = arith.constant 0 : index
    %10 = vector.load %arg3[%c0_5, %c0_6] : memref<1x8xf32, #tpu.memory_space<vmem>>, vector<1x8xf32>
    %11 = vector.broadcast %10 : vector<1x8xf32> to vector<38x8xf32>
    %12 = arith.addf %9, %11 : vector<38x8xf32>
    %cst_7 = arith.constant 0.000000e+00 : f32
    %13 = vector.broadcast %cst_7 : f32 to vector<38x8xf32>
    %14 = arith.maximumf %12, %13 : vector<38x8xf32>
    %15 = arith.truncf %14 : vector<38x8xf32> to vector<38x8xbf16>
    %c0_8 = arith.constant 0 : index
    %c0_9 = arith.constant 0 : index
    %16 = vector.load %arg4[%c0_8, %c0_9] : memref<8x16xbf16, #tpu.memory_space<vmem>>, vector<8x16xbf16>
    %cst_10 = arith.constant dense<0.000000e+00> : vector<38x16xf32>
    %17 = tpu.matmul %15, %16, %cst_10 {dimension_numbers = #tpu.dot_dimension_numbers<[1], [0], [0], [1], [0, 0, 1, 1], [], []>} : vector<38x8xbf16>, vector<8x16xbf16>, vector<38x16xf32> -> vector<38x16xf32>
    %c0_11 = arith.constant 0 : index
    %c0_12 = arith.constant 0 : index
    %18 = vector.load %arg5[%c0_11, %c0_12] : memref<1x16xf32, #tpu.memory_space<vmem>>, vector<1x16xf32>
    %19 = vector.broadcast %18 : vector<1x16xf32> to vector<38x16xf32>
    %20 = arith.addf %17, %19 : vector<38x16xf32>
    %21 = vector.extract_strided_slice %20 {offsets = [0, 0], sizes = [38, 8], strides = [1, 1]} : vector<38x16xf32> to vector<38x8xf32>
    %22 = vector.extract_strided_slice %20 {offsets = [0, 8], sizes = [38, 8], strides = [1, 1]} : vector<38x16xf32> to vector<38x8xf32>
    %cst_13 = arith.constant 0.000000e+00 : f32
    %23 = vector.broadcast %cst_13 : f32 to vector<38x8xf32>
    %24 = arith.subf %23, %22 : vector<38x8xf32>
    %25 = math.exp %24 : vector<38x8xf32>
    %cst_14 = arith.constant 1.000000e+00 : f32
    %26 = vector.broadcast %cst_14 : f32 to vector<38x8xf32>
    %27 = arith.addf %26, %25 : vector<38x8xf32>
    %28 = tpu.reciprocal %27 {approx = true} : vector<38x8xf32> -> vector<38x8xf32>
    %29 = arith.mulf %21, %28 : vector<38x8xf32>
    %30 = arith.truncf %29 : vector<38x8xf32> to vector<38x8xbf16>
    %c0_15 = arith.constant 0 : index
    %c0_16 = arith.constant 0 : index
    %c0_17 = arith.constant 0 : index
    %31 = vector.load %arg6[%c0_15, %c0_16, %c0_17] : memref<1x38x8xbf16, #tpu.memory_space<vmem>>, vector<1x38x8xbf16>
    %32 = vector.shape_cast %31 : vector<1x38x8xbf16> to vector<38x8xbf16>
    %33 = vector.shape_cast %30 : vector<38x8xbf16> to vector<1x38x8xbf16>
    tpu.vector_store %arg6[%c0_15, %c0_16, %c0_17], %33 {strides = array<i32>} : memref<1x38x8xbf16, #tpu.memory_space<vmem>>, vector<1x38x8xbf16>,
    return
  }
  func.func @transform_0(%arg0: i32) -> (i32, i32, i32) {
    %c0_i32 = arith.constant 0 : i32
    %c0_i32_0 = arith.constant 0 : i32
    %c0_i32_1 = arith.constant 0 : i32
    return %arg0, %c0_i32, %c0_i32_0 : i32, i32, i32
  }
  func.func @transform_1(%arg0: i32) -> (i32, i32) {
    %c0_i32 = arith.constant 0 : i32
    %c0_i32_0 = arith.constant 0 : i32
    %c0_i32_1 = arith.constant 0 : i32
    return %c0_i32, %c0_i32_0 : i32, i32
  }
  func.func @transform_2(%arg0: i32) -> (i32, i32) {
    %c0_i32 = arith.constant 0 : i32
    %c0_i32_0 = arith.constant 0 : i32
    %c0_i32_1 = arith.constant 0 : i32
    return %c0_i32, %c0_i32_0 : i32, i32
  }
  func.func @transform_3(%arg0: i32) -> (i32, i32) {
    %c0_i32 = arith.constant 0 : i32
    %c0_i32_0 = arith.constant 0 : i32
    %c0_i32_1 = arith.constant 0 : i32
    return %c0_i32, %c0_i32_0 : i32, i32
  }
  func.func @transform_4(%arg0: i32) -> (i32, i32) {
    %c0_i32 = arith.constant 0 : i32
    %c0_i32_0 = arith.constant 0 : i32
    %c0_i32_1 = arith.constant 0 : i32
    return %c0_i32, %c0_i32_0 : i32, i32
  }
  func.func @transform_5(%arg0: i32) -> (i32, i32, i32) {
    %c0_i32 = arith.constant 0 : i32
    %c0_i32_0 = arith.constant 0 : i32
    %c0_i32_1 = arith.constant 0 : i32
    return %arg0, %c0_i32, %c0_i32_0 : i32, i32, i32
  }
}

module attributes {stable_mosaic.version = 11 : i64} {
  func.func @_tsfm_layer_kernel(%arg0: i32, %arg1: memref<1x8x32xbf16, #tpu.memory_space<vmem>>, %arg2: memref<32x64xbf16, #tpu.memory_space<vmem>>, %arg3: memref<1x64xf32, #tpu.memory_space<vmem>>, %arg4: memref<1x64xf32, #tpu.memory_space<vmem>>, %arg5: memref<1x64xf32, #tpu.memory_space<vmem>>, %arg6: memref<64x192xbf16, #tpu.memory_space<vmem>>, %arg7: memref<64x64xbf16, #tpu.memory_space<vmem>>, %arg8: memref<1x64xf32, #tpu.memory_space<vmem>>, %arg9: memref<1x64xf32, #tpu.memory_space<vmem>>, %arg10: memref<64x128xbf16, #tpu.memory_space<vmem>>, %arg11: memref<1x128xf32, #tpu.memory_space<vmem>>, %arg12: memref<128x64xbf16, #tpu.memory_space<vmem>>, %arg13: memref<1x64xf32, #tpu.memory_space<vmem>>, %arg14: memref<1x64xf32, #tpu.memory_space<vmem>>, %arg15: memref<1x64xf32, #tpu.memory_space<vmem>>, %arg16: memref<1x8x64xbf16, #tpu.memory_space<vmem>>) attributes {dimension_semantics = [#tpu.dimension_semantics<parallel>], iteration_bounds = array<i64: 2>, scalar_prefetch = 0 : i64, scratch_operands = 0 : i64, tpu.core_type = #tpu.core_type<tc>, window_params = [{transform_indices = @transform_0, window_bounds = array<i64: 1, 8, 32>}, {pipeline_mode = #tpu.pipeline_mode<synchronous>, transform_indices = @transform_1, window_bounds = array<i64: 32, 64>}, {pipeline_mode = #tpu.pipeline_mode<synchronous>, transform_indices = @transform_2, window_bounds = array<i64: 1, 64>}, {pipeline_mode = #tpu.pipeline_mode<synchronous>, transform_indices = @transform_3, window_bounds = array<i64: 1, 64>}, {pipeline_mode = #tpu.pipeline_mode<synchronous>, transform_indices = @transform_4, window_bounds = array<i64: 1, 64>}, {pipeline_mode = #tpu.pipeline_mode<synchronous>, transform_indices = @transform_5, window_bounds = array<i64: 64, 192>}, {pipeline_mode = #tpu.pipeline_mode<synchronous>, transform_indices = @transform_6, window_bounds = array<i64: 64, 64>}, {pipeline_mode = #tpu.pipeline_mode<synchronous>, transform_indices = @transform_7, window_bounds = array<i64: 1, 64>}, {pipeline_mode = #tpu.pipeline_mode<synchronous>, transform_indices = @transform_8, window_bounds = array<i64: 1, 64>}, {pipeline_mode = #tpu.pipeline_mode<synchronous>, transform_indices = @transform_9, window_bounds = array<i64: 64, 128>}, {pipeline_mode = #tpu.pipeline_mode<synchronous>, transform_indices = @transform_10, window_bounds = array<i64: 1, 128>}, {pipeline_mode = #tpu.pipeline_mode<synchronous>, transform_indices = @transform_11, window_bounds = array<i64: 128, 64>}, {pipeline_mode = #tpu.pipeline_mode<synchronous>, transform_indices = @transform_12, window_bounds = array<i64: 1, 64>}, {pipeline_mode = #tpu.pipeline_mode<synchronous>, transform_indices = @transform_13, window_bounds = array<i64: 1, 64>}, {pipeline_mode = #tpu.pipeline_mode<synchronous>, transform_indices = @transform_14, window_bounds = array<i64: 1, 64>}, {transform_indices = @transform_15, window_bounds = array<i64: 1, 8, 64>}]} {
    %c0 = arith.constant 0 : index
    %c0_0 = arith.constant 0 : index
    %c0_1 = arith.constant 0 : index
    %0 = vector.load %arg1[%c0, %c0_0, %c0_1] : memref<1x8x32xbf16, #tpu.memory_space<vmem>>, vector<1x8x32xbf16>
    %1 = vector.shape_cast %0 : vector<1x8x32xbf16> to vector<8x32xbf16>
    %c0_2 = arith.constant 0 : index
    %c0_3 = arith.constant 0 : index
    %2 = vector.load %arg2[%c0_2, %c0_3] : memref<32x64xbf16, #tpu.memory_space<vmem>>, vector<32x64xbf16>
    %cst = arith.constant dense<0.000000e+00> : vector<8x64xf32>
    %3 = tpu.matmul %1, %2, %cst {dimension_numbers = #tpu.dot_dimension_numbers<[1], [0], [0], [1], [0, 0, 1, 1], [], []>} : vector<8x32xbf16>, vector<32x64xbf16>, vector<8x64xf32> -> vector<8x64xf32>
    %c0_4 = arith.constant 0 : index
    %c0_5 = arith.constant 0 : index
    %4 = vector.load %arg3[%c0_4, %c0_5] : memref<1x64xf32, #tpu.memory_space<vmem>>, vector<1x64xf32>
    %5 = vector.broadcast %4 : vector<1x64xf32> to vector<8x64xf32>
    %6 = arith.addf %3, %5 : vector<8x64xf32>
    %c0_6 = arith.constant 0 : index
    %c0_7 = arith.constant 0 : index
    %7 = vector.load %arg4[%c0_6, %c0_7] : memref<1x64xf32, #tpu.memory_space<vmem>>, vector<1x64xf32>
    %c0_8 = arith.constant 0 : index
    %c0_9 = arith.constant 0 : index
    %8 = vector.load %arg5[%c0_8, %c0_9] : memref<1x64xf32, #tpu.memory_space<vmem>>, vector<1x64xf32>
    %cst_10 = arith.constant dense<0.000000e+00> : vector<8xf32>
    %9 = vector.multi_reduction <add>, %6, %cst_10 [1] : vector<8x64xf32> to vector<8xf32>
    %10 = vector.shape_cast %9 : vector<8xf32> to vector<8x1xf32>
    %cst_11 = arith.constant 6.400000e+01 : f32
    %11 = vector.broadcast %cst_11 : f32 to vector<8x1xf32>
    %12 = arith.divf %10, %11 : vector<8x1xf32>
    %13 = vector.broadcast %12 : vector<8x1xf32> to vector<8x64xf32>
    %14 = arith.subf %6, %13 : vector<8x64xf32>
    %15 = arith.mulf %14, %14 : vector<8x64xf32>
    %cst_12 = arith.constant dense<0.000000e+00> : vector<8xf32>
    %16 = vector.multi_reduction <add>, %15, %cst_12 [1] : vector<8x64xf32> to vector<8xf32>
    %17 = vector.shape_cast %16 : vector<8xf32> to vector<8x1xf32>
    %cst_13 = arith.constant 6.400000e+01 : f32
    %18 = vector.broadcast %cst_13 : f32 to vector<8x1xf32>
    %19 = arith.divf %17, %18 : vector<8x1xf32>
    %20 = vector.broadcast %12 : vector<8x1xf32> to vector<8x64xf32>
    %21 = arith.subf %6, %20 : vector<8x64xf32>
    %cst_14 = arith.constant 9.99999997E-7 : f32
    %22 = vector.broadcast %cst_14 : f32 to vector<8x1xf32>
    %23 = arith.addf %19, %22 : vector<8x1xf32>
    %24 = math.rsqrt %23 : vector<8x1xf32>
    %25 = vector.broadcast %24 : vector<8x1xf32> to vector<8x64xf32>
    %26 = arith.mulf %21, %25 : vector<8x64xf32>
    %27 = vector.broadcast %7 : vector<1x64xf32> to vector<8x64xf32>
    %28 = arith.mulf %26, %27 : vector<8x64xf32>
    %29 = vector.broadcast %8 : vector<1x64xf32> to vector<8x64xf32>
    %30 = arith.addf %28, %29 : vector<8x64xf32>
    %31 = arith.truncf %30 : vector<8x64xf32> to vector<8x64xbf16>
    %c0_15 = arith.constant 0 : index
    %c0_16 = arith.constant 0 : index
    %32 = vector.load %arg6[%c0_15, %c0_16] : memref<64x192xbf16, #tpu.memory_space<vmem>>, vector<64x192xbf16>
    %cst_17 = arith.constant dense<0.000000e+00> : vector<8x192xf32>
    %33 = tpu.matmul %31, %32, %cst_17 {dimension_numbers = #tpu.dot_dimension_numbers<[1], [0], [0], [1], [0, 0, 1, 1], [], []>} : vector<8x64xbf16>, vector<64x192xbf16>, vector<8x192xf32> -> vector<8x192xf32>
    %34 = vector.extract_strided_slice %33 {offsets = [0, 0], sizes = [8, 16], strides = [1, 1]} : vector<8x192xf32> to vector<8x16xf32>
    %35 = vector.extract_strided_slice %33 {offsets = [0, 64], sizes = [8, 16], strides = [1, 1]} : vector<8x192xf32> to vector<8x16xf32>
    %36 = vector.extract_strided_slice %33 {offsets = [0, 128], sizes = [8, 16], strides = [1, 1]} : vector<8x192xf32> to vector<8x16xf32>
    %37 = arith.truncf %34 : vector<8x16xf32> to vector<8x16xbf16>
    %38 = arith.truncf %35 : vector<8x16xf32> to vector<8x16xbf16>
    %cst_18 = arith.constant dense<0.000000e+00> : vector<8x8xf32>
    %39 = tpu.matmul %37, %38, %cst_18 {dimension_numbers = #tpu.dot_dimension_numbers<[1], [1], [0], [0], [0, 0, 1, 0], [], []>} : vector<8x16xbf16>, vector<8x16xbf16>, vector<8x8xf32> -> vector<8x8xf32>
    %cst_19 = arith.constant 2.500000e-01 : f32
    %40 = vector.broadcast %cst_19 : f32 to vector<8x8xf32>
    %41 = arith.mulf %39, %40 : vector<8x8xf32>
    %cst_20 = arith.constant dense<0xFF800000> : vector<8xf32>
    %42 = vector.multi_reduction <maximumf>, %41, %cst_20 [1] : vector<8x8xf32> to vector<8xf32>
    %43 = vector.shape_cast %42 : vector<8xf32> to vector<8x1xf32>
    %44 = vector.broadcast %43 : vector<8x1xf32> to vector<8x8xf32>
    %45 = arith.subf %41, %44 : vector<8x8xf32>
    %46 = math.exp %45 : vector<8x8xf32>
    %cst_21 = arith.constant dense<0.000000e+00> : vector<8xf32>
    %47 = vector.multi_reduction <add>, %46, %cst_21 [1] : vector<8x8xf32> to vector<8xf32>
    %48 = vector.shape_cast %47 : vector<8xf32> to vector<8x1xf32>
    %49 = tpu.reciprocal %48 {approx = true} : vector<8x1xf32> -> vector<8x1xf32>
    %50 = vector.broadcast %49 : vector<8x1xf32> to vector<8x8xf32>
    %51 = arith.mulf %46, %50 : vector<8x8xf32>
    %52 = arith.truncf %51 : vector<8x8xf32> to vector<8x8xbf16>
    %53 = arith.truncf %36 : vector<8x16xf32> to vector<8x16xbf16>
    %cst_22 = arith.constant dense<0.000000e+00> : vector<8x16xf32>
    %54 = tpu.matmul %52, %53, %cst_22 {dimension_numbers = #tpu.dot_dimension_numbers<[1], [0], [0], [1], [0, 0, 1, 1], [], []>} : vector<8x8xbf16>, vector<8x16xbf16>, vector<8x16xf32> -> vector<8x16xf32>
    %55 = vector.extract_strided_slice %33 {offsets = [0, 16], sizes = [8, 16], strides = [1, 1]} : vector<8x192xf32> to vector<8x16xf32>
    %56 = vector.extract_strided_slice %33 {offsets = [0, 80], sizes = [8, 16], strides = [1, 1]} : vector<8x192xf32> to vector<8x16xf32>
    %57 = vector.extract_strided_slice %33 {offsets = [0, 144], sizes = [8, 16], strides = [1, 1]} : vector<8x192xf32> to vector<8x16xf32>
    %58 = arith.truncf %55 : vector<8x16xf32> to vector<8x16xbf16>
    %59 = arith.truncf %56 : vector<8x16xf32> to vector<8x16xbf16>
    %cst_23 = arith.constant dense<0.000000e+00> : vector<8x8xf32>
    %60 = tpu.matmul %58, %59, %cst_23 {dimension_numbers = #tpu.dot_dimension_numbers<[1], [1], [0], [0], [0, 0, 1, 0], [], []>} : vector<8x16xbf16>, vector<8x16xbf16>, vector<8x8xf32> -> vector<8x8xf32>
    %cst_24 = arith.constant 2.500000e-01 : f32
    %61 = vector.broadcast %cst_24 : f32 to vector<8x8xf32>
    %62 = arith.mulf %60, %61 : vector<8x8xf32>
    %cst_25 = arith.constant dense<0xFF800000> : vector<8xf32>
    %63 = vector.multi_reduction <maximumf>, %62, %cst_25 [1] : vector<8x8xf32> to vector<8xf32>
    %64 = vector.shape_cast %63 : vector<8xf32> to vector<8x1xf32>
    %65 = vector.broadcast %64 : vector<8x1xf32> to vector<8x8xf32>
    %66 = arith.subf %62, %65 : vector<8x8xf32>
    %67 = math.exp %66 : vector<8x8xf32>
    %cst_26 = arith.constant dense<0.000000e+00> : vector<8xf32>
    %68 = vector.multi_reduction <add>, %67, %cst_26 [1] : vector<8x8xf32> to vector<8xf32>
    %69 = vector.shape_cast %68 : vector<8xf32> to vector<8x1xf32>
    %70 = tpu.reciprocal %69 {approx = true} : vector<8x1xf32> -> vector<8x1xf32>
    %71 = vector.broadcast %70 : vector<8x1xf32> to vector<8x8xf32>
    %72 = arith.mulf %67, %71 : vector<8x8xf32>
    %73 = arith.truncf %72 : vector<8x8xf32> to vector<8x8xbf16>
    %74 = arith.truncf %57 : vector<8x16xf32> to vector<8x16xbf16>
    %cst_27 = arith.constant dense<0.000000e+00> : vector<8x16xf32>
    %75 = tpu.matmul %73, %74, %cst_27 {dimension_numbers = #tpu.dot_dimension_numbers<[1], [0], [0], [1], [0, 0, 1, 1], [], []>} : vector<8x8xbf16>, vector<8x16xbf16>, vector<8x16xf32> -> vector<8x16xf32>
    %76 = vector.extract_strided_slice %33 {offsets = [0, 32], sizes = [8, 16], strides = [1, 1]} : vector<8x192xf32> to vector<8x16xf32>
    %77 = vector.extract_strided_slice %33 {offsets = [0, 96], sizes = [8, 16], strides = [1, 1]} : vector<8x192xf32> to vector<8x16xf32>
    %78 = vector.extract_strided_slice %33 {offsets = [0, 160], sizes = [8, 16], strides = [1, 1]} : vector<8x192xf32> to vector<8x16xf32>
    %79 = arith.truncf %76 : vector<8x16xf32> to vector<8x16xbf16>
    %80 = arith.truncf %77 : vector<8x16xf32> to vector<8x16xbf16>
    %cst_28 = arith.constant dense<0.000000e+00> : vector<8x8xf32>
    %81 = tpu.matmul %79, %80, %cst_28 {dimension_numbers = #tpu.dot_dimension_numbers<[1], [1], [0], [0], [0, 0, 1, 0], [], []>} : vector<8x16xbf16>, vector<8x16xbf16>, vector<8x8xf32> -> vector<8x8xf32>
    %cst_29 = arith.constant 2.500000e-01 : f32
    %82 = vector.broadcast %cst_29 : f32 to vector<8x8xf32>
    %83 = arith.mulf %81, %82 : vector<8x8xf32>
    %cst_30 = arith.constant dense<0xFF800000> : vector<8xf32>
    %84 = vector.multi_reduction <maximumf>, %83, %cst_30 [1] : vector<8x8xf32> to vector<8xf32>
    %85 = vector.shape_cast %84 : vector<8xf32> to vector<8x1xf32>
    %86 = vector.broadcast %85 : vector<8x1xf32> to vector<8x8xf32>
    %87 = arith.subf %83, %86 : vector<8x8xf32>
    %88 = math.exp %87 : vector<8x8xf32>
    %cst_31 = arith.constant dense<0.000000e+00> : vector<8xf32>
    %89 = vector.multi_reduction <add>, %88, %cst_31 [1] : vector<8x8xf32> to vector<8xf32>
    %90 = vector.shape_cast %89 : vector<8xf32> to vector<8x1xf32>
    %91 = tpu.reciprocal %90 {approx = true} : vector<8x1xf32> -> vector<8x1xf32>
    %92 = vector.broadcast %91 : vector<8x1xf32> to vector<8x8xf32>
    %93 = arith.mulf %88, %92 : vector<8x8xf32>
    %94 = arith.truncf %93 : vector<8x8xf32> to vector<8x8xbf16>
    %95 = arith.truncf %78 : vector<8x16xf32> to vector<8x16xbf16>
    %cst_32 = arith.constant dense<0.000000e+00> : vector<8x16xf32>
    %96 = tpu.matmul %94, %95, %cst_32 {dimension_numbers = #tpu.dot_dimension_numbers<[1], [0], [0], [1], [0, 0, 1, 1], [], []>} : vector<8x8xbf16>, vector<8x16xbf16>, vector<8x16xf32> -> vector<8x16xf32>
    %97 = vector.extract_strided_slice %33 {offsets = [0, 48], sizes = [8, 16], strides = [1, 1]} : vector<8x192xf32> to vector<8x16xf32>
    %98 = vector.extract_strided_slice %33 {offsets = [0, 112], sizes = [8, 16], strides = [1, 1]} : vector<8x192xf32> to vector<8x16xf32>
    %99 = vector.extract_strided_slice %33 {offsets = [0, 176], sizes = [8, 16], strides = [1, 1]} : vector<8x192xf32> to vector<8x16xf32>
    %100 = arith.truncf %97 : vector<8x16xf32> to vector<8x16xbf16>
    %101 = arith.truncf %98 : vector<8x16xf32> to vector<8x16xbf16>
    %cst_33 = arith.constant dense<0.000000e+00> : vector<8x8xf32>
    %102 = tpu.matmul %100, %101, %cst_33 {dimension_numbers = #tpu.dot_dimension_numbers<[1], [1], [0], [0], [0, 0, 1, 0], [], []>} : vector<8x16xbf16>, vector<8x16xbf16>, vector<8x8xf32> -> vector<8x8xf32>
    %cst_34 = arith.constant 2.500000e-01 : f32
    %103 = vector.broadcast %cst_34 : f32 to vector<8x8xf32>
    %104 = arith.mulf %102, %103 : vector<8x8xf32>
    %cst_35 = arith.constant dense<0xFF800000> : vector<8xf32>
    %105 = vector.multi_reduction <maximumf>, %104, %cst_35 [1] : vector<8x8xf32> to vector<8xf32>
    %106 = vector.shape_cast %105 : vector<8xf32> to vector<8x1xf32>
    %107 = vector.broadcast %106 : vector<8x1xf32> to vector<8x8xf32>
    %108 = arith.subf %104, %107 : vector<8x8xf32>
    %109 = math.exp %108 : vector<8x8xf32>
    %cst_36 = arith.constant dense<0.000000e+00> : vector<8xf32>
    %110 = vector.multi_reduction <add>, %109, %cst_36 [1] : vector<8x8xf32> to vector<8xf32>
    %111 = vector.shape_cast %110 : vector<8xf32> to vector<8x1xf32>
    %112 = tpu.reciprocal %111 {approx = true} : vector<8x1xf32> -> vector<8x1xf32>
    %113 = vector.broadcast %112 : vector<8x1xf32> to vector<8x8xf32>
    %114 = arith.mulf %109, %113 : vector<8x8xf32>
    %115 = arith.truncf %114 : vector<8x8xf32> to vector<8x8xbf16>
    %116 = arith.truncf %99 : vector<8x16xf32> to vector<8x16xbf16>
    %cst_37 = arith.constant dense<0.000000e+00> : vector<8x16xf32>
    %117 = tpu.matmul %115, %116, %cst_37 {dimension_numbers = #tpu.dot_dimension_numbers<[1], [0], [0], [1], [0, 0, 1, 1], [], []>} : vector<8x8xbf16>, vector<8x16xbf16>, vector<8x16xf32> -> vector<8x16xf32>
    %118 = tpu.concatenate %54, %75, %96, %117 in 1 : vector<8x16xf32>, vector<8x16xf32>, vector<8x16xf32>, vector<8x16xf32> -> vector<8x64xf32>
    %119 = arith.truncf %118 : vector<8x64xf32> to vector<8x64xbf16>
    %c0_38 = arith.constant 0 : index
    %c0_39 = arith.constant 0 : index
    %120 = vector.load %arg7[%c0_38, %c0_39] : memref<64x64xbf16, #tpu.memory_space<vmem>>, vector<64x64xbf16>
    %cst_40 = arith.constant dense<0.000000e+00> : vector<8x64xf32>
    %121 = tpu.matmul %119, %120, %cst_40 {dimension_numbers = #tpu.dot_dimension_numbers<[1], [0], [0], [1], [0, 0, 1, 1], [], []>} : vector<8x64xbf16>, vector<64x64xbf16>, vector<8x64xf32> -> vector<8x64xf32>
    %122 = arith.addf %121, %30 : vector<8x64xf32>
    %c0_41 = arith.constant 0 : index
    %c0_42 = arith.constant 0 : index
    %123 = vector.load %arg8[%c0_41, %c0_42] : memref<1x64xf32, #tpu.memory_space<vmem>>, vector<1x64xf32>
    %c0_43 = arith.constant 0 : index
    %c0_44 = arith.constant 0 : index
    %124 = vector.load %arg9[%c0_43, %c0_44] : memref<1x64xf32, #tpu.memory_space<vmem>>, vector<1x64xf32>
    %cst_45 = arith.constant dense<0.000000e+00> : vector<8xf32>
    %125 = vector.multi_reduction <add>, %122, %cst_45 [1] : vector<8x64xf32> to vector<8xf32>
    %126 = vector.shape_cast %125 : vector<8xf32> to vector<8x1xf32>
    %cst_46 = arith.constant 6.400000e+01 : f32
    %127 = vector.broadcast %cst_46 : f32 to vector<8x1xf32>
    %128 = arith.divf %126, %127 : vector<8x1xf32>
    %129 = vector.broadcast %128 : vector<8x1xf32> to vector<8x64xf32>
    %130 = arith.subf %122, %129 : vector<8x64xf32>
    %131 = arith.mulf %130, %130 : vector<8x64xf32>
    %cst_47 = arith.constant dense<0.000000e+00> : vector<8xf32>
    %132 = vector.multi_reduction <add>, %131, %cst_47 [1] : vector<8x64xf32> to vector<8xf32>
    %133 = vector.shape_cast %132 : vector<8xf32> to vector<8x1xf32>
    %cst_48 = arith.constant 6.400000e+01 : f32
    %134 = vector.broadcast %cst_48 : f32 to vector<8x1xf32>
    %135 = arith.divf %133, %134 : vector<8x1xf32>
    %136 = vector.broadcast %128 : vector<8x1xf32> to vector<8x64xf32>
    %137 = arith.subf %122, %136 : vector<8x64xf32>
    %cst_49 = arith.constant 9.99999997E-7 : f32
    %138 = vector.broadcast %cst_49 : f32 to vector<8x1xf32>
    %139 = arith.addf %135, %138 : vector<8x1xf32>
    %140 = math.rsqrt %139 : vector<8x1xf32>
    %141 = vector.broadcast %140 : vector<8x1xf32> to vector<8x64xf32>
    %142 = arith.mulf %137, %141 : vector<8x64xf32>
    %143 = vector.broadcast %123 : vector<1x64xf32> to vector<8x64xf32>
    %144 = arith.mulf %142, %143 : vector<8x64xf32>
    %145 = vector.broadcast %124 : vector<1x64xf32> to vector<8x64xf32>
    %146 = arith.addf %144, %145 : vector<8x64xf32>
    %147 = arith.truncf %146 : vector<8x64xf32> to vector<8x64xbf16>
    %c0_50 = arith.constant 0 : index
    %c0_51 = arith.constant 0 : index
    %148 = vector.load %arg10[%c0_50, %c0_51] : memref<64x128xbf16, #tpu.memory_space<vmem>>, vector<64x128xbf16>
    %cst_52 = arith.constant dense<0.000000e+00> : vector<8x128xf32>
    %149 = tpu.matmul %147, %148, %cst_52 {dimension_numbers = #tpu.dot_dimension_numbers<[1], [0], [0], [1], [0, 0, 1, 1], [], []>} : vector<8x64xbf16>, vector<64x128xbf16>, vector<8x128xf32> -> vector<8x128xf32>
    %c0_53 = arith.constant 0 : index
    %c0_54 = arith.constant 0 : index
    %150 = vector.load %arg11[%c0_53, %c0_54] : memref<1x128xf32, #tpu.memory_space<vmem>>, vector<1x128xf32>
    %151 = vector.broadcast %150 : vector<1x128xf32> to vector<8x128xf32>
    %152 = arith.addf %149, %151 : vector<8x128xf32>
    %cst_55 = arith.constant 0.000000e+00 : f32
    %153 = vector.broadcast %cst_55 : f32 to vector<8x128xf32>
    %154 = arith.maximumf %152, %153 : vector<8x128xf32>
    %155 = arith.truncf %154 : vector<8x128xf32> to vector<8x128xbf16>
    %c0_56 = arith.constant 0 : index
    %c0_57 = arith.constant 0 : index
    %156 = vector.load %arg12[%c0_56, %c0_57] : memref<128x64xbf16, #tpu.memory_space<vmem>>, vector<128x64xbf16>
    %cst_58 = arith.constant dense<0.000000e+00> : vector<8x64xf32>
    %157 = tpu.matmul %155, %156, %cst_58 {dimension_numbers = #tpu.dot_dimension_numbers<[1], [0], [0], [1], [0, 0, 1, 1], [], []>} : vector<8x128xbf16>, vector<128x64xbf16>, vector<8x64xf32> -> vector<8x64xf32>
    %c0_59 = arith.constant 0 : index
    %c0_60 = arith.constant 0 : index
    %158 = vector.load %arg13[%c0_59, %c0_60] : memref<1x64xf32, #tpu.memory_space<vmem>>, vector<1x64xf32>
    %159 = vector.broadcast %158 : vector<1x64xf32> to vector<8x64xf32>
    %160 = arith.addf %157, %159 : vector<8x64xf32>
    %161 = arith.addf %160, %146 : vector<8x64xf32>
    %c0_61 = arith.constant 0 : index
    %c0_62 = arith.constant 0 : index
    %162 = vector.load %arg14[%c0_61, %c0_62] : memref<1x64xf32, #tpu.memory_space<vmem>>, vector<1x64xf32>
    %c0_63 = arith.constant 0 : index
    %c0_64 = arith.constant 0 : index
    %163 = vector.load %arg15[%c0_63, %c0_64] : memref<1x64xf32, #tpu.memory_space<vmem>>, vector<1x64xf32>
    %cst_65 = arith.constant dense<0.000000e+00> : vector<8xf32>
    %164 = vector.multi_reduction <add>, %161, %cst_65 [1] : vector<8x64xf32> to vector<8xf32>
    %165 = vector.shape_cast %164 : vector<8xf32> to vector<8x1xf32>
    %cst_66 = arith.constant 6.400000e+01 : f32
    %166 = vector.broadcast %cst_66 : f32 to vector<8x1xf32>
    %167 = arith.divf %165, %166 : vector<8x1xf32>
    %168 = vector.broadcast %167 : vector<8x1xf32> to vector<8x64xf32>
    %169 = arith.subf %161, %168 : vector<8x64xf32>
    %170 = arith.mulf %169, %169 : vector<8x64xf32>
    %cst_67 = arith.constant dense<0.000000e+00> : vector<8xf32>
    %171 = vector.multi_reduction <add>, %170, %cst_67 [1] : vector<8x64xf32> to vector<8xf32>
    %172 = vector.shape_cast %171 : vector<8xf32> to vector<8x1xf32>
    %cst_68 = arith.constant 6.400000e+01 : f32
    %173 = vector.broadcast %cst_68 : f32 to vector<8x1xf32>
    %174 = arith.divf %172, %173 : vector<8x1xf32>
    %175 = vector.broadcast %167 : vector<8x1xf32> to vector<8x64xf32>
    %176 = arith.subf %161, %175 : vector<8x64xf32>
    %cst_69 = arith.constant 9.99999997E-7 : f32
    %177 = vector.broadcast %cst_69 : f32 to vector<8x1xf32>
    %178 = arith.addf %174, %177 : vector<8x1xf32>
    %179 = math.rsqrt %178 : vector<8x1xf32>
    %180 = vector.broadcast %179 : vector<8x1xf32> to vector<8x64xf32>
    %181 = arith.mulf %176, %180 : vector<8x64xf32>
    %182 = vector.broadcast %162 : vector<1x64xf32> to vector<8x64xf32>
    %183 = arith.mulf %181, %182 : vector<8x64xf32>
    %184 = vector.broadcast %163 : vector<1x64xf32> to vector<8x64xf32>
    %185 = arith.addf %183, %184 : vector<8x64xf32>
    %186 = arith.truncf %185 : vector<8x64xf32> to vector<8x64xbf16>
    %c0_70 = arith.constant 0 : index
    %c0_71 = arith.constant 0 : index
    %c0_72 = arith.constant 0 : index
    %187 = vector.load %arg16[%c0_70, %c0_71, %c0_72] : memref<1x8x64xbf16, #tpu.memory_space<vmem>>, vector<1x8x64xbf16>
    %188 = vector.shape_cast %187 : vector<1x8x64xbf16> to vector<8x64xbf16>
    %189 = vector.shape_cast %186 : vector<8x64xbf16> to vector<1x8x64xbf16>
    tpu.vector_store %arg16[%c0_70, %c0_71, %c0_72], %189 {strides = array<i32>} : memref<1x8x64xbf16, #tpu.memory_space<vmem>>, vector<1x8x64xbf16>,
    return
  }
  func.func @transform_0(%arg0: i32) -> (i32, i32, i32) {
    %c0_i32 = arith.constant 0 : i32
    %c0_i32_0 = arith.constant 0 : i32
    %c0_i32_1 = arith.constant 0 : i32
    return %arg0, %c0_i32, %c0_i32_0 : i32, i32, i32
  }
  func.func @transform_1(%arg0: i32) -> (i32, i32) {
    %c0_i32 = arith.constant 0 : i32
    %c0_i32_0 = arith.constant 0 : i32
    %c0_i32_1 = arith.constant 0 : i32
    return %c0_i32, %c0_i32_0 : i32, i32
  }
  func.func @transform_2(%arg0: i32) -> (i32, i32) {
    %c0_i32 = arith.constant 0 : i32
    %c0_i32_0 = arith.constant 0 : i32
    %c0_i32_1 = arith.constant 0 : i32
    return %c0_i32, %c0_i32_0 : i32, i32
  }
  func.func @transform_3(%arg0: i32) -> (i32, i32) {
    %c0_i32 = arith.constant 0 : i32
    %c0_i32_0 = arith.constant 0 : i32
    %c0_i32_1 = arith.constant 0 : i32
    return %c0_i32, %c0_i32_0 : i32, i32
  }
  func.func @transform_4(%arg0: i32) -> (i32, i32) {
    %c0_i32 = arith.constant 0 : i32
    %c0_i32_0 = arith.constant 0 : i32
    %c0_i32_1 = arith.constant 0 : i32
    return %c0_i32, %c0_i32_0 : i32, i32
  }
  func.func @transform_5(%arg0: i32) -> (i32, i32) {
    %c0_i32 = arith.constant 0 : i32
    %c0_i32_0 = arith.constant 0 : i32
    %c0_i32_1 = arith.constant 0 : i32
    return %c0_i32, %c0_i32_0 : i32, i32
  }
  func.func @transform_6(%arg0: i32) -> (i32, i32) {
    %c0_i32 = arith.constant 0 : i32
    %c0_i32_0 = arith.constant 0 : i32
    %c0_i32_1 = arith.constant 0 : i32
    return %c0_i32, %c0_i32_0 : i32, i32
  }
  func.func @transform_7(%arg0: i32) -> (i32, i32) {
    %c0_i32 = arith.constant 0 : i32
    %c0_i32_0 = arith.constant 0 : i32
    %c0_i32_1 = arith.constant 0 : i32
    return %c0_i32, %c0_i32_0 : i32, i32
  }
  func.func @transform_8(%arg0: i32) -> (i32, i32) {
    %c0_i32 = arith.constant 0 : i32
    %c0_i32_0 = arith.constant 0 : i32
    %c0_i32_1 = arith.constant 0 : i32
    return %c0_i32, %c0_i32_0 : i32, i32
  }
  func.func @transform_9(%arg0: i32) -> (i32, i32) {
    %c0_i32 = arith.constant 0 : i32
    %c0_i32_0 = arith.constant 0 : i32
    %c0_i32_1 = arith.constant 0 : i32
    return %c0_i32, %c0_i32_0 : i32, i32
  }
  func.func @transform_10(%arg0: i32) -> (i32, i32) {
    %c0_i32 = arith.constant 0 : i32
    %c0_i32_0 = arith.constant 0 : i32
    %c0_i32_1 = arith.constant 0 : i32
    return %c0_i32, %c0_i32_0 : i32, i32
  }
  func.func @transform_11(%arg0: i32) -> (i32, i32) {
    %c0_i32 = arith.constant 0 : i32
    %c0_i32_0 = arith.constant 0 : i32
    %c0_i32_1 = arith.constant 0 : i32
    return %c0_i32, %c0_i32_0 : i32, i32
  }
  func.func @transform_12(%arg0: i32) -> (i32, i32) {
    %c0_i32 = arith.constant 0 : i32
    %c0_i32_0 = arith.constant 0 : i32
    %c0_i32_1 = arith.constant 0 : i32
    return %c0_i32, %c0_i32_0 : i32, i32
  }
  func.func @transform_13(%arg0: i32) -> (i32, i32) {
    %c0_i32 = arith.constant 0 : i32
    %c0_i32_0 = arith.constant 0 : i32
    %c0_i32_1 = arith.constant 0 : i32
    return %c0_i32, %c0_i32_0 : i32, i32
  }
  func.func @transform_14(%arg0: i32) -> (i32, i32) {
    %c0_i32 = arith.constant 0 : i32
    %c0_i32_0 = arith.constant 0 : i32
    %c0_i32_1 = arith.constant 0 : i32
    return %c0_i32, %c0_i32_0 : i32, i32
  }
  func.func @transform_15(%arg0: i32) -> (i32, i32, i32) {
    %c0_i32 = arith.constant 0 : i32
    %c0_i32_0 = arith.constant 0 : i32
    %c0_i32_1 = arith.constant 0 : i32
    return %arg0, %c0_i32, %c0_i32_0 : i32, i32, i32
  }
}

module attributes {stable_mosaic.version = 11 : i64} {
  func.func @_decoder_block_kernel(%arg0: i32, %arg1: memref<1x8x64xbf16, #tpu.memory_space<vmem>>, %arg2: memref<1x8x32xbf16, #tpu.memory_space<vmem>>, %arg3: memref<64x32xbf16, #tpu.memory_space<vmem>>, %arg4: memref<1x32xf32, #tpu.memory_space<vmem>>, %arg5: memref<32x64xbf16, #tpu.memory_space<vmem>>, %arg6: memref<1x64xf32, #tpu.memory_space<vmem>>, %arg7: memref<32x64xbf16, #tpu.memory_space<vmem>>, %arg8: memref<1x32xf32, #tpu.memory_space<vmem>>, %arg9: memref<1x9x32xbf16, #tpu.memory_space<vmem>>) attributes {dimension_semantics = [#tpu.dimension_semantics<parallel>], iteration_bounds = array<i64: 2>, scalar_prefetch = 0 : i64, scratch_operands = 0 : i64, tpu.core_type = #tpu.core_type<tc>, window_params = [{transform_indices = @transform_0, window_bounds = array<i64: 1, 8, 64>}, {transform_indices = @transform_1, window_bounds = array<i64: 1, 8, 32>}, {pipeline_mode = #tpu.pipeline_mode<synchronous>, transform_indices = @transform_2, window_bounds = array<i64: 64, 32>}, {pipeline_mode = #tpu.pipeline_mode<synchronous>, transform_indices = @transform_3, window_bounds = array<i64: 1, 32>}, {pipeline_mode = #tpu.pipeline_mode<synchronous>, transform_indices = @transform_4, window_bounds = array<i64: 32, 64>}, {pipeline_mode = #tpu.pipeline_mode<synchronous>, transform_indices = @transform_5, window_bounds = array<i64: 1, 64>}, {pipeline_mode = #tpu.pipeline_mode<synchronous>, transform_indices = @transform_6, window_bounds = array<i64: 32, 64>}, {pipeline_mode = #tpu.pipeline_mode<synchronous>, transform_indices = @transform_7, window_bounds = array<i64: 1, 32>}, {transform_indices = @transform_8, window_bounds = array<i64: 1, 9, 32>}]} {
    %c0 = arith.constant 0 : index
    %c0_0 = arith.constant 0 : index
    %c0_1 = arith.constant 0 : index
    %0 = vector.load %arg1[%c0, %c0_0, %c0_1] : memref<1x8x64xbf16, #tpu.memory_space<vmem>>, vector<1x8x64xbf16>
    %1 = vector.shape_cast %0 : vector<1x8x64xbf16> to vector<8x64xbf16>
    %c0_2 = arith.constant 0 : index
    %c0_3 = arith.constant 0 : index
    %2 = vector.load %arg3[%c0_2, %c0_3] : memref<64x32xbf16, #tpu.memory_space<vmem>>, vector<64x32xbf16>
    %cst = arith.constant dense<0.000000e+00> : vector<8x32xf32>
    %3 = tpu.matmul %1, %2, %cst {dimension_numbers = #tpu.dot_dimension_numbers<[1], [0], [0], [1], [0, 0, 1, 1], [], []>} : vector<8x64xbf16>, vector<64x32xbf16>, vector<8x32xf32> -> vector<8x32xf32>
    %c0_4 = arith.constant 0 : index
    %c0_5 = arith.constant 0 : index
    %4 = vector.load %arg4[%c0_4, %c0_5] : memref<1x32xf32, #tpu.memory_space<vmem>>, vector<1x32xf32>
    %5 = vector.broadcast %4 : vector<1x32xf32> to vector<8x32xf32>
    %6 = arith.addf %3, %5 : vector<8x32xf32>
    %c0_6 = arith.constant 0 : index
    %c0_7 = arith.constant 0 : index
    %c0_8 = arith.constant 0 : index
    %7 = vector.load %arg2[%c0_6, %c0_7, %c0_8] : memref<1x8x32xbf16, #tpu.memory_space<vmem>>, vector<1x8x32xbf16>
    %8 = vector.shape_cast %7 : vector<1x8x32xbf16> to vector<8x32xbf16>
    %9 = arith.extf %8 : vector<8x32xbf16> to vector<8x32xf32>
    %10 = arith.addf %6, %9 : vector<8x32xf32>
    %11 = arith.truncf %10 : vector<8x32xf32> to vector<8x32xbf16>
    %c0_9 = arith.constant 0 : index
    %c0_10 = arith.constant 0 : index
    %12 = vector.load %arg5[%c0_9, %c0_10] : memref<32x64xbf16, #tpu.memory_space<vmem>>, vector<32x64xbf16>
    %cst_11 = arith.constant dense<0.000000e+00> : vector<8x64xf32>
    %13 = tpu.matmul %11, %12, %cst_11 {dimension_numbers = #tpu.dot_dimension_numbers<[1], [0], [0], [1], [0, 0, 1, 1], [], []>} : vector<8x32xbf16>, vector<32x64xbf16>, vector<8x64xf32> -> vector<8x64xf32>
    %c0_12 = arith.constant 0 : index
    %c0_13 = arith.constant 0 : index
    %14 = vector.load %arg6[%c0_12, %c0_13] : memref<1x64xf32, #tpu.memory_space<vmem>>, vector<1x64xf32>
    %15 = vector.broadcast %14 : vector<1x64xf32> to vector<8x64xf32>
    %16 = arith.addf %13, %15 : vector<8x64xf32>
    %17 = vector.extract_strided_slice %16 {offsets = [0, 0], sizes = [8, 32], strides = [1, 1]} : vector<8x64xf32> to vector<8x32xf32>
    %18 = vector.extract_strided_slice %16 {offsets = [0, 32], sizes = [8, 32], strides = [1, 1]} : vector<8x64xf32> to vector<8x32xf32>
    %cst_14 = arith.constant 0.000000e+00 : f32
    %19 = vector.broadcast %cst_14 : f32 to vector<8x32xf32>
    %20 = arith.subf %19, %18 : vector<8x32xf32>
    %21 = math.exp %20 : vector<8x32xf32>
    %cst_15 = arith.constant 1.000000e+00 : f32
    %22 = vector.broadcast %cst_15 : f32 to vector<8x32xf32>
    %23 = arith.addf %22, %21 : vector<8x32xf32>
    %24 = tpu.reciprocal %23 {approx = true} : vector<8x32xf32> -> vector<8x32xf32>
    %25 = arith.mulf %17, %24 : vector<8x32xf32>
    %26 = arith.truncf %25 : vector<8x32xf32> to vector<8x32xbf16>
    %c0_16 = arith.constant 0 : index
    %c0_17 = arith.constant 0 : index
    %27 = vector.load %arg7[%c0_16, %c0_17] : memref<32x64xbf16, #tpu.memory_space<vmem>>, vector<32x64xbf16>
    %28 = vector.extract_strided_slice %27 {offsets = [0, 0], sizes = [32, 32], strides = [1, 1]} : vector<32x64xbf16> to vector<32x32xbf16>
    %cst_18 = arith.constant dense<0.000000e+00> : vector<8x32xf32>
    %29 = tpu.matmul %26, %28, %cst_18 {dimension_numbers = #tpu.dot_dimension_numbers<[1], [0], [0], [1], [0, 0, 1, 1], [], []>} : vector<8x32xbf16>, vector<32x32xbf16>, vector<8x32xf32> -> vector<8x32xf32>
    %30 = vector.extract_strided_slice %27 {offsets = [0, 32], sizes = [32, 32], strides = [1, 1]} : vector<32x64xbf16> to vector<32x32xbf16>
    %cst_19 = arith.constant dense<0.000000e+00> : vector<8x32xf32>
    %31 = tpu.matmul %26, %30, %cst_19 {dimension_numbers = #tpu.dot_dimension_numbers<[1], [0], [0], [1], [0, 0, 1, 1], [], []>} : vector<8x32xbf16>, vector<32x32xbf16>, vector<8x32xf32> -> vector<8x32xf32>
    %cst_20 = arith.constant 0.000000e+00 : f32
    %32 = vector.broadcast %cst_20 : f32 to vector<1x32xf32>
    %c0_21 = arith.constant 0 : index
    %c0_22 = arith.constant 0 : index
    %33 = vector.load %arg8[%c0_21, %c0_22] : memref<1x32xf32, #tpu.memory_space<vmem>>, vector<1x32xf32>
    %34 = tpu.concatenate %29, %32 in 0 : vector<8x32xf32>, vector<1x32xf32> -> vector<9x32xf32>
    %35 = vector.broadcast %33 : vector<1x32xf32> to vector<9x32xf32>
    %36 = arith.addf %35, %34 : vector<9x32xf32>
    %37 = tpu.concatenate %32, %31 in 0 : vector<1x32xf32>, vector<8x32xf32> -> vector<9x32xf32>
    %38 = arith.addf %36, %37 : vector<9x32xf32>
    %cst_23 = arith.constant 0.000000e+00 : f32
    %39 = vector.broadcast %cst_23 : f32 to vector<9x32xf32>
    %40 = arith.maximumf %38, %39 : vector<9x32xf32>
    %41 = arith.truncf %40 : vector<9x32xf32> to vector<9x32xbf16>
    %c0_24 = arith.constant 0 : index
    %c0_25 = arith.constant 0 : index
    %c0_26 = arith.constant 0 : index
    %42 = vector.load %arg9[%c0_24, %c0_25, %c0_26] : memref<1x9x32xbf16, #tpu.memory_space<vmem>>, vector<1x9x32xbf16>
    %43 = vector.shape_cast %42 : vector<1x9x32xbf16> to vector<9x32xbf16>
    %44 = vector.shape_cast %41 : vector<9x32xbf16> to vector<1x9x32xbf16>
    tpu.vector_store %arg9[%c0_24, %c0_25, %c0_26], %44 {strides = array<i32>} : memref<1x9x32xbf16, #tpu.memory_space<vmem>>, vector<1x9x32xbf16>,
    return
  }
  func.func @transform_0(%arg0: i32) -> (i32, i32, i32) {
    %c0_i32 = arith.constant 0 : i32
    %c0_i32_0 = arith.constant 0 : i32
    %c0_i32_1 = arith.constant 0 : i32
    return %arg0, %c0_i32, %c0_i32_0 : i32, i32, i32
  }
  func.func @transform_1(%arg0: i32) -> (i32, i32, i32) {
    %c0_i32 = arith.constant 0 : i32
    %c0_i32_0 = arith.constant 0 : i32
    %c0_i32_1 = arith.constant 0 : i32
    return %arg0, %c0_i32, %c0_i32_0 : i32, i32, i32
  }
  func.func @transform_2(%arg0: i32) -> (i32, i32) {
    %c0_i32 = arith.constant 0 : i32
    %c0_i32_0 = arith.constant 0 : i32
    %c0_i32_1 = arith.constant 0 : i32
    return %c0_i32, %c0_i32_0 : i32, i32
  }
  func.func @transform_3(%arg0: i32) -> (i32, i32) {
    %c0_i32 = arith.constant 0 : i32
    %c0_i32_0 = arith.constant 0 : i32
    %c0_i32_1 = arith.constant 0 : i32
    return %c0_i32, %c0_i32_0 : i32, i32
  }
  func.func @transform_4(%arg0: i32) -> (i32, i32) {
    %c0_i32 = arith.constant 0 : i32
    %c0_i32_0 = arith.constant 0 : i32
    %c0_i32_1 = arith.constant 0 : i32
    return %c0_i32, %c0_i32_0 : i32, i32
  }
  func.func @transform_5(%arg0: i32) -> (i32, i32) {
    %c0_i32 = arith.constant 0 : i32
    %c0_i32_0 = arith.constant 0 : i32
    %c0_i32_1 = arith.constant 0 : i32
    return %c0_i32, %c0_i32_0 : i32, i32
  }
  func.func @transform_6(%arg0: i32) -> (i32, i32) {
    %c0_i32 = arith.constant 0 : i32
    %c0_i32_0 = arith.constant 0 : i32
    %c0_i32_1 = arith.constant 0 : i32
    return %c0_i32, %c0_i32_0 : i32, i32
  }
  func.func @transform_7(%arg0: i32) -> (i32, i32) {
    %c0_i32 = arith.constant 0 : i32
    %c0_i32_0 = arith.constant 0 : i32
    %c0_i32_1 = arith.constant 0 : i32
    return %c0_i32, %c0_i32_0 : i32, i32
  }
  func.func @transform_8(%arg0: i32) -> (i32, i32, i32) {
    %c0_i32 = arith.constant 0 : i32
    %c0_i32_0 = arith.constant 0 : i32
    %c0_i32_1 = arith.constant 0 : i32
    return %arg0, %c0_i32, %c0_i32_0 : i32, i32, i32
  }
}

module attributes {stable_mosaic.version = 11 : i64} {
  func.func @_decoder_block_kernel(%arg0: i32, %arg1: memref<1x18x16xbf16, #tpu.memory_space<vmem>>, %arg2: memref<1x18x16xbf16, #tpu.memory_space<vmem>>, %arg3: memref<16x32xbf16, #tpu.memory_space<vmem>>, %arg4: memref<1x32xf32, #tpu.memory_space<vmem>>, %arg5: memref<16x32xbf16, #tpu.memory_space<vmem>>, %arg6: memref<1x16xf32, #tpu.memory_space<vmem>>, %arg7: memref<1x19x16xbf16, #tpu.memory_space<vmem>>) attributes {dimension_semantics = [#tpu.dimension_semantics<parallel>], iteration_bounds = array<i64: 2>, scalar_prefetch = 0 : i64, scratch_operands = 0 : i64, tpu.core_type = #tpu.core_type<tc>, window_params = [{transform_indices = @transform_0, window_bounds = array<i64: 1, 18, 16>}, {transform_indices = @transform_1, window_bounds = array<i64: 1, 18, 16>}, {pipeline_mode = #tpu.pipeline_mode<synchronous>, transform_indices = @transform_2, window_bounds = array<i64: 16, 32>}, {pipeline_mode = #tpu.pipeline_mode<synchronous>, transform_indices = @transform_3, window_bounds = array<i64: 1, 32>}, {pipeline_mode = #tpu.pipeline_mode<synchronous>, transform_indices = @transform_4, window_bounds = array<i64: 16, 32>}, {pipeline_mode = #tpu.pipeline_mode<synchronous>, transform_indices = @transform_5, window_bounds = array<i64: 1, 16>}, {transform_indices = @transform_6, window_bounds = array<i64: 1, 19, 16>}]} {
    %c0 = arith.constant 0 : index
    %c0_0 = arith.constant 0 : index
    %c0_1 = arith.constant 0 : index
    %0 = vector.load %arg1[%c0, %c0_0, %c0_1] : memref<1x18x16xbf16, #tpu.memory_space<vmem>>, vector<1x18x16xbf16>
    %1 = vector.shape_cast %0 : vector<1x18x16xbf16> to vector<18x16xbf16>
    %2 = arith.extf %1 : vector<18x16xbf16> to vector<18x16xf32>
    %c0_2 = arith.constant 0 : index
    %c0_3 = arith.constant 0 : index
    %c0_4 = arith.constant 0 : index
    %3 = vector.load %arg2[%c0_2, %c0_3, %c0_4] : memref<1x18x16xbf16, #tpu.memory_space<vmem>>, vector<1x18x16xbf16>
    %4 = vector.shape_cast %3 : vector<1x18x16xbf16> to vector<18x16xbf16>
    %5 = arith.extf %4 : vector<18x16xbf16> to vector<18x16xf32>
    %6 = arith.addf %2, %5 : vector<18x16xf32>
    %7 = arith.truncf %6 : vector<18x16xf32> to vector<18x16xbf16>
    %c0_5 = arith.constant 0 : index
    %c0_6 = arith.constant 0 : index
    %8 = vector.load %arg3[%c0_5, %c0_6] : memref<16x32xbf16, #tpu.memory_space<vmem>>, vector<16x32xbf16>
    %cst = arith.constant dense<0.000000e+00> : vector<18x32xf32>
    %9 = tpu.matmul %7, %8, %cst {dimension_numbers = #tpu.dot_dimension_numbers<[1], [0], [0], [1], [0, 0, 1, 1], [], []>} : vector<18x16xbf16>, vector<16x32xbf16>, vector<18x32xf32> -> vector<18x32xf32>
    %c0_7 = arith.constant 0 : index
    %c0_8 = arith.constant 0 : index
    %10 = vector.load %arg4[%c0_7, %c0_8] : memref<1x32xf32, #tpu.memory_space<vmem>>, vector<1x32xf32>
    %11 = vector.broadcast %10 : vector<1x32xf32> to vector<18x32xf32>
    %12 = arith.addf %9, %11 : vector<18x32xf32>
    %13 = vector.extract_strided_slice %12 {offsets = [0, 0], sizes = [18, 16], strides = [1, 1]} : vector<18x32xf32> to vector<18x16xf32>
    %14 = vector.extract_strided_slice %12 {offsets = [0, 16], sizes = [18, 16], strides = [1, 1]} : vector<18x32xf32> to vector<18x16xf32>
    %cst_9 = arith.constant 0.000000e+00 : f32
    %15 = vector.broadcast %cst_9 : f32 to vector<18x16xf32>
    %16 = arith.subf %15, %14 : vector<18x16xf32>
    %17 = math.exp %16 : vector<18x16xf32>
    %cst_10 = arith.constant 1.000000e+00 : f32
    %18 = vector.broadcast %cst_10 : f32 to vector<18x16xf32>
    %19 = arith.addf %18, %17 : vector<18x16xf32>
    %20 = tpu.reciprocal %19 {approx = true} : vector<18x16xf32> -> vector<18x16xf32>
    %21 = arith.mulf %13, %20 : vector<18x16xf32>
    %22 = arith.truncf %21 : vector<18x16xf32> to vector<18x16xbf16>
    %c0_11 = arith.constant 0 : index
    %c0_12 = arith.constant 0 : index
    %23 = vector.load %arg5[%c0_11, %c0_12] : memref<16x32xbf16, #tpu.memory_space<vmem>>, vector<16x32xbf16>
    %24 = vector.extract_strided_slice %23 {offsets = [0, 0], sizes = [16, 16], strides = [1, 1]} : vector<16x32xbf16> to vector<16x16xbf16>
    %cst_13 = arith.constant dense<0.000000e+00> : vector<18x16xf32>
    %25 = tpu.matmul %22, %24, %cst_13 {dimension_numbers = #tpu.dot_dimension_numbers<[1], [0], [0], [1], [0, 0, 1, 1], [], []>} : vector<18x16xbf16>, vector<16x16xbf16>, vector<18x16xf32> -> vector<18x16xf32>
    %26 = vector.extract_strided_slice %23 {offsets = [0, 16], sizes = [16, 16], strides = [1, 1]} : vector<16x32xbf16> to vector<16x16xbf16>
    %cst_14 = arith.constant dense<0.000000e+00> : vector<18x16xf32>
    %27 = tpu.matmul %22, %26, %cst_14 {dimension_numbers = #tpu.dot_dimension_numbers<[1], [0], [0], [1], [0, 0, 1, 1], [], []>} : vector<18x16xbf16>, vector<16x16xbf16>, vector<18x16xf32> -> vector<18x16xf32>
    %cst_15 = arith.constant 0.000000e+00 : f32
    %28 = vector.broadcast %cst_15 : f32 to vector<1x16xf32>
    %c0_16 = arith.constant 0 : index
    %c0_17 = arith.constant 0 : index
    %29 = vector.load %arg6[%c0_16, %c0_17] : memref<1x16xf32, #tpu.memory_space<vmem>>, vector<1x16xf32>
    %30 = tpu.concatenate %25, %28 in 0 : vector<18x16xf32>, vector<1x16xf32> -> vector<19x16xf32>
    %31 = vector.broadcast %29 : vector<1x16xf32> to vector<19x16xf32>
    %32 = arith.addf %31, %30 : vector<19x16xf32>
    %33 = tpu.concatenate %28, %27 in 0 : vector<1x16xf32>, vector<18x16xf32> -> vector<19x16xf32>
    %34 = arith.addf %32, %33 : vector<19x16xf32>
    %cst_18 = arith.constant 0.000000e+00 : f32
    %35 = vector.broadcast %cst_18 : f32 to vector<19x16xf32>
    %36 = arith.maximumf %34, %35 : vector<19x16xf32>
    %37 = arith.truncf %36 : vector<19x16xf32> to vector<19x16xbf16>
    %c0_19 = arith.constant 0 : index
    %c0_20 = arith.constant 0 : index
    %c0_21 = arith.constant 0 : index
    %38 = vector.load %arg7[%c0_19, %c0_20, %c0_21] : memref<1x19x16xbf16, #tpu.memory_space<vmem>>, vector<1x19x16xbf16>
    %39 = vector.shape_cast %38 : vector<1x19x16xbf16> to vector<19x16xbf16>
    %40 = vector.shape_cast %37 : vector<19x16xbf16> to vector<1x19x16xbf16>
    tpu.vector_store %arg7[%c0_19, %c0_20, %c0_21], %40 {strides = array<i32>} : memref<1x19x16xbf16, #tpu.memory_space<vmem>>, vector<1x19x16xbf16>,
    return
  }
  func.func @transform_0(%arg0: i32) -> (i32, i32, i32) {
    %c0_i32 = arith.constant 0 : i32
    %c0_i32_0 = arith.constant 0 : i32
    %c0_i32_1 = arith.constant 0 : i32
    return %arg0, %c0_i32, %c0_i32_0 : i32, i32, i32
  }
  func.func @transform_1(%arg0: i32) -> (i32, i32, i32) {
    %c0_i32 = arith.constant 0 : i32
    %c0_i32_0 = arith.constant 0 : i32
    %c0_i32_1 = arith.constant 0 : i32
    return %arg0, %c0_i32, %c0_i32_0 : i32, i32, i32
  }
  func.func @transform_2(%arg0: i32) -> (i32, i32) {
    %c0_i32 = arith.constant 0 : i32
    %c0_i32_0 = arith.constant 0 : i32
    %c0_i32_1 = arith.constant 0 : i32
    return %c0_i32, %c0_i32_0 : i32, i32
  }
  func.func @transform_3(%arg0: i32) -> (i32, i32) {
    %c0_i32 = arith.constant 0 : i32
    %c0_i32_0 = arith.constant 0 : i32
    %c0_i32_1 = arith.constant 0 : i32
    return %c0_i32, %c0_i32_0 : i32, i32
  }
  func.func @transform_4(%arg0: i32) -> (i32, i32) {
    %c0_i32 = arith.constant 0 : i32
    %c0_i32_0 = arith.constant 0 : i32
    %c0_i32_1 = arith.constant 0 : i32
    return %c0_i32, %c0_i32_0 : i32, i32
  }
  func.func @transform_5(%arg0: i32) -> (i32, i32) {
    %c0_i32 = arith.constant 0 : i32
    %c0_i32_0 = arith.constant 0 : i32
    %c0_i32_1 = arith.constant 0 : i32
    return %c0_i32, %c0_i32_0 : i32, i32
  }
  func.func @transform_6(%arg0: i32) -> (i32, i32, i32) {
    %c0_i32 = arith.constant 0 : i32
    %c0_i32_0 = arith.constant 0 : i32
    %c0_i32_1 = arith.constant 0 : i32
    return %arg0, %c0_i32, %c0_i32_0 : i32, i32, i32
  }
}

module attributes {stable_mosaic.version = 11 : i64} {
  func.func @_decoder_block_kernel(%arg0: i32, %arg1: memref<1x38x8xbf16, #tpu.memory_space<vmem>>, %arg2: memref<1x38x8xbf16, #tpu.memory_space<vmem>>, %arg3: memref<8x16xbf16, #tpu.memory_space<vmem>>, %arg4: memref<1x16xf32, #tpu.memory_space<vmem>>, %arg5: memref<8x12xbf16, #tpu.memory_space<vmem>>, %arg6: memref<1x6xf32, #tpu.memory_space<vmem>>, %arg7: memref<1x39x6xf32, #tpu.memory_space<vmem>>) attributes {dimension_semantics = [#tpu.dimension_semantics<parallel>], iteration_bounds = array<i64: 2>, scalar_prefetch = 0 : i64, scratch_operands = 0 : i64, tpu.core_type = #tpu.core_type<tc>, window_params = [{transform_indices = @transform_0, window_bounds = array<i64: 1, 38, 8>}, {transform_indices = @transform_1, window_bounds = array<i64: 1, 38, 8>}, {pipeline_mode = #tpu.pipeline_mode<synchronous>, transform_indices = @transform_2, window_bounds = array<i64: 8, 16>}, {pipeline_mode = #tpu.pipeline_mode<synchronous>, transform_indices = @transform_3, window_bounds = array<i64: 1, 16>}, {pipeline_mode = #tpu.pipeline_mode<synchronous>, transform_indices = @transform_4, window_bounds = array<i64: 8, 12>}, {pipeline_mode = #tpu.pipeline_mode<synchronous>, transform_indices = @transform_5, window_bounds = array<i64: 1, 6>}, {transform_indices = @transform_6, window_bounds = array<i64: 1, 39, 6>}]} {
    %c0 = arith.constant 0 : index
    %c0_0 = arith.constant 0 : index
    %c0_1 = arith.constant 0 : index
    %0 = vector.load %arg1[%c0, %c0_0, %c0_1] : memref<1x38x8xbf16, #tpu.memory_space<vmem>>, vector<1x38x8xbf16>
    %1 = vector.shape_cast %0 : vector<1x38x8xbf16> to vector<38x8xbf16>
    %2 = arith.extf %1 : vector<38x8xbf16> to vector<38x8xf32>
    %c0_2 = arith.constant 0 : index
    %c0_3 = arith.constant 0 : index
    %c0_4 = arith.constant 0 : index
    %3 = vector.load %arg2[%c0_2, %c0_3, %c0_4] : memref<1x38x8xbf16, #tpu.memory_space<vmem>>, vector<1x38x8xbf16>
    %4 = vector.shape_cast %3 : vector<1x38x8xbf16> to vector<38x8xbf16>
    %5 = arith.extf %4 : vector<38x8xbf16> to vector<38x8xf32>
    %6 = arith.addf %2, %5 : vector<38x8xf32>
    %7 = arith.truncf %6 : vector<38x8xf32> to vector<38x8xbf16>
    %c0_5 = arith.constant 0 : index
    %c0_6 = arith.constant 0 : index
    %8 = vector.load %arg3[%c0_5, %c0_6] : memref<8x16xbf16, #tpu.memory_space<vmem>>, vector<8x16xbf16>
    %cst = arith.constant dense<0.000000e+00> : vector<38x16xf32>
    %9 = tpu.matmul %7, %8, %cst {dimension_numbers = #tpu.dot_dimension_numbers<[1], [0], [0], [1], [0, 0, 1, 1], [], []>} : vector<38x8xbf16>, vector<8x16xbf16>, vector<38x16xf32> -> vector<38x16xf32>
    %c0_7 = arith.constant 0 : index
    %c0_8 = arith.constant 0 : index
    %10 = vector.load %arg4[%c0_7, %c0_8] : memref<1x16xf32, #tpu.memory_space<vmem>>, vector<1x16xf32>
    %11 = vector.broadcast %10 : vector<1x16xf32> to vector<38x16xf32>
    %12 = arith.addf %9, %11 : vector<38x16xf32>
    %13 = vector.extract_strided_slice %12 {offsets = [0, 0], sizes = [38, 8], strides = [1, 1]} : vector<38x16xf32> to vector<38x8xf32>
    %14 = vector.extract_strided_slice %12 {offsets = [0, 8], sizes = [38, 8], strides = [1, 1]} : vector<38x16xf32> to vector<38x8xf32>
    %cst_9 = arith.constant 0.000000e+00 : f32
    %15 = vector.broadcast %cst_9 : f32 to vector<38x8xf32>
    %16 = arith.subf %15, %14 : vector<38x8xf32>
    %17 = math.exp %16 : vector<38x8xf32>
    %cst_10 = arith.constant 1.000000e+00 : f32
    %18 = vector.broadcast %cst_10 : f32 to vector<38x8xf32>
    %19 = arith.addf %18, %17 : vector<38x8xf32>
    %20 = tpu.reciprocal %19 {approx = true} : vector<38x8xf32> -> vector<38x8xf32>
    %21 = arith.mulf %13, %20 : vector<38x8xf32>
    %22 = arith.truncf %21 : vector<38x8xf32> to vector<38x8xbf16>
    %c0_11 = arith.constant 0 : index
    %c0_12 = arith.constant 0 : index
    %23 = vector.load %arg5[%c0_11, %c0_12] : memref<8x12xbf16, #tpu.memory_space<vmem>>, vector<8x12xbf16>
    %24 = vector.extract_strided_slice %23 {offsets = [0, 0], sizes = [8, 6], strides = [1, 1]} : vector<8x12xbf16> to vector<8x6xbf16>
    %cst_13 = arith.constant dense<0.000000e+00> : vector<38x6xf32>
    %25 = tpu.matmul %22, %24, %cst_13 {dimension_numbers = #tpu.dot_dimension_numbers<[1], [0], [0], [1], [0, 0, 1, 1], [], []>} : vector<38x8xbf16>, vector<8x6xbf16>, vector<38x6xf32> -> vector<38x6xf32>
    %26 = vector.extract_strided_slice %23 {offsets = [0, 6], sizes = [8, 6], strides = [1, 1]} : vector<8x12xbf16> to vector<8x6xbf16>
    %cst_14 = arith.constant dense<0.000000e+00> : vector<38x6xf32>
    %27 = tpu.matmul %22, %26, %cst_14 {dimension_numbers = #tpu.dot_dimension_numbers<[1], [0], [0], [1], [0, 0, 1, 1], [], []>} : vector<38x8xbf16>, vector<8x6xbf16>, vector<38x6xf32> -> vector<38x6xf32>
    %cst_15 = arith.constant 0.000000e+00 : f32
    %28 = vector.broadcast %cst_15 : f32 to vector<1x6xf32>
    %c0_16 = arith.constant 0 : index
    %c0_17 = arith.constant 0 : index
    %29 = vector.load %arg6[%c0_16, %c0_17] : memref<1x6xf32, #tpu.memory_space<vmem>>, vector<1x6xf32>
    %30 = tpu.concatenate %25, %28 in 0 : vector<38x6xf32>, vector<1x6xf32> -> vector<39x6xf32>
    %31 = vector.broadcast %29 : vector<1x6xf32> to vector<39x6xf32>
    %32 = arith.addf %31, %30 : vector<39x6xf32>
    %33 = tpu.concatenate %28, %27 in 0 : vector<1x6xf32>, vector<38x6xf32> -> vector<39x6xf32>
    %34 = arith.addf %32, %33 : vector<39x6xf32>
    %c0_18 = arith.constant 0 : index
    %c0_19 = arith.constant 0 : index
    %c0_20 = arith.constant 0 : index
    %35 = vector.load %arg7[%c0_18, %c0_19, %c0_20] : memref<1x39x6xf32, #tpu.memory_space<vmem>>, vector<1x39x6xf32>
    %36 = vector.shape_cast %35 : vector<1x39x6xf32> to vector<39x6xf32>
    %37 = vector.shape_cast %34 : vector<39x6xf32> to vector<1x39x6xf32>
    tpu.vector_store %arg7[%c0_18, %c0_19, %c0_20], %37 {strides = array<i32>} : memref<1x39x6xf32, #tpu.memory_space<vmem>>, vector<1x39x6xf32>,
    return
  }
  func.func @transform_0(%arg0: i32) -> (i32, i32, i32) {
    %c0_i32 = arith.constant 0 : i32
    %c0_i32_0 = arith.constant 0 : i32
    %c0_i32_1 = arith.constant 0 : i32
    return %arg0, %c0_i32, %c0_i32_0 : i32, i32, i32
  }
  func.func @transform_1(%arg0: i32) -> (i32, i32, i32) {
    %c0_i32 = arith.constant 0 : i32
    %c0_i32_0 = arith.constant 0 : i32
    %c0_i32_1 = arith.constant 0 : i32
    return %arg0, %c0_i32, %c0_i32_0 : i32, i32, i32
  }
  func.func @transform_2(%arg0: i32) -> (i32, i32) {
    %c0_i32 = arith.constant 0 : i32
    %c0_i32_0 = arith.constant 0 : i32
    %c0_i32_1 = arith.constant 0 : i32
    return %c0_i32, %c0_i32_0 : i32, i32
  }
  func.func @transform_3(%arg0: i32) -> (i32, i32) {
    %c0_i32 = arith.constant 0 : i32
    %c0_i32_0 = arith.constant 0 : i32
    %c0_i32_1 = arith.constant 0 : i32
    return %c0_i32, %c0_i32_0 : i32, i32
  }
  func.func @transform_4(%arg0: i32) -> (i32, i32) {
    %c0_i32 = arith.constant 0 : i32
    %c0_i32_0 = arith.constant 0 : i32
    %c0_i32_1 = arith.constant 0 : i32
    return %c0_i32, %c0_i32_0 : i32, i32
  }
  func.func @transform_5(%arg0: i32) -> (i32, i32) {
    %c0_i32 = arith.constant 0 : i32
    %c0_i32_0 = arith.constant 0 : i32
    %c0_i32_1 = arith.constant 0 : i32
    return %c0_i32, %c0_i32_0 : i32, i32
  }
  func.func @transform_6(%arg0: i32) -> (i32, i32, i32) {
    %c0_i32 = arith.constant 0 : i32
    %c0_i32_0 = arith.constant 0 : i32
    %c0_i32_1 = arith.constant 0 : i32
    return %arg0, %c0_i32, %c0_i32_0 : i32, i32, i32
  }
}

</mosaic_0001>

<llo_original>
// kernel: _lambda_.8
$region0: #{_lambda_.8}
  #allocation0 [shape = 'u32[]', space=smem, size = 0x4, offset = 0x4, fixed_abs, tag = 'smem constant byte address 0x4 - core index']
  #allocation1 [shape = 'u32[144,128]{1,0:T(1,128)}', space=vmem, size = 0x12000, scoped, tag = 'internal scratch']
  %s0 = inlined_call_operand.vmem [shape: bf16[2,19,16], index: 0, kind: input, shape index: {}]
  %s1 = inlined_call_operand.vmem [shape: bf16[32,16], index: 1, kind: input, shape index: {}]
  %s2 = inlined_call_operand.vmem [shape: f32[1,16], index: 2, kind: input, shape index: {}]
  %s3 = inlined_call_operand.vmem [shape: bf16[16,32], index: 3, kind: input, shape index: {}]
  %s4 = inlined_call_operand.vmem [shape: f32[1,32], index: 4, kind: input, shape index: {}]
  %s5 = inlined_call_operand.vmem [shape: bf16[2,18,16], index: 5, kind: output, shape index: {}]
  %s6 = sld [smem:[#allocation0]]
  $region53: #{_lambda_.8} parent=0
    _
  %s8 = ssub.s32 1, %s6
  %s9 = scalar_select 0, %s8, %s6
  loop: start=0, step=1, limit=4
  $region2: #{_lambda_.8} parent=0 // loop_pre_header
    _
  $region3: #{_lambda_.8} parent=0 // loop_header
    %s11 = sphi 0, %s15
    %p12 = scmp.ge.s32.totalorder %s11, 4
    %s21 = sphi 0, %s23
    %s24 = sphi 0, %s21
    %s25 = sphi 0, %s24
    %s41 = sphi 0, %s25
    %s45 = sphi 0, %s45
    %s47 = sphi 0, %s45
    %s48 = sphi 0, %s47
    %s62 = sphi 0, %s48
    %s66 = sphi 0, %s66
    %s68 = sphi 0, %s66
    %s69 = sphi 0, %s68
    %s83 = sphi 0, %s69
    %s87 = sphi 0, %s87
    %s89 = sphi 0, %s87
    %s90 = sphi 0, %s89
    %s104 = sphi 0, %s90
    %s108 = sphi 0, %s108
    %s110 = sphi 0, %s108
    %s111 = sphi 0, %s110
    %s125 = sphi 0, %s111
    %s131 = sphi 0, %s133
    %s134 = sphi 0, %s131
    %s135 = sphi 0, %s134
    %s151 = sphi 0, %s135
  $region4: #{_lambda_.8} parent=0 // loop_header_branch
    %14 = sbr.rel (%p12) target = $region8
  $region5: #{_lambda_.8} parent=0 // loop_body
    %s16 = ssub.s32 %s11, 1
    %s17 = ssub.s32 %s11, 2
    %s18 = sadd.s32 %s11, 1
    %s19 = ssub.s32 %s11, %s18
    %p20 = scmp.eq.s32.totalorder %s19, 0
    %s22 = sadd.s32 %s21, 1
    %s23 = scalar_select %p20, %s21, %s22
    %p26 = pneg %p20
    %p27 = scmp.eq.s32.totalorder %s11, 1
    %p28 = por %p26, %p27
    %p29 = scmp.ne.s32.totalorder %s21, %s24
    %p30 = scmp.eq.s32.totalorder %s11, 0
    %p31 = por %p29, %p30
    %p32 = scmp.ne.s32.totalorder %s21, %s24
    %p33 = scmp.eq.s32.totalorder %s16, 1
    %p34 = por %p32, %p33
    %p35 = scmp.ne.s32.totalorder %s24, %s25
    %p36 = scmp.eq.s32.totalorder %s16, 0
    %p37 = por %p35, %p36
    %p38 = scmp.ne.s32.totalorder %s24, %s25
    %p39 = scmp.eq.s32.totalorder %s17, 1
    %p40 = por %p38, %p39
    %p42 = scmp.ne.s32.totalorder %s25, %s41
    %p43 = scmp.eq.s32.totalorder %s17, 0
    %p44 = por %p42, %p43
    %s46 = sadd.s32 %s45, 1
    %p49 = scmp.eq.s32.totalorder %s11, 1
    %p50 = scmp.ne.s32.totalorder %s45, %s47
    %p51 = scmp.eq.s32.totalorder %s11, 0
    %p52 = por %p50, %p51
    %p53 = scmp.ne.s32.totalorder %s45, %s47
    %p54 = scmp.eq.s32.totalorder %s16, 1
    %p55 = por %p53, %p54
    %p56 = scmp.ne.s32.totalorder %s47, %s48
    %p57 = scmp.eq.s32.totalorder %s16, 0
    %p58 = por %p56, %p57
    %p59 = scmp.ne.s32.totalorder %s47, %s48
    %p60 = scmp.eq.s32.totalorder %s17, 1
    %p61 = por %p59, %p60
    %p63 = scmp.ne.s32.totalorder %s48, %s62
    %p64 = scmp.eq.s32.totalorder %s17, 0
    %p65 = por %p63, %p64
    %s67 = sadd.s32 %s66, 1
    %p70 = scmp.eq.s32.totalorder %s11, 1
    %p71 = scmp.ne.s32.totalorder %s66, %s68
    %p72 = scmp.eq.s32.totalorder %s11, 0
    %p73 = por %p71, %p72
    %p74 = scmp.ne.s32.totalorder %s66, %s68
    %p75 = scmp.eq.s32.totalorder %s16, 1
    %p76 = por %p74, %p75
    %p77 = scmp.ne.s32.totalorder %s68, %s69
    %p78 = scmp.eq.s32.totalorder %s16, 0
    %p79 = por %p77, %p78
    %p80 = scmp.ne.s32.totalorder %s68, %s69
    %p81 = scmp.eq.s32.totalorder %s17, 1
    %p82 = por %p80, %p81
    %p84 = scmp.ne.s32.totalorder %s69, %s83
    %p85 = scmp.eq.s32.totalorder %s17, 0
    %p86 = por %p84, %p85
    %s88 = sadd.s32 %s87, 1
    %p91 = scmp.eq.s32.totalorder %s11, 1
    %p92 = scmp.ne.s32.totalorder %s87, %s89
    %p93 = scmp.eq.s32.totalorder %s11, 0
    %p94 = por %p92, %p93
    %p95 = scmp.ne.s32.totalorder %s87, %s89
    %p96 = scmp.eq.s32.totalorder %s16, 1
    %p97 = por %p95, %p96
    %p98 = scmp.ne.s32.totalorder %s89, %s90
    %p99 = scmp.eq.s32.totalorder %s16, 0
    %p100 = por %p98, %p99
    %p101 = scmp.ne.s32.totalorder %s89, %s90
    %p102 = scmp.eq.s32.totalorder %s17, 1
    %p103 = por %p101, %p102
    %p105 = scmp.ne.s32.totalorder %s90, %s104
    %p106 = scmp.eq.s32.totalorder %s17, 0
    %p107 = por %p105, %p106
    %s109 = sadd.s32 %s108, 1
    %p112 = scmp.eq.s32.totalorder %s11, 1
    %p113 = scmp.ne.s32.totalorder %s108, %s110
    %p114 = scmp.eq.s32.totalorder %s11, 0
    %p115 = por %p113, %p114
    %p116 = scmp.ne.s32.totalorder %s108, %s110
    %p117 = scmp.eq.s32.totalorder %s16, 1
    %p118 = por %p116, %p117
    %p119 = scmp.ne.s32.totalorder %s110, %s111
    %p120 = scmp.eq.s32.totalorder %s16, 0
    %p121 = por %p119, %p120
    %p122 = scmp.ne.s32.totalorder %s110, %s111
    %p123 = scmp.eq.s32.totalorder %s17, 1
    %p124 = por %p122, %p123
    %p126 = scmp.ne.s32.totalorder %s111, %s125
    %p127 = scmp.eq.s32.totalorder %s17, 0
    %p128 = por %p126, %p127
    %s129 = ssub.s32 %s11, %s18
    %p130 = scmp.eq.s32.totalorder %s129, 0
    %s132 = sadd.s32 %s131, 1
    %s133 = scalar_select %p130, %s131, %s132
    %p136 = pneg %p130
    %p137 = scmp.eq.s32.totalorder %s11, 1
    %p138 = por %p136, %p137
    %p139 = scmp.ne.s32.totalorder %s131, %s134
    %p140 = scmp.eq.s32.totalorder %s11, 0
    %p141 = por %p139, %p140
    %p142 = scmp.ne.s32.totalorder %s131, %s134
    %p143 = scmp.eq.s32.totalorder %s16, 1
    %p144 = por %p142, %p143
    %p145 = scmp.ne.s32.totalorder %s134, %s135
    %p146 = scmp.eq.s32.totalorder %s16, 0
    %p147 = por %p145, %p146
    %p148 = scmp.ne.s32.totalorder %s134, %s135
    %p149 = scmp.eq.s32.totalorder %s17, 1
    %p150 = por %p148, %p149
    %p152 = scmp.ne.s32.totalorder %s135, %s151
    %p153 = scmp.eq.s32.totalorder %s17, 0
    %p154 = por %p152, %p153
    %p155 = scmp.le.s32.totalorder 1, %s11
    %p156 = scmp.lt.s32.totalorder %s11, 3
    %p157 = pnand %p155, %p156
    %p158 = pneg %p157
    // Predicated region
    $region9: #{_lambda_.8} parent=5 // pred_check
      _
    $region10: #{_lambda_.8} parent=5 // pred_check_branch
      %160 = sbr.rel (%p157) target = $region12
    $region11: #{_lambda_.8} parent=5 // pred_region
      %s161 = ssub.s32 %s11, 1
      // Predicated region
      $region13: #{_lambda_.8} parent=11 // pred_check
        %p162 = pneg %p58
      $region14: #{_lambda_.8} parent=11 // pred_check_branch
        %164 = sbr.rel (%p162) target = $region16
      $region15: #{_lambda_.8} parent=11 // pred_region
        _
      $region16: #{_lambda_.8} parent=11 // pred_fallthru
        _
      // Predicated region
      $region17: #{_lambda_.8} parent=11 // pred_check
        %p165 = pneg %p79
      $region18: #{_lambda_.8} parent=11 // pred_check_branch
        %167 = sbr.rel (%p165) target = $region20
      $region19: #{_lambda_.8} parent=11 // pred_region
        _
      $region20: #{_lambda_.8} parent=11 // pred_fallthru
        _
      // Predicated region
      $region21: #{_lambda_.8} parent=11 // pred_check
        %p168 = pneg %p100
      $region22: #{_lambda_.8} parent=11 // pred_check_branch
        %170 = sbr.rel (%p168) target = $region24
      $region23: #{_lambda_.8} parent=11 // pred_region
        _
      $region24: #{_lambda_.8} parent=11 // pred_fallthru
        _
      // Predicated region
      $region25: #{_lambda_.8} parent=11 // pred_check
        %p171 = pneg %p121
      $region26: #{_lambda_.8} parent=11 // pred_check_branch
        %173 = sbr.rel (%p171) target = $region28
      $region27: #{_lambda_.8} parent=11 // pred_region
        _
      $region28: #{_lambda_.8} parent=11 // pred_fallthru
        _
    $region12: #{_lambda_.8} parent=5 // pred_fallthru
      _
    %p174 = scmp.lt.s32.totalorder %s11, 2
    // Predicated region
    $region29: #{_lambda_.8} parent=5 // pred_check
      %p175 = pneg %p174
    $region30: #{_lambda_.8} parent=5 // pred_check_branch
      %177 = sbr.rel (%p175) target = $region32
    $region31: #{_lambda_.8} parent=5 // pred_region
      // Predicated region
      $region33: #{_lambda_.8} parent=31 // pred_check
        %p178 = pneg %p31
      $region34: #{_lambda_.8} parent=31 // pred_check_branch
        %180 = sbr.rel (%p178) target = $region36
      $region35: #{_lambda_.8} parent=31 // pred_region
        %p181 = scmp.lt.s32.totalorder %s11, 1
        %s182 = scalar_select %p181, %s11, 1
        %s183 = smul.addr %s182, 3
        %s184 = smul.addr %s183, 4
        %s185 = scalar_lea.vmem %s0, %s184
      $region36: #{_lambda_.8} parent=31 // pred_fallthru
        _
    $region32: #{_lambda_.8} parent=5 // pred_fallthru
      _
    %p186 = scmp.le.s32.totalorder 1, %s11
    %p187 = scmp.lt.s32.totalorder %s11, 3
    %p188 = pnand %p186, %p187
    %p189 = pneg %p188
    // Predicated region
    $region37: #{_lambda_.8} parent=5 // pred_check
      _
    $region38: #{_lambda_.8} parent=5 // pred_check_branch
      %191 = sbr.rel (%p188) target = $region40
    $region39: #{_lambda_.8} parent=5 // pred_region
      %s192 = ssub.s32 %s11, 1
      %p193 = scmp.lt.s32.totalorder %s16, 1
      %s194 = scalar_select %p193, %s16, 1
      %s195 = smul.addr %s194, 3
      %s196 = smul.addr %s195, 4
      %s197 = scalar_lea.vmem %s0, %s196
      %p198 = pneg %p37
      %p199 = pneg %p34
      %p200 = pneg %p58
      %p201 = pneg %p55
      %p202 = pneg %p79
      %p203 = pneg %p76
      %p204 = pneg %p100
      %p205 = pneg %p97
      %p206 = pneg %p121
      %p207 = pneg %p118
      %p208 = pneg %p147
      %p209 = pneg %p144
      %p210 = scmp.lt.s32.totalorder %s16, 1
      %s211 = scalar_select %p210, %s16, 1
      %s212 = smul.addr %s211, 3
      %s213 = smul.addr %s212, 4
      %s214 = scalar_lea.vmem %s5, %s213
      %p215 = scmp.lt.s32.totalorder %s16, 1
      %s216 = scalar_select %p215, %s16, 1
      %s217 = smul.addr %s216, 3
      %s218 = smul.addr %s217, 4
      %s219 = scalar_lea.vmem %s0, %s218
      %p220 = scmp.lt.s32.totalorder %s16, 1
      %s221 = scalar_select %p220, %s16, 1
      %s222 = smul.addr %s221, 3
      %s223 = smul.addr %s222, 4
      %s224 = scalar_lea.vmem %s5, %s223
      %v226 = vld [vmem:[%s219] sm:$0xf]
      %v227 = vld [vmem:[%s219 + $0x4] sm:$0xf]
      %v228 = vld [vmem:[%s219 + $0x8] sm:$0x3]
      %v229 = vld [vmem:[%s1] sm:$0xf]
      %v230 = vld [vmem:[%s1 + $0x4] sm:$0xf]
      %v231 = vld [vmem:[%s1 + $0x8] sm:$0xf]
      %v232 = vld [vmem:[%s1 + $0xc] sm:$0xf]
      %v236 = vunpack.c.l.b16 %v226
      %v237 = vunpack.c.l.b16 %v227
      %v238 = vunpack.c.l.b16 %v228
      %v239 = vpack.c.b16 %v237, %v236
      %v240 = vpack.c.b16 %v238, %v238
      %vm241 = vsmask.f32 7424
      %v243 = vshrl.u32 %v239, 16
      %v245 = vshll.u32 %v239, 16
      %v247 = vrot.slane %v245, 1
      %v248 = vor.u32 %v243, %v247
      %v250 = vshll.u32 %v240, 16
      %v252 = vrot.slane %v250, 1
      %v253 = vsel %vm241, %v248, %v252
      %v254 = vshrl.u32 %v240, 16
      %v256 = vor.u32 %v254, %v252
      %v259 = vunpack.c.l.b16 %v231
      %v260 = vunpack.c.l.b16 %v232
      %v261 = vpack.c.b16 %v260, %v259
      %vm263 = vcmask 130048
      %v265 = vsel %vm263, %v253, 0
      %v268 = vsel %vm263, %v256, 0
      %270 = vmatprep.subr.bf16.mxu0 0
      %271 = vmatpush1.bf16.msra.mxu0 %v261
      %272 = vmatprep.subr.bf16.mxu0 0
      %273 = vmatpush1.bf16.msra.mxu0 0
      %274 = vmatprep.subr.bf16.mxu0 0
      %275 = vmatpush1.bf16.msra.mxu0 0
      %276 = vmatprep.subr.bf16.mxu0 0
      %277 = vmatpush1.bf16.msra.mxu0 0
      %278 = vmatprep.subr.bf16.mxu0 0
      %279 = vmatpush1.bf16.msra.mxu0 0
      %280 = vmatprep.subr.bf16.mxu0 0
      %281 = vmatpush1.bf16.msra.mxu0 0
      %282 = vmatprep.subr.bf16.mxu0 0
      %283 = vmatpush1.bf16.msra.mxu0 0
      %284 = vmatprep.subr.bf16.mxu0 0
      %285 = vmatpush1.bf16.msra.mxu0 0
      %286 = vmatprep.subr.bf16.mxu0 0
      %287 = vmatpush1.bf16.msra.mxu0 0
      %288 = vmatprep.subr.bf16.mxu0 0
      %289 = vmatpush1.bf16.msra.mxu0 0
      %290 = vmatprep.subr.bf16.mxu0 0
      %291 = vmatpush1.bf16.msra.mxu0 0
      %292 = vmatprep.subr.bf16.mxu0 0
      %293 = vmatpush1.bf16.msra.mxu0 0
      %294 = vmatprep.subr.bf16.mxu0 0
      %295 = vmatpush1.bf16.msra.mxu0 0
      %296 = vmatprep.subr.bf16.mxu0 0
      %297 = vmatpush1.bf16.msra.mxu0 0
      %298 = vmatprep.subr.bf16.mxu0 0
      %299 = vmatpush1.bf16.msra.mxu0 0
      %300 = vmatprep.subr.bf16.mxu0 0
      %301 = vmatpush1.bf16.msra.mxu0 0
      %302 = vmatprep.mubr.bf16.mxu0 0
      %303 = vmatmul.mubr.bf16.gmra.mrb[0].mxu0 %v265
      %v304 = vpop.f32.mrb[0].mxu0
      %v305 = vadd.f32 0.0, %v304
      %v306 = vpop.f32.mrb[0].mxu0
      %v307 = vpop.f32.mrb[0].mxu0
      %v308 = vadd.f32 0.0, %v307
      %v309 = vpop.f32.mrb[0].mxu0
      %310 = vmatprep.mubr.bf16.mxu0 0
      %311 = vmatmul.mubr.bf16.gmra.mrb[0].mxu0 %v268
      %v312 = vpop.f32.mrb[0].mxu0
      %v313 = vadd.f32 0.0, %v312
      %v314 = vpop.f32.mrb[0].mxu0
      %v315 = vpop.f32.mrb[0].mxu0
      %v316 = vpop.f32.mrb[0].mxu0
      %317 = vdwg.mxu0
      %v320 = vunpack.c.l.b16 %v229
      %v321 = vunpack.c.l.b16 %v230
      %v322 = vpack.c.b16 %v321, %v320
      %v324 = vsel %vm263, %v239, 0
      %v326 = vsel %vm263, %v240, 0
      %328 = vmatprep.subr.bf16.mxu0 0
      %329 = vmatpush1.bf16.msra.mxu0 %v322
      %330 = vmatprep.subr.bf16.mxu0 0
      %331 = vmatpush1.bf16.msra.mxu0 0
      %332 = vmatprep.subr.bf16.mxu0 0
      %333 = vmatpush1.bf16.msra.mxu0 0
      %334 = vmatprep.subr.bf16.mxu0 0
      %335 = vmatpush1.bf16.msra.mxu0 0
      %336 = vmatprep.subr.bf16.mxu0 0
      %337 = vmatpush1.bf16.msra.mxu0 0
      %338 = vmatprep.subr.bf16.mxu0 0
      %339 = vmatpush1.bf16.msra.mxu0 0
      %340 = vmatprep.subr.bf16.mxu0 0
      %341 = vmatpush1.bf16.msra.mxu0 0
      %342 = vmatprep.subr.bf16.mxu0 0
      %343 = vmatpush1.bf16.msra.mxu0 0
      %344 = vmatprep.subr.bf16.mxu0 0
      %345 = vmatpush1.bf16.msra.mxu0 0
      %346 = vmatprep.subr.bf16.mxu0 0
      %347 = vmatpush1.bf16.msra.mxu0 0
      %348 = vmatprep.subr.bf16.mxu0 0
      %349 = vmatpush1.bf16.msra.mxu0 0
      %350 = vmatprep.subr.bf16.mxu0 0
      %351 = vmatpush1.bf16.msra.mxu0 0
      %352 = vmatprep.subr.bf16.mxu0 0
      %353 = vmatpush1.bf16.msra.mxu0 0
      %354 = vmatprep.subr.bf16.mxu0 0
      %355 = vmatpush1.bf16.msra.mxu0 0
      %356 = vmatprep.subr.bf16.mxu0 0
      %357 = vmatpush1.bf16.msra.mxu0 0
      %358 = vmatprep.subr.bf16.mxu0 0
      %359 = vmatpush1.bf16.msra.mxu0 0
      %360 = vmatprep.mubr.bf16.mxu0 0
      %361 = vmatmul.mubr.bf16.gmra.mrb[0].mxu0 %v324
      %v362 = vpop.f32.mrb[0].mxu0
      %v363 = vadd.f32 %v305, %v362
      %v364 = vpop.f32.mrb[0].mxu0
      %v365 = vpop.f32.mrb[0].mxu0
      %v366 = vadd.f32 %v308, %v365
      %v367 = vpop.f32.mrb[0].mxu0
      %368 = vmatprep.mubr.bf16.mxu0 0
      %369 = vmatmul.mubr.bf16.gmra.mrb[0].mxu0 %v326
      %v370 = vpop.f32.mrb[0].mxu0
      %v371 = vadd.f32 %v313, %v370
      %v372 = vpop.f32.mrb[0].mxu0
      %v373 = vpop.f32.mrb[0].mxu0
      %v374 = vpop.f32.mrb[0].mxu0
      %375 = vdwg.mxu0
      %v376 = vld [vmem:[%s2] sm:$0x1]
      %v378 = vlaneseq
      %v379 = vshrl.u32 %v378, 7
      %v380 = vsub.s32 0, %v379
      %v381 = vrot.slane %v376, %v380
      %v383 = vadd.f32 %v363, %v381
      %v384 = vadd.f32 %v366, %v381
      %v385 = vadd.f32 %v371, %v381
      %v386 = vmax.f32 %v383, 0.0
      %v387 = vmax.f32 %v384, 0.0
      %v388 = vmax.f32 %v385, 0.0
      %v389 = vpack.c.bf16 %v387, %v386
      %v390 = vpack.c.bf16 %v388, %v388
      %v391 = vld [vmem:[%s3] sm:$0xf]
      %v392 = vld [vmem:[%s3 + $0x4] sm:$0xf]
      %v393 = vld [vmem:[%s4] sm:$0x1]
      %v395 = vlaneseq
      %v396 = vshrl.u32 %v395, 7
      %v397 = vsub.s32 0, %v396
      %v398 = vrot.slane %v393, %v397
      %v402 = vunpack.c.l.b16 %v391
      %v403 = vunpack.c.l.b16 %v392
      %v404 = vpack.c.b16 %v403, %v402
      %v407 = vsel %vm263, %v389, 0
      %v410 = vsel %vm263, %v390, 0
      %412 = vmatprep.subr.bf16.mxu0 0
      %413 = vmatpush1.bf16.msra.mxu0 %v404
      %414 = vmatprep.subr.bf16.mxu0 0
      %415 = vmatpush1.bf16.msra.mxu0 0
      %416 = vmatprep.subr.bf16.mxu0 0
      %417 = vmatpush1.bf16.msra.mxu0 0
      %418 = vmatprep.subr.bf16.mxu0 0
      %419 = vmatpush1.bf16.msra.mxu0 0
      %420 = vmatprep.subr.bf16.mxu0 0
      %421 = vmatpush1.bf16.msra.mxu0 0
      %422 = vmatprep.subr.bf16.mxu0 0
      %423 = vmatpush1.bf16.msra.mxu0 0
      %424 = vmatprep.subr.bf16.mxu0 0
      %425 = vmatpush1.bf16.msra.mxu0 0
      %426 = vmatprep.subr.bf16.mxu0 0
      %427 = vmatpush1.bf16.msra.mxu0 0
      %428 = vmatprep.subr.bf16.mxu0 0
      %429 = vmatpush1.bf16.msra.mxu0 0
      %430 = vmatprep.subr.bf16.mxu0 0
      %431 = vmatpush1.bf16.msra.mxu0 0
      %432 = vmatprep.subr.bf16.mxu0 0
      %433 = vmatpush1.bf16.msra.mxu0 0
      %434 = vmatprep.subr.bf16.mxu0 0
      %435 = vmatpush1.bf16.msra.mxu0 0
      %436 = vmatprep.subr.bf16.mxu0 0
      %437 = vmatpush1.bf16.msra.mxu0 0
      %438 = vmatprep.subr.bf16.mxu0 0
      %439 = vmatpush1.bf16.msra.mxu0 0
      %440 = vmatprep.subr.bf16.mxu0 0
      %441 = vmatpush1.bf16.msra.mxu0 0
      %442 = vmatprep.subr.bf16.mxu0 0
      %443 = vmatpush1.bf16.msra.mxu0 0
      %444 = vmatprep.mubr.bf16.mxu0 0
      %445 = vmatmul.mubr.bf16.gmra.mrb[0].mxu0 %v407
      %v446 = vpop.f32.mrb[0].mxu0
      %v447 = vadd.f32 %v398, %v446
      %v448 = vpop.f32.mrb[0].mxu0
      %v449 = vpop.f32.mrb[0].mxu0
      %v450 = vadd.f32 %v398, %v449
      %v451 = vpop.f32.mrb[0].mxu0
      %452 = vmatprep.mubr.bf16.mxu0 0
      %453 = vmatmul.mubr.bf16.gmra.mrb[0].mxu0 %v410
      %v454 = vpop.f32.mrb[0].mxu0
      %v455 = vadd.f32 %v398, %v454
      %v456 = vpop.f32.mrb[0].mxu0
      %v457 = vpop.f32.mrb[0].mxu0
      %v458 = vpop.f32.mrb[0].mxu0
      %459 = vdwg.mxu0
      %v460 = vsub.f32 0.0, %v447
      %v461 = vsub.f32 0.0, %v450
      %v462 = vsub.f32 0.0, %v455
      %v463 = vmul.f32 %v460, 1.442695
      %v464 = vpow.pop %v463
      %v465 = vmul.f32 %v461, 1.442695
      %v466 = vpow.pop %v465
      %v467 = vmul.f32 %v462, 1.442695
      %v468 = vpow.pop %v467
      %v469 = vadd.f32 %v464, 1.0
      %v470 = vadd.f32 %v466, 1.0
      %v471 = vadd.f32 %v468, 1.0
      %v472 = vrcp.pop %v469
      %v473 = vrcp.pop %v470
      %v474 = vrcp.pop %v471
      %478 = vrot.lane.b32.xlu0 %v472, 112
      %v479 = vpop.permute.xlu0 %478
      %480 = vrot.lane.b32.xlu0 %v473, 112
      %v481 = vpop.permute.xlu0 %480
      %482 = vrot.lane.b32.xlu0 %v474, 112
      %v483 = vpop.permute.xlu0 %482
      %v487 = vmul.f32 %v447, %v479
      %v488 = vmul.f32 %v450, %v481
      %v489 = vmul.f32 %v455, %v483
      %v490 = vpack.c.bf16 %v488, %v487
      %v491 = vpack.c.bf16 %v489, %v489
      %v494 = vunpack.c.l.b16 %v490
      %v495 = vunpack.c.h.b16 %v490
      %v496 = vunpack.c.l.b16 %v491
      %v497 = vpack.c.b16 %v494, %v494
      %v498 = vpack.c.b16 %v495, %v495
      %v499 = vpack.c.b16 %v496, %v496
      %vm503 = vcmask 125952
      %504 = vst.msk [vmem:[%s224] sm:$0xf] %vm503, %v497
      %505 = vst.msk [vmem:[%s224 + $0x4] sm:$0xf] %vm503, %v498
      %vm506 = vcmask 122880
      %507 = vst.msk [vmem:[%s224 + $0x8] sm:$0x1] %vm506, %v499
      %p508 = scmp.lt.s32.totalorder %s16, 1
      %s509 = scalar_select %p508, %s16, 1
      %s510 = smul.addr %s509, 3
      %s511 = smul.addr %s510, 4
      %s512 = scalar_lea.vmem %s5, %s511
      // Predicated region
      $region41: #{_lambda_.8} parent=39 // pred_check
        %p513 = pneg %p144
      $region42: #{_lambda_.8} parent=39 // pred_check_branch
        %515 = sbr.rel (%p513) target = $region44
      $region43: #{_lambda_.8} parent=39 // pred_region
        _
      $region44: #{_lambda_.8} parent=39 // pred_fallthru
        _
    $region40: #{_lambda_.8} parent=5 // pred_fallthru
      _
    %p516 = scmp.le.s32.totalorder 2, %s11
    // Predicated region
    $region45: #{_lambda_.8} parent=5 // pred_check
      %p517 = pneg %p516
    $region46: #{_lambda_.8} parent=5 // pred_check_branch
      %519 = sbr.rel (%p517) target = $region48
    $region47: #{_lambda_.8} parent=5 // pred_region
      %s520 = ssub.s32 %s11, 2
      // Predicated region
      $region49: #{_lambda_.8} parent=47 // pred_check
        %p521 = pneg %p150
      $region50: #{_lambda_.8} parent=47 // pred_check_branch
        %523 = sbr.rel (%p521) target = $region52
      $region51: #{_lambda_.8} parent=47 // pred_region
        %p524 = scmp.lt.s32.totalorder %s17, 1
        %s525 = scalar_select %p524, %s17, 1
        %s526 = smul.addr %s525, 3
        %s527 = smul.addr %s526, 4
        %s528 = scalar_lea.vmem %s5, %s527
      $region52: #{_lambda_.8} parent=47 // pred_fallthru
        _
    $region48: #{_lambda_.8} parent=5 // pred_fallthru
      _
  $region6: #{_lambda_.8} parent=0 // loop_footer
    %s15 = sadd.s32 1, %s11
  $region7: #{_lambda_.8} parent=0 // loop_footer_branch
    %10 = sbr.rel target = $region3
  $region8: #{_lambda_.8} parent=0 // loop_exit
    _

// kernel: _lambda_.7
$region0: #{_lambda_.7}
  #allocation0 [shape = 'u32[]', space=smem, size = 0x4, offset = 0x4, fixed_abs, tag = 'smem constant byte address 0x4 - core index']
  #allocation1 [shape = 'u32[144,128]{1,0:T(1,128)}', space=vmem, size = 0x12000, scoped, tag = 'internal scratch']
  %s0 = inlined_call_operand.vmem [shape: bf16[2,39,6], index: 0, kind: input, shape index: {}]
  %s1 = inlined_call_operand.vmem [shape: bf16[12,8], index: 1, kind: input, shape index: {}]
  %s2 = inlined_call_operand.vmem [shape: f32[1,8], index: 2, kind: input, shape index: {}]
  %s3 = inlined_call_operand.vmem [shape: bf16[8,16], index: 3, kind: input, shape index: {}]
  %s4 = inlined_call_operand.vmem [shape: f32[1,16], index: 4, kind: input, shape index: {}]
  %s5 = inlined_call_operand.vmem [shape: bf16[2,38,8], index: 5, kind: output, shape index: {}]
  %s6 = sld [smem:[#allocation0]]
  $region53: #{_lambda_.7} parent=0
    _
  %s8 = ssub.s32 1, %s6
  %s9 = scalar_select 0, %s8, %s6
  loop: start=0, step=1, limit=4
  $region2: #{_lambda_.7} parent=0 // loop_pre_header
    _
  $region3: #{_lambda_.7} parent=0 // loop_header
    %s11 = sphi 0, %s15
    %p12 = scmp.ge.s32.totalorder %s11, 4
    %s21 = sphi 0, %s23
    %s24 = sphi 0, %s21
    %s25 = sphi 0, %s24
    %s41 = sphi 0, %s25
    %s45 = sphi 0, %s45
    %s47 = sphi 0, %s45
    %s48 = sphi 0, %s47
    %s62 = sphi 0, %s48
    %s66 = sphi 0, %s66
    %s68 = sphi 0, %s66
    %s69 = sphi 0, %s68
    %s83 = sphi 0, %s69
    %s87 = sphi 0, %s87
    %s89 = sphi 0, %s87
    %s90 = sphi 0, %s89
    %s104 = sphi 0, %s90
    %s108 = sphi 0, %s108
    %s110 = sphi 0, %s108
    %s111 = sphi 0, %s110
    %s125 = sphi 0, %s111
    %s131 = sphi 0, %s133
    %s134 = sphi 0, %s131
    %s135 = sphi 0, %s134
    %s151 = sphi 0, %s135
  $region4: #{_lambda_.7} parent=0 // loop_header_branch
    %14 = sbr.rel (%p12) target = $region8
  $region5: #{_lambda_.7} parent=0 // loop_body
    %s16 = ssub.s32 %s11, 1
    %s17 = ssub.s32 %s11, 2
    %s18 = sadd.s32 %s11, 1
    %s19 = ssub.s32 %s11, %s18
    %p20 = scmp.eq.s32.totalorder %s19, 0
    %s22 = sadd.s32 %s21, 1
    %s23 = scalar_select %p20, %s21, %s22
    %p26 = pneg %p20
    %p27 = scmp.eq.s32.totalorder %s11, 1
    %p28 = por %p26, %p27
    %p29 = scmp.ne.s32.totalorder %s21, %s24
    %p30 = scmp.eq.s32.totalorder %s11, 0
    %p31 = por %p29, %p30
    %p32 = scmp.ne.s32.totalorder %s21, %s24
    %p33 = scmp.eq.s32.totalorder %s16, 1
    %p34 = por %p32, %p33
    %p35 = scmp.ne.s32.totalorder %s24, %s25
    %p36 = scmp.eq.s32.totalorder %s16, 0
    %p37 = por %p35, %p36
    %p38 = scmp.ne.s32.totalorder %s24, %s25
    %p39 = scmp.eq.s32.totalorder %s17, 1
    %p40 = por %p38, %p39
    %p42 = scmp.ne.s32.totalorder %s25, %s41
    %p43 = scmp.eq.s32.totalorder %s17, 0
    %p44 = por %p42, %p43
    %s46 = sadd.s32 %s45, 1
    %p49 = scmp.eq.s32.totalorder %s11, 1
    %p50 = scmp.ne.s32.totalorder %s45, %s47
    %p51 = scmp.eq.s32.totalorder %s11, 0
    %p52 = por %p50, %p51
    %p53 = scmp.ne.s32.totalorder %s45, %s47
    %p54 = scmp.eq.s32.totalorder %s16, 1
    %p55 = por %p53, %p54
    %p56 = scmp.ne.s32.totalorder %s47, %s48
    %p57 = scmp.eq.s32.totalorder %s16, 0
    %p58 = por %p56, %p57
    %p59 = scmp.ne.s32.totalorder %s47, %s48
    %p60 = scmp.eq.s32.totalorder %s17, 1
    %p61 = por %p59, %p60
    %p63 = scmp.ne.s32.totalorder %s48, %s62
    %p64 = scmp.eq.s32.totalorder %s17, 0
    %p65 = por %p63, %p64
    %s67 = sadd.s32 %s66, 1
    %p70 = scmp.eq.s32.totalorder %s11, 1
    %p71 = scmp.ne.s32.totalorder %s66, %s68
    %p72 = scmp.eq.s32.totalorder %s11, 0
    %p73 = por %p71, %p72
    %p74 = scmp.ne.s32.totalorder %s66, %s68
    %p75 = scmp.eq.s32.totalorder %s16, 1
    %p76 = por %p74, %p75
    %p77 = scmp.ne.s32.totalorder %s68, %s69
    %p78 = scmp.eq.s32.totalorder %s16, 0
    %p79 = por %p77, %p78
    %p80 = scmp.ne.s32.totalorder %s68, %s69
    %p81 = scmp.eq.s32.totalorder %s17, 1
    %p82 = por %p80, %p81
    %p84 = scmp.ne.s32.totalorder %s69, %s83
    %p85 = scmp.eq.s32.totalorder %s17, 0
    %p86 = por %p84, %p85
    %s88 = sadd.s32 %s87, 1
    %p91 = scmp.eq.s32.totalorder %s11, 1
    %p92 = scmp.ne.s32.totalorder %s87, %s89
    %p93 = scmp.eq.s32.totalorder %s11, 0
    %p94 = por %p92, %p93
    %p95 = scmp.ne.s32.totalorder %s87, %s89
    %p96 = scmp.eq.s32.totalorder %s16, 1
    %p97 = por %p95, %p96
    %p98 = scmp.ne.s32.totalorder %s89, %s90
    %p99 = scmp.eq.s32.totalorder %s16, 0
    %p100 = por %p98, %p99
    %p101 = scmp.ne.s32.totalorder %s89, %s90
    %p102 = scmp.eq.s32.totalorder %s17, 1
    %p103 = por %p101, %p102
    %p105 = scmp.ne.s32.totalorder %s90, %s104
    %p106 = scmp.eq.s32.totalorder %s17, 0
    %p107 = por %p105, %p106
    %s109 = sadd.s32 %s108, 1
    %p112 = scmp.eq.s32.totalorder %s11, 1
    %p113 = scmp.ne.s32.totalorder %s108, %s110
    %p114 = scmp.eq.s32.totalorder %s11, 0
    %p115 = por %p113, %p114
    %p116 = scmp.ne.s32.totalorder %s108, %s110
    %p117 = scmp.eq.s32.totalorder %s16, 1
    %p118 = por %p116, %p117
    %p119 = scmp.ne.s32.totalorder %s110, %s111
    %p120 = scmp.eq.s32.totalorder %s16, 0
    %p121 = por %p119, %p120
    %p122 = scmp.ne.s32.totalorder %s110, %s111
    %p123 = scmp.eq.s32.totalorder %s17, 1
    %p124 = por %p122, %p123
    %p126 = scmp.ne.s32.totalorder %s111, %s125
    %p127 = scmp.eq.s32.totalorder %s17, 0
    %p128 = por %p126, %p127
    %s129 = ssub.s32 %s11, %s18
    %p130 = scmp.eq.s32.totalorder %s129, 0
    %s132 = sadd.s32 %s131, 1
    %s133 = scalar_select %p130, %s131, %s132
    %p136 = pneg %p130
    %p137 = scmp.eq.s32.totalorder %s11, 1
    %p138 = por %p136, %p137
    %p139 = scmp.ne.s32.totalorder %s131, %s134
    %p140 = scmp.eq.s32.totalorder %s11, 0
    %p141 = por %p139, %p140
    %p142 = scmp.ne.s32.totalorder %s131, %s134
    %p143 = scmp.eq.s32.totalorder %s16, 1
    %p144 = por %p142, %p143
    %p145 = scmp.ne.s32.totalorder %s134, %s135
    %p146 = scmp.eq.s32.totalorder %s16, 0
    %p147 = por %p145, %p146
    %p148 = scmp.ne.s32.totalorder %s134, %s135
    %p149 = scmp.eq.s32.totalorder %s17, 1
    %p150 = por %p148, %p149
    %p152 = scmp.ne.s32.totalorder %s135, %s151
    %p153 = scmp.eq.s32.totalorder %s17, 0
    %p154 = por %p152, %p153
    %p155 = scmp.le.s32.totalorder 1, %s11
    %p156 = scmp.lt.s32.totalorder %s11, 3
    %p157 = pnand %p155, %p156
    %p158 = pneg %p157
    // Predicated region
    $region9: #{_lambda_.7} parent=5 // pred_check
      _
    $region10: #{_lambda_.7} parent=5 // pred_check_branch
      %160 = sbr.rel (%p157) target = $region12
    $region11: #{_lambda_.7} parent=5 // pred_region
      %s161 = ssub.s32 %s11, 1
      // Predicated region
      $region13: #{_lambda_.7} parent=11 // pred_check
        %p162 = pneg %p58
      $region14: #{_lambda_.7} parent=11 // pred_check_branch
        %164 = sbr.rel (%p162) target = $region16
      $region15: #{_lambda_.7} parent=11 // pred_region
        _
      $region16: #{_lambda_.7} parent=11 // pred_fallthru
        _
      // Predicated region
      $region17: #{_lambda_.7} parent=11 // pred_check
        %p165 = pneg %p79
      $region18: #{_lambda_.7} parent=11 // pred_check_branch
        %167 = sbr.rel (%p165) target = $region20
      $region19: #{_lambda_.7} parent=11 // pred_region
        _
      $region20: #{_lambda_.7} parent=11 // pred_fallthru
        _
      // Predicated region
      $region21: #{_lambda_.7} parent=11 // pred_check
        %p168 = pneg %p100
      $region22: #{_lambda_.7} parent=11 // pred_check_branch
        %170 = sbr.rel (%p168) target = $region24
      $region23: #{_lambda_.7} parent=11 // pred_region
        _
      $region24: #{_lambda_.7} parent=11 // pred_fallthru
        _
      // Predicated region
      $region25: #{_lambda_.7} parent=11 // pred_check
        %p171 = pneg %p121
      $region26: #{_lambda_.7} parent=11 // pred_check_branch
        %173 = sbr.rel (%p171) target = $region28
      $region27: #{_lambda_.7} parent=11 // pred_region
        _
      $region28: #{_lambda_.7} parent=11 // pred_fallthru
        _
    $region12: #{_lambda_.7} parent=5 // pred_fallthru
      _
    %p174 = scmp.lt.s32.totalorder %s11, 2
    // Predicated region
    $region29: #{_lambda_.7} parent=5 // pred_check
      %p175 = pneg %p174
    $region30: #{_lambda_.7} parent=5 // pred_check_branch
      %177 = sbr.rel (%p175) target = $region32
    $region31: #{_lambda_.7} parent=5 // pred_region
      // Predicated region
      $region33: #{_lambda_.7} parent=31 // pred_check
        %p178 = pneg %p31
      $region34: #{_lambda_.7} parent=31 // pred_check_branch
        %180 = sbr.rel (%p178) target = $region36
      $region35: #{_lambda_.7} parent=31 // pred_region
        %p181 = scmp.lt.s32.totalorder %s11, 1
        %s182 = scalar_select %p181, %s11, 1
        %s183 = smul.addr %s182, 5
        %s184 = smul.addr %s183, 4
        %s185 = scalar_lea.vmem %s0, %s184
      $region36: #{_lambda_.7} parent=31 // pred_fallthru
        _
    $region32: #{_lambda_.7} parent=5 // pred_fallthru
      _
    %p186 = scmp.le.s32.totalorder 1, %s11
    %p187 = scmp.lt.s32.totalorder %s11, 3
    %p188 = pnand %p186, %p187
    %p189 = pneg %p188
    // Predicated region
    $region37: #{_lambda_.7} parent=5 // pred_check
      _
    $region38: #{_lambda_.7} parent=5 // pred_check_branch
      %191 = sbr.rel (%p188) target = $region40
    $region39: #{_lambda_.7} parent=5 // pred_region
      %s192 = ssub.s32 %s11, 1
      %p193 = scmp.lt.s32.totalorder %s16, 1
      %s194 = scalar_select %p193, %s16, 1
      %s195 = smul.addr %s194, 5
      %s196 = smul.addr %s195, 4
      %s197 = scalar_lea.vmem %s0, %s196
      %p198 = pneg %p37
      %p199 = pneg %p34
      %p200 = pneg %p58
      %p201 = pneg %p55
      %p202 = pneg %p79
      %p203 = pneg %p76
      %p204 = pneg %p100
      %p205 = pneg %p97
      %p206 = pneg %p121
      %p207 = pneg %p118
      %p208 = pneg %p147
      %p209 = pneg %p144
      %p210 = scmp.lt.s32.totalorder %s16, 1
      %s211 = scalar_select %p210, %s16, 1
      %s212 = smul.addr %s211, 5
      %s213 = smul.addr %s212, 4
      %s214 = scalar_lea.vmem %s5, %s213
      %p215 = scmp.lt.s32.totalorder %s16, 1
      %s216 = scalar_select %p215, %s16, 1
      %s217 = smul.addr %s216, 5
      %s218 = smul.addr %s217, 4
      %s219 = scalar_lea.vmem %s0, %s218
      %p220 = scmp.lt.s32.totalorder %s16, 1
      %s221 = scalar_select %p220, %s16, 1
      %s222 = smul.addr %s221, 5
      %s223 = smul.addr %s222, 4
      %s224 = scalar_lea.vmem %s5, %s223
      %v226 = vld [vmem:[%s219] sm:$0xf]
      %v227 = vld [vmem:[%s219 + $0x4] sm:$0xf]
      %v228 = vld [vmem:[%s219 + $0x8] sm:$0xf]
      %v229 = vld [vmem:[%s219 + $0xc] sm:$0xf]
      %v230 = vld [vmem:[%s219 + $0x10] sm:$0xf]
      %v231 = vld [vmem:[%s1] sm:$0xf]
      %v232 = vld [vmem:[%s1 + $0x4] sm:$0x3]
      %v238 = vunpack.c.l.b16 %v226
      %v239 = vunpack.c.l.b16 %v227
      %v240 = vunpack.c.l.b16 %v228
      %v241 = vunpack.c.l.b16 %v229
      %v242 = vunpack.c.l.b16 %v230
      %v243 = vpack.c.b16 %v239, %v238
      %v244 = vpack.c.b16 %v241, %v240
      %v245 = vpack.c.b16 %v242, %v242
      %vm246 = vsmask.f32 7424
      %v248 = vshrl.u32 %v243, 16
      %v250 = vshll.u32 %v243, 16
      %v252 = vrot.slane %v250, 1
      %v253 = vor.u32 %v248, %v252
      %v255 = vshll.u32 %v244, 16
      %v257 = vrot.slane %v255, 1
      %v258 = vsel %vm246, %v253, %v257
      %v259 = vshrl.u32 %v244, 16
      %v261 = vor.u32 %v259, %v257
      %v263 = vshll.u32 %v245, 16
      %v265 = vrot.slane %v263, 1
      %v266 = vsel %vm246, %v261, %v265
      %v267 = vshrl.u32 %v245, 16
      %v269 = vor.u32 %v267, %v265
      %v272 = vunpack.c.l.b16 %v231
      %v273 = vunpack.c.l.b16 %v232
      %v274 = vpack.c.b16 %v273, %v272
      %v275 = vrot.slane %v274, 3
      %vm276 = vcmask 48128
      %v278 = vsel %vm276, %v258, 0
      %v281 = vsel %vm276, %v266, 0
      %v284 = vsel %vm276, %v269, 0
      %vm286 = vcmask 1042432
      %v288 = vsel %vm286, %v275, 0
      %290 = vmatprep.subr.bf16.mxu0 0
      %291 = vmatpush1.bf16.msra.mxu0 %v288
      %292 = vmatprep.subr.bf16.mxu0 0
      %293 = vmatpush1.bf16.msra.mxu0 0
      %294 = vmatprep.subr.bf16.mxu0 0
      %295 = vmatpush1.bf16.msra.mxu0 0
      %296 = vmatprep.subr.bf16.mxu0 0
      %297 = vmatpush1.bf16.msra.mxu0 0
      %298 = vmatprep.subr.bf16.mxu0 0
      %299 = vmatpush1.bf16.msra.mxu0 0
      %300 = vmatprep.subr.bf16.mxu0 0
      %301 = vmatpush1.bf16.msra.mxu0 0
      %302 = vmatprep.subr.bf16.mxu0 0
      %303 = vmatpush1.bf16.msra.mxu0 0
      %304 = vmatprep.subr.bf16.mxu0 0
      %305 = vmatpush1.bf16.msra.mxu0 0
      %306 = vmatprep.subr.bf16.mxu0 0
      %307 = vmatpush1.bf16.msra.mxu0 0
      %308 = vmatprep.subr.bf16.mxu0 0
      %309 = vmatpush1.bf16.msra.mxu0 0
      %310 = vmatprep.subr.bf16.mxu0 0
      %311 = vmatpush1.bf16.msra.mxu0 0
      %312 = vmatprep.subr.bf16.mxu0 0
      %313 = vmatpush1.bf16.msra.mxu0 0
      %314 = vmatprep.subr.bf16.mxu0 0
      %315 = vmatpush1.bf16.msra.mxu0 0
      %316 = vmatprep.subr.bf16.mxu0 0
      %317 = vmatpush1.bf16.msra.mxu0 0
      %318 = vmatprep.subr.bf16.mxu0 0
      %319 = vmatpush1.bf16.msra.mxu0 0
      %320 = vmatprep.subr.bf16.mxu0 0
      %321 = vmatpush1.bf16.msra.mxu0 0
      %322 = vmatprep.mubr.bf16.mxu0 0
      %323 = vmatmul.mubr.bf16.gmra.mrb[0].mxu0 %v278
      %v324 = vpop.f32.mrb[0].mxu0
      %v325 = vadd.f32 0.0, %v324
      %v326 = vpop.f32.mrb[0].mxu0
      %v327 = vpop.f32.mrb[0].mxu0
      %v328 = vadd.f32 0.0, %v327
      %v329 = vpop.f32.mrb[0].mxu0
      %330 = vmatprep.mubr.bf16.mxu0 0
      %331 = vmatmul.mubr.bf16.gmra.mrb[0].mxu0 %v281
      %v332 = vpop.f32.mrb[0].mxu0
      %v333 = vadd.f32 0.0, %v332
      %v334 = vpop.f32.mrb[0].mxu0
      %v335 = vpop.f32.mrb[0].mxu0
      %v336 = vadd.f32 0.0, %v335
      %v337 = vpop.f32.mrb[0].mxu0
      %338 = vmatprep.mubr.bf16.mxu0 0
      %339 = vmatmul.mubr.bf16.gmra.mrb[0].mxu0 %v284
      %v340 = vpop.f32.mrb[0].mxu0
      %v341 = vadd.f32 0.0, %v340
      %v342 = vpop.f32.mrb[0].mxu0
      %v343 = vpop.f32.mrb[0].mxu0
      %v344 = vpop.f32.mrb[0].mxu0
      %345 = vdwg.mxu0
      %v346 = vsel %vm276, %v243, 0
      %v348 = vsel %vm276, %v244, 0
      %v350 = vsel %vm276, %v245, 0
      %v353 = vsel %vm286, %v231, 0
      %355 = vmatprep.subr.bf16.mxu0 0
      %356 = vmatpush1.bf16.msra.mxu0 %v353
      %357 = vmatprep.subr.bf16.mxu0 0
      %358 = vmatpush1.bf16.msra.mxu0 0
      %359 = vmatprep.subr.bf16.mxu0 0
      %360 = vmatpush1.bf16.msra.mxu0 0
      %361 = vmatprep.subr.bf16.mxu0 0
      %362 = vmatpush1.bf16.msra.mxu0 0
      %363 = vmatprep.subr.bf16.mxu0 0
      %364 = vmatpush1.bf16.msra.mxu0 0
      %365 = vmatprep.subr.bf16.mxu0 0
      %366 = vmatpush1.bf16.msra.mxu0 0
      %367 = vmatprep.subr.bf16.mxu0 0
      %368 = vmatpush1.bf16.msra.mxu0 0
      %369 = vmatprep.subr.bf16.mxu0 0
      %370 = vmatpush1.bf16.msra.mxu0 0
      %371 = vmatprep.subr.bf16.mxu0 0
      %372 = vmatpush1.bf16.msra.mxu0 0
      %373 = vmatprep.subr.bf16.mxu0 0
      %374 = vmatpush1.bf16.msra.mxu0 0
      %375 = vmatprep.subr.bf16.mxu0 0
      %376 = vmatpush1.bf16.msra.mxu0 0
      %377 = vmatprep.subr.bf16.mxu0 0
      %378 = vmatpush1.bf16.msra.mxu0 0
      %379 = vmatprep.subr.bf16.mxu0 0
      %380 = vmatpush1.bf16.msra.mxu0 0
      %381 = vmatprep.subr.bf16.mxu0 0
      %382 = vmatpush1.bf16.msra.mxu0 0
      %383 = vmatprep.subr.bf16.mxu0 0
      %384 = vmatpush1.bf16.msra.mxu0 0
      %385 = vmatprep.subr.bf16.mxu0 0
      %386 = vmatpush1.bf16.msra.mxu0 0
      %387 = vmatprep.mubr.bf16.mxu0 0
      %388 = vmatmul.mubr.bf16.gmra.mrb[0].mxu0 %v346
      %v389 = vpop.f32.mrb[0].mxu0
      %v390 = vadd.f32 %v325, %v389
      %v391 = vpop.f32.mrb[0].mxu0
      %v392 = vpop.f32.mrb[0].mxu0
      %v393 = vadd.f32 %v328, %v392
      %v394 = vpop.f32.mrb[0].mxu0
      %395 = vmatprep.mubr.bf16.mxu0 0
      %396 = vmatmul.mubr.bf16.gmra.mrb[0].mxu0 %v348
      %v397 = vpop.f32.mrb[0].mxu0
      %v398 = vadd.f32 %v333, %v397
      %v399 = vpop.f32.mrb[0].mxu0
      %v400 = vpop.f32.mrb[0].mxu0
      %v401 = vadd.f32 %v336, %v400
      %v402 = vpop.f32.mrb[0].mxu0
      %403 = vmatprep.mubr.bf16.mxu0 0
      %404 = vmatmul.mubr.bf16.gmra.mrb[0].mxu0 %v350
      %v405 = vpop.f32.mrb[0].mxu0
      %v406 = vadd.f32 %v341, %v405
      %v407 = vpop.f32.mrb[0].mxu0
      %v408 = vpop.f32.mrb[0].mxu0
      %v409 = vpop.f32.mrb[0].mxu0
      %410 = vdwg.mxu0
      %v411 = vld [vmem:[%s2] sm:$0x1]
      %v413 = vlaneseq
      %v414 = vshrl.u32 %v413, 7
      %v415 = vsub.s32 0, %v414
      %v416 = vrot.slane %v411, %v415
      %v418 = vadd.f32 %v390, %v416
      %v419 = vadd.f32 %v393, %v416
      %v420 = vadd.f32 %v398, %v416
      %v421 = vadd.f32 %v401, %v416
      %v422 = vadd.f32 %v406, %v416
      %v423 = vmax.f32 %v418, 0.0
      %v424 = vmax.f32 %v419, 0.0
      %v425 = vmax.f32 %v420, 0.0
      %v426 = vmax.f32 %v421, 0.0
      %v427 = vmax.f32 %v422, 0.0
      %v428 = vpack.c.bf16 %v424, %v423
      %v429 = vpack.c.bf16 %v426, %v425
      %v430 = vpack.c.bf16 %v427, %v427
      %v431 = vld [vmem:[%s3] sm:$0xf]
      %v432 = vld [vmem:[%s4] sm:$0x1]
      %v434 = vlaneseq
      %v435 = vshrl.u32 %v434, 7
      %v436 = vsub.s32 0, %v435
      %v437 = vrot.slane %v432, %v436
      %vm439 = vcmask 64512
      %v441 = vsel %vm439, %v428, 0
      %v444 = vsel %vm439, %v429, 0
      %v447 = vsel %vm439, %v430, 0
      %vm449 = vcmask 1043456
      %v451 = vsel %vm449, %v431, 0
      %453 = vmatprep.subr.bf16.mxu0 0
      %454 = vmatpush1.bf16.msra.mxu0 %v451
      %455 = vmatprep.subr.bf16.mxu0 0
      %456 = vmatpush1.bf16.msra.mxu0 0
      %457 = vmatprep.subr.bf16.mxu0 0
      %458 = vmatpush1.bf16.msra.mxu0 0
      %459 = vmatprep.subr.bf16.mxu0 0
      %460 = vmatpush1.bf16.msra.mxu0 0
      %461 = vmatprep.subr.bf16.mxu0 0
      %462 = vmatpush1.bf16.msra.mxu0 0
      %463 = vmatprep.subr.bf16.mxu0 0
      %464 = vmatpush1.bf16.msra.mxu0 0
      %465 = vmatprep.subr.bf16.mxu0 0
      %466 = vmatpush1.bf16.msra.mxu0 0
      %467 = vmatprep.subr.bf16.mxu0 0
      %468 = vmatpush1.bf16.msra.mxu0 0
      %469 = vmatprep.subr.bf16.mxu0 0
      %470 = vmatpush1.bf16.msra.mxu0 0
      %471 = vmatprep.subr.bf16.mxu0 0
      %472 = vmatpush1.bf16.msra.mxu0 0
      %473 = vmatprep.subr.bf16.mxu0 0
      %474 = vmatpush1.bf16.msra.mxu0 0
      %475 = vmatprep.subr.bf16.mxu0 0
      %476 = vmatpush1.bf16.msra.mxu0 0
      %477 = vmatprep.subr.bf16.mxu0 0
      %478 = vmatpush1.bf16.msra.mxu0 0
      %479 = vmatprep.subr.bf16.mxu0 0
      %480 = vmatpush1.bf16.msra.mxu0 0
      %481 = vmatprep.subr.bf16.mxu0 0
      %482 = vmatpush1.bf16.msra.mxu0 0
      %483 = vmatprep.subr.bf16.mxu0 0
      %484 = vmatpush1.bf16.msra.mxu0 0
      %485 = vmatprep.mubr.bf16.mxu0 0
      %486 = vmatmul.mubr.bf16.gmra.mrb[0].mxu0 %v441
      %v487 = vpop.f32.mrb[0].mxu0
      %v488 = vadd.f32 %v437, %v487
      %v489 = vpop.f32.mrb[0].mxu0
      %v490 = vpop.f32.mrb[0].mxu0
      %v491 = vadd.f32 %v437, %v490
      %v492 = vpop.f32.mrb[0].mxu0
      %493 = vmatprep.mubr.bf16.mxu0 0
      %494 = vmatmul.mubr.bf16.gmra.mrb[0].mxu0 %v444
      %v495 = vpop.f32.mrb[0].mxu0
      %v496 = vadd.f32 %v437, %v495
      %v497 = vpop.f32.mrb[0].mxu0
      %v498 = vpop.f32.mrb[0].mxu0
      %v499 = vadd.f32 %v437, %v498
      %v500 = vpop.f32.mrb[0].mxu0
      %501 = vmatprep.mubr.bf16.mxu0 0
      %502 = vmatmul.mubr.bf16.gmra.mrb[0].mxu0 %v447
      %v503 = vpop.f32.mrb[0].mxu0
      %v504 = vadd.f32 %v437, %v503
      %v505 = vpop.f32.mrb[0].mxu0
      %v506 = vpop.f32.mrb[0].mxu0
      %v507 = vpop.f32.mrb[0].mxu0
      %508 = vdwg.mxu0
      %v509 = vsub.f32 0.0, %v488
      %v510 = vsub.f32 0.0, %v491
      %v511 = vsub.f32 0.0, %v496
      %v512 = vsub.f32 0.0, %v499
      %v513 = vsub.f32 0.0, %v504
      %v514 = vmul.f32 %v509, 1.442695
      %v515 = vpow.pop %v514
      %v516 = vmul.f32 %v510, 1.442695
      %v517 = vpow.pop %v516
      %v518 = vmul.f32 %v511, 1.442695
      %v519 = vpow.pop %v518
      %v520 = vmul.f32 %v512, 1.442695
      %v521 = vpow.pop %v520
      %v522 = vmul.f32 %v513, 1.442695
      %v523 = vpow.pop %v522
      %v524 = vadd.f32 %v515, 1.0
      %v525 = vadd.f32 %v517, 1.0
      %v526 = vadd.f32 %v519, 1.0
      %v527 = vadd.f32 %v521, 1.0
      %v528 = vadd.f32 %v523, 1.0
      %v529 = vrcp.pop %v524
      %v530 = vrcp.pop %v525
      %v531 = vrcp.pop %v526
      %v532 = vrcp.pop %v527
      %v533 = vrcp.pop %v528
      %539 = vrot.lane.b32.xlu0 %v529, 120
      %v540 = vpop.permute.xlu0 %539
      %541 = vrot.lane.b32.xlu0 %v530, 120
      %v542 = vpop.permute.xlu0 %541
      %543 = vrot.lane.b32.xlu0 %v531, 120
      %v544 = vpop.permute.xlu0 %543
      %545 = vrot.lane.b32.xlu0 %v532, 120
      %v546 = vpop.permute.xlu0 %545
      %547 = vrot.lane.b32.xlu0 %v533, 120
      %v548 = vpop.permute.xlu0 %547
      %v554 = vmul.f32 %v488, %v540
      %v555 = vmul.f32 %v491, %v542
      %v556 = vmul.f32 %v496, %v544
      %v557 = vmul.f32 %v499, %v546
      %v558 = vmul.f32 %v504, %v548
      %v559 = vpack.c.bf16 %v555, %v554
      %v560 = vpack.c.bf16 %v557, %v556
      %v561 = vpack.c.bf16 %v558, %v558
      %v565 = vunpack.c.l.b16 %v559
      %v566 = vunpack.c.h.b16 %v559
      %v567 = vunpack.c.l.b16 %v560
      %v568 = vunpack.c.h.b16 %v560
      %v569 = vunpack.c.l.b16 %v561
      %v570 = vpack.c.b16 %v565, %v565
      %v571 = vpack.c.b16 %v566, %v566
      %v572 = vpack.c.b16 %v567, %v567
      %v573 = vpack.c.b16 %v568, %v568
      %v574 = vpack.c.b16 %v569, %v569
      %vm580 = vcmask 60416
      %581 = vst.msk [vmem:[%s224] sm:$0xf] %vm580, %v570
      %582 = vst.msk [vmem:[%s224 + $0x4] sm:$0xf] %vm580, %v571
      %583 = vst.msk [vmem:[%s224 + $0x8] sm:$0xf] %vm580, %v572
      %584 = vst.msk [vmem:[%s224 + $0xc] sm:$0xf] %vm580, %v573
      %vm585 = vcmask 59392
      %586 = vst.msk [vmem:[%s224 + $0x10] sm:$0x7] %vm585, %v574
      %p587 = scmp.lt.s32.totalorder %s16, 1
      %s588 = scalar_select %p587, %s16, 1
      %s589 = smul.addr %s588, 5
      %s590 = smul.addr %s589, 4
      %s591 = scalar_lea.vmem %s5, %s590
      // Predicated region
      $region41: #{_lambda_.7} parent=39 // pred_check
        %p592 = pneg %p144
      $region42: #{_lambda_.7} parent=39 // pred_check_branch
        %594 = sbr.rel (%p592) target = $region44
      $region43: #{_lambda_.7} parent=39 // pred_region
        _
      $region44: #{_lambda_.7} parent=39 // pred_fallthru
        _
    $region40: #{_lambda_.7} parent=5 // pred_fallthru
      _
    %p595 = scmp.le.s32.totalorder 2, %s11
    // Predicated region
    $region45: #{_lambda_.7} parent=5 // pred_check
      %p596 = pneg %p595
    $region46: #{_lambda_.7} parent=5 // pred_check_branch
      %598 = sbr.rel (%p596) target = $region48
    $region47: #{_lambda_.7} parent=5 // pred_region
      %s599 = ssub.s32 %s11, 2
      // Predicated region
      $region49: #{_lambda_.7} parent=47 // pred_check
        %p600 = pneg %p150
      $region50: #{_lambda_.7} parent=47 // pred_check_branch
        %602 = sbr.rel (%p600) target = $region52
      $region51: #{_lambda_.7} parent=47 // pred_region
        %p603 = scmp.lt.s32.totalorder %s17, 1
        %s604 = scalar_select %p603, %s17, 1
        %s605 = smul.addr %s604, 5
        %s606 = smul.addr %s605, 4
        %s607 = scalar_lea.vmem %s5, %s606
      $region52: #{_lambda_.7} parent=47 // pred_fallthru
        _
    $region48: #{_lambda_.7} parent=5 // pred_fallthru
      _
  $region6: #{_lambda_.7} parent=0 // loop_footer
    %s15 = sadd.s32 1, %s11
  $region7: #{_lambda_.7} parent=0 // loop_footer_branch
    %10 = sbr.rel target = $region3
  $region8: #{_lambda_.7} parent=0 // loop_exit
    _

// kernel: _lambda_.9
$region0: #{_lambda_.9}
  #allocation0 [shape = 'u32[]', space=smem, size = 0x4, offset = 0x4, fixed_abs, tag = 'smem constant byte address 0x4 - core index']
  #allocation1 [shape = 'u32[144,128]{1,0:T(1,128)}', space=vmem, size = 0x12000, scoped, tag = 'internal scratch']
  %s0 = inlined_call_operand.vmem [shape: bf16[2,9,32], index: 0, kind: input, shape index: {}]
  %s1 = inlined_call_operand.vmem [shape: bf16[64,32], index: 1, kind: input, shape index: {}]
  %s2 = inlined_call_operand.vmem [shape: f32[1,32], index: 2, kind: input, shape index: {}]
  %s3 = inlined_call_operand.vmem [shape: bf16[32,64], index: 3, kind: input, shape index: {}]
  %s4 = inlined_call_operand.vmem [shape: f32[1,64], index: 4, kind: input, shape index: {}]
  %s5 = inlined_call_operand.vmem [shape: bf16[2,8,32], index: 5, kind: output, shape index: {}]
  %s6 = sld [smem:[#allocation0]]
  $region53: #{_lambda_.9} parent=0
    _
  %s8 = ssub.s32 1, %s6
  %s9 = scalar_select 0, %s8, %s6
  loop: start=0, step=1, limit=4
  $region2: #{_lambda_.9} parent=0 // loop_pre_header
    _
  $region3: #{_lambda_.9} parent=0 // loop_header
    %s11 = sphi 0, %s15
    %p12 = scmp.ge.s32.totalorder %s11, 4
    %s21 = sphi 0, %s23
    %s24 = sphi 0, %s21
    %s25 = sphi 0, %s24
    %s41 = sphi 0, %s25
    %s45 = sphi 0, %s45
    %s47 = sphi 0, %s45
    %s48 = sphi 0, %s47
    %s62 = sphi 0, %s48
    %s66 = sphi 0, %s66
    %s68 = sphi 0, %s66
    %s69 = sphi 0, %s68
    %s83 = sphi 0, %s69
    %s87 = sphi 0, %s87
    %s89 = sphi 0, %s87
    %s90 = sphi 0, %s89
    %s104 = sphi 0, %s90
    %s108 = sphi 0, %s108
    %s110 = sphi 0, %s108
    %s111 = sphi 0, %s110
    %s125 = sphi 0, %s111
    %s131 = sphi 0, %s133
    %s134 = sphi 0, %s131
    %s135 = sphi 0, %s134
    %s151 = sphi 0, %s135
  $region4: #{_lambda_.9} parent=0 // loop_header_branch
    %14 = sbr.rel (%p12) target = $region8
  $region5: #{_lambda_.9} parent=0 // loop_body
    %s16 = ssub.s32 %s11, 1
    %s17 = ssub.s32 %s11, 2
    %s18 = sadd.s32 %s11, 1
    %s19 = ssub.s32 %s11, %s18
    %p20 = scmp.eq.s32.totalorder %s19, 0
    %s22 = sadd.s32 %s21, 1
    %s23 = scalar_select %p20, %s21, %s22
    %p26 = pneg %p20
    %p27 = scmp.eq.s32.totalorder %s11, 1
    %p28 = por %p26, %p27
    %p29 = scmp.ne.s32.totalorder %s21, %s24
    %p30 = scmp.eq.s32.totalorder %s11, 0
    %p31 = por %p29, %p30
    %p32 = scmp.ne.s32.totalorder %s21, %s24
    %p33 = scmp.eq.s32.totalorder %s16, 1
    %p34 = por %p32, %p33
    %p35 = scmp.ne.s32.totalorder %s24, %s25
    %p36 = scmp.eq.s32.totalorder %s16, 0
    %p37 = por %p35, %p36
    %p38 = scmp.ne.s32.totalorder %s24, %s25
    %p39 = scmp.eq.s32.totalorder %s17, 1
    %p40 = por %p38, %p39
    %p42 = scmp.ne.s32.totalorder %s25, %s41
    %p43 = scmp.eq.s32.totalorder %s17, 0
    %p44 = por %p42, %p43
    %s46 = sadd.s32 %s45, 1
    %p49 = scmp.eq.s32.totalorder %s11, 1
    %p50 = scmp.ne.s32.totalorder %s45, %s47
    %p51 = scmp.eq.s32.totalorder %s11, 0
    %p52 = por %p50, %p51
    %p53 = scmp.ne.s32.totalorder %s45, %s47
    %p54 = scmp.eq.s32.totalorder %s16, 1
    %p55 = por %p53, %p54
    %p56 = scmp.ne.s32.totalorder %s47, %s48
    %p57 = scmp.eq.s32.totalorder %s16, 0
    %p58 = por %p56, %p57
    %p59 = scmp.ne.s32.totalorder %s47, %s48
    %p60 = scmp.eq.s32.totalorder %s17, 1
    %p61 = por %p59, %p60
    %p63 = scmp.ne.s32.totalorder %s48, %s62
    %p64 = scmp.eq.s32.totalorder %s17, 0
    %p65 = por %p63, %p64
    %s67 = sadd.s32 %s66, 1
    %p70 = scmp.eq.s32.totalorder %s11, 1
    %p71 = scmp.ne.s32.totalorder %s66, %s68
    %p72 = scmp.eq.s32.totalorder %s11, 0
    %p73 = por %p71, %p72
    %p74 = scmp.ne.s32.totalorder %s66, %s68
    %p75 = scmp.eq.s32.totalorder %s16, 1
    %p76 = por %p74, %p75
    %p77 = scmp.ne.s32.totalorder %s68, %s69
    %p78 = scmp.eq.s32.totalorder %s16, 0
    %p79 = por %p77, %p78
    %p80 = scmp.ne.s32.totalorder %s68, %s69
    %p81 = scmp.eq.s32.totalorder %s17, 1
    %p82 = por %p80, %p81
    %p84 = scmp.ne.s32.totalorder %s69, %s83
    %p85 = scmp.eq.s32.totalorder %s17, 0
    %p86 = por %p84, %p85
    %s88 = sadd.s32 %s87, 1
    %p91 = scmp.eq.s32.totalorder %s11, 1
    %p92 = scmp.ne.s32.totalorder %s87, %s89
    %p93 = scmp.eq.s32.totalorder %s11, 0
    %p94 = por %p92, %p93
    %p95 = scmp.ne.s32.totalorder %s87, %s89
    %p96 = scmp.eq.s32.totalorder %s16, 1
    %p97 = por %p95, %p96
    %p98 = scmp.ne.s32.totalorder %s89, %s90
    %p99 = scmp.eq.s32.totalorder %s16, 0
    %p100 = por %p98, %p99
    %p101 = scmp.ne.s32.totalorder %s89, %s90
    %p102 = scmp.eq.s32.totalorder %s17, 1
    %p103 = por %p101, %p102
    %p105 = scmp.ne.s32.totalorder %s90, %s104
    %p106 = scmp.eq.s32.totalorder %s17, 0
    %p107 = por %p105, %p106
    %s109 = sadd.s32 %s108, 1
    %p112 = scmp.eq.s32.totalorder %s11, 1
    %p113 = scmp.ne.s32.totalorder %s108, %s110
    %p114 = scmp.eq.s32.totalorder %s11, 0
    %p115 = por %p113, %p114
    %p116 = scmp.ne.s32.totalorder %s108, %s110
    %p117 = scmp.eq.s32.totalorder %s16, 1
    %p118 = por %p116, %p117
    %p119 = scmp.ne.s32.totalorder %s110, %s111
    %p120 = scmp.eq.s32.totalorder %s16, 0
    %p121 = por %p119, %p120
    %p122 = scmp.ne.s32.totalorder %s110, %s111
    %p123 = scmp.eq.s32.totalorder %s17, 1
    %p124 = por %p122, %p123
    %p126 = scmp.ne.s32.totalorder %s111, %s125
    %p127 = scmp.eq.s32.totalorder %s17, 0
    %p128 = por %p126, %p127
    %s129 = ssub.s32 %s11, %s18
    %p130 = scmp.eq.s32.totalorder %s129, 0
    %s132 = sadd.s32 %s131, 1
    %s133 = scalar_select %p130, %s131, %s132
    %p136 = pneg %p130
    %p137 = scmp.eq.s32.totalorder %s11, 1
    %p138 = por %p136, %p137
    %p139 = scmp.ne.s32.totalorder %s131, %s134
    %p140 = scmp.eq.s32.totalorder %s11, 0
    %p141 = por %p139, %p140
    %p142 = scmp.ne.s32.totalorder %s131, %s134
    %p143 = scmp.eq.s32.totalorder %s16, 1
    %p144 = por %p142, %p143
    %p145 = scmp.ne.s32.totalorder %s134, %s135
    %p146 = scmp.eq.s32.totalorder %s16, 0
    %p147 = por %p145, %p146
    %p148 = scmp.ne.s32.totalorder %s134, %s135
    %p149 = scmp.eq.s32.totalorder %s17, 1
    %p150 = por %p148, %p149
    %p152 = scmp.ne.s32.totalorder %s135, %s151
    %p153 = scmp.eq.s32.totalorder %s17, 0
    %p154 = por %p152, %p153
    %p155 = scmp.le.s32.totalorder 1, %s11
    %p156 = scmp.lt.s32.totalorder %s11, 3
    %p157 = pnand %p155, %p156
    %p158 = pneg %p157
    // Predicated region
    $region9: #{_lambda_.9} parent=5 // pred_check
      _
    $region10: #{_lambda_.9} parent=5 // pred_check_branch
      %160 = sbr.rel (%p157) target = $region12
    $region11: #{_lambda_.9} parent=5 // pred_region
      %s161 = ssub.s32 %s11, 1
      // Predicated region
      $region13: #{_lambda_.9} parent=11 // pred_check
        %p162 = pneg %p58
      $region14: #{_lambda_.9} parent=11 // pred_check_branch
        %164 = sbr.rel (%p162) target = $region16
      $region15: #{_lambda_.9} parent=11 // pred_region
        _
      $region16: #{_lambda_.9} parent=11 // pred_fallthru
        _
      // Predicated region
      $region17: #{_lambda_.9} parent=11 // pred_check
        %p165 = pneg %p79
      $region18: #{_lambda_.9} parent=11 // pred_check_branch
        %167 = sbr.rel (%p165) target = $region20
      $region19: #{_lambda_.9} parent=11 // pred_region
        _
      $region20: #{_lambda_.9} parent=11 // pred_fallthru
        _
      // Predicated region
      $region21: #{_lambda_.9} parent=11 // pred_check
        %p168 = pneg %p100
      $region22: #{_lambda_.9} parent=11 // pred_check_branch
        %170 = sbr.rel (%p168) target = $region24
      $region23: #{_lambda_.9} parent=11 // pred_region
        _
      $region24: #{_lambda_.9} parent=11 // pred_fallthru
        _
      // Predicated region
      $region25: #{_lambda_.9} parent=11 // pred_check
        %p171 = pneg %p121
      $region26: #{_lambda_.9} parent=11 // pred_check_branch
        %173 = sbr.rel (%p171) target = $region28
      $region27: #{_lambda_.9} parent=11 // pred_region
        _
      $region28: #{_lambda_.9} parent=11 // pred_fallthru
        _
    $region12: #{_lambda_.9} parent=5 // pred_fallthru
      _
    %p174 = scmp.lt.s32.totalorder %s11, 2
    // Predicated region
    $region29: #{_lambda_.9} parent=5 // pred_check
      %p175 = pneg %p174
    $region30: #{_lambda_.9} parent=5 // pred_check_branch
      %177 = sbr.rel (%p175) target = $region32
    $region31: #{_lambda_.9} parent=5 // pred_region
      // Predicated region
      $region33: #{_lambda_.9} parent=31 // pred_check
        %p178 = pneg %p31
      $region34: #{_lambda_.9} parent=31 // pred_check_branch
        %180 = sbr.rel (%p178) target = $region36
      $region35: #{_lambda_.9} parent=31 // pred_region
        %p181 = scmp.lt.s32.totalorder %s11, 1
        %s182 = scalar_select %p181, %s11, 1
        %s183 = smul.addr %s182, 2
        %s184 = smul.addr %s183, 4
        %s185 = scalar_lea.vmem %s0, %s184
      $region36: #{_lambda_.9} parent=31 // pred_fallthru
        _
    $region32: #{_lambda_.9} parent=5 // pred_fallthru
      _
    %p186 = scmp.le.s32.totalorder 1, %s11
    %p187 = scmp.lt.s32.totalorder %s11, 3
    %p188 = pnand %p186, %p187
    %p189 = pneg %p188
    // Predicated region
    $region37: #{_lambda_.9} parent=5 // pred_check
      _
    $region38: #{_lambda_.9} parent=5 // pred_check_branch
      %191 = sbr.rel (%p188) target = $region40
    $region39: #{_lambda_.9} parent=5 // pred_region
      %s192 = ssub.s32 %s11, 1
      %p193 = scmp.lt.s32.totalorder %s16, 1
      %s194 = scalar_select %p193, %s16, 1
      %s195 = smul.addr %s194, 2
      %s196 = smul.addr %s195, 4
      %s197 = scalar_lea.vmem %s0, %s196
      %p198 = pneg %p37
      %p199 = pneg %p34
      %p200 = pneg %p58
      %p201 = pneg %p55
      %p202 = pneg %p79
      %p203 = pneg %p76
      %p204 = pneg %p100
      %p205 = pneg %p97
      %p206 = pneg %p121
      %p207 = pneg %p118
      %p208 = pneg %p147
      %p209 = pneg %p144
      %p210 = scmp.lt.s32.totalorder %s16, 1
      %s211 = scalar_select %p210, %s16, 1
      %s212 = smul.addr %s211, 4
      %s213 = scalar_lea.vmem %s5, %s212
      %p214 = scmp.lt.s32.totalorder %s16, 1
      %s215 = scalar_select %p214, %s16, 1
      %s216 = smul.addr %s215, 2
      %s217 = smul.addr %s216, 4
      %s218 = scalar_lea.vmem %s0, %s217
      %p219 = scmp.lt.s32.totalorder %s16, 1
      %s220 = scalar_select %p219, %s16, 1
      %s221 = smul.addr %s220, 4
      %s222 = scalar_lea.vmem %s5, %s221
      %v224 = vld [vmem:[%s218] sm:$0xf]
      %v225 = vld [vmem:[%s218 + $0x4] sm:$0x1]
      %v226 = vld [vmem:[%s1] sm:$0xf]
      %v227 = vld [vmem:[%s1 + $0x4] sm:$0xf]
      %v228 = vld [vmem:[%s1 + $0x8] sm:$0xf]
      %v229 = vld [vmem:[%s1 + $0xc] sm:$0xf]
      %v230 = vld [vmem:[%s1 + $0x10] sm:$0xf]
      %v231 = vld [vmem:[%s1 + $0x14] sm:$0xf]
      %v232 = vld [vmem:[%s1 + $0x18] sm:$0xf]
      %v233 = vld [vmem:[%s1 + $0x1c] sm:$0xf]
      %v236 = vunpack.c.l.b16 %v224
      %v237 = vunpack.c.l.b16 %v225
      %v238 = vpack.c.b16 %v237, %v236
      %v240 = vshrl.u32 %v238, 16
      %v242 = vshll.u32 %v238, 16
      %v244 = vrot.slane %v242, 1
      %v245 = vor.u32 %v240, %v244
      %v250 = vunpack.c.l.b16 %v230
      %v251 = vunpack.c.l.b16 %v231
      %v252 = vunpack.c.l.b16 %v232
      %v253 = vunpack.c.l.b16 %v233
      %v254 = vpack.c.b16 %v251, %v250
      %v255 = vpack.c.b16 %v253, %v252
      %vm258 = vcmask 261120
      %v260 = vsel %vm258, %v245, 0
      %262 = vmatprep.subr.bf16.mxu0 0
      %263 = vmatpush1.bf16.msra.mxu0 %v254
      %264 = vmatprep.subr.bf16.mxu0 0
      %265 = vmatpush1.bf16.msra.mxu0 %v255
      %266 = vmatprep.subr.bf16.mxu0 0
      %267 = vmatpush1.bf16.msra.mxu0 0
      %268 = vmatprep.subr.bf16.mxu0 0
      %269 = vmatpush1.bf16.msra.mxu0 0
      %270 = vmatprep.subr.bf16.mxu0 0
      %271 = vmatpush1.bf16.msra.mxu0 0
      %272 = vmatprep.subr.bf16.mxu0 0
      %273 = vmatpush1.bf16.msra.mxu0 0
      %274 = vmatprep.subr.bf16.mxu0 0
      %275 = vmatpush1.bf16.msra.mxu0 0
      %276 = vmatprep.subr.bf16.mxu0 0
      %277 = vmatpush1.bf16.msra.mxu0 0
      %278 = vmatprep.subr.bf16.mxu0 0
      %279 = vmatpush1.bf16.msra.mxu0 0
      %280 = vmatprep.subr.bf16.mxu0 0
      %281 = vmatpush1.bf16.msra.mxu0 0
      %282 = vmatprep.subr.bf16.mxu0 0
      %283 = vmatpush1.bf16.msra.mxu0 0
      %284 = vmatprep.subr.bf16.mxu0 0
      %285 = vmatpush1.bf16.msra.mxu0 0
      %286 = vmatprep.subr.bf16.mxu0 0
      %287 = vmatpush1.bf16.msra.mxu0 0
      %288 = vmatprep.subr.bf16.mxu0 0
      %289 = vmatpush1.bf16.msra.mxu0 0
      %290 = vmatprep.subr.bf16.mxu0 0
      %291 = vmatpush1.bf16.msra.mxu0 0
      %292 = vmatprep.subr.bf16.mxu0 0
      %293 = vmatpush1.bf16.msra.mxu0 0
      %294 = vmatprep.mubr.bf16.mxu0 0
      %295 = vmatmul.mubr.bf16.gmra.mrb[0].mxu0 %v260
      %v296 = vpop.f32.mrb[0].mxu0
      %v297 = vadd.f32 0.0, %v296
      %v298 = vpop.f32.mrb[0].mxu0
      %v299 = vpop.f32.mrb[0].mxu0
      %v300 = vpop.f32.mrb[0].mxu0
      %301 = vdwg.mxu0
      %v306 = vunpack.c.l.b16 %v226
      %v307 = vunpack.c.l.b16 %v227
      %v308 = vunpack.c.l.b16 %v228
      %v309 = vunpack.c.l.b16 %v229
      %v310 = vpack.c.b16 %v307, %v306
      %v311 = vpack.c.b16 %v309, %v308
      %v315 = vsel %vm258, %v224, 0
      %317 = vmatprep.subr.bf16.mxu0 0
      %318 = vmatpush1.bf16.msra.mxu0 %v310
      %319 = vmatprep.subr.bf16.mxu0 0
      %320 = vmatpush1.bf16.msra.mxu0 %v311
      %321 = vmatprep.subr.bf16.mxu0 0
      %322 = vmatpush1.bf16.msra.mxu0 0
      %323 = vmatprep.subr.bf16.mxu0 0
      %324 = vmatpush1.bf16.msra.mxu0 0
      %325 = vmatprep.subr.bf16.mxu0 0
      %326 = vmatpush1.bf16.msra.mxu0 0
      %327 = vmatprep.subr.bf16.mxu0 0
      %328 = vmatpush1.bf16.msra.mxu0 0
      %329 = vmatprep.subr.bf16.mxu0 0
      %330 = vmatpush1.bf16.msra.mxu0 0
      %331 = vmatprep.subr.bf16.mxu0 0
      %332 = vmatpush1.bf16.msra.mxu0 0
      %333 = vmatprep.subr.bf16.mxu0 0
      %334 = vmatpush1.bf16.msra.mxu0 0
      %335 = vmatprep.subr.bf16.mxu0 0
      %336 = vmatpush1.bf16.msra.mxu0 0
      %337 = vmatprep.subr.bf16.mxu0 0
      %338 = vmatpush1.bf16.msra.mxu0 0
      %339 = vmatprep.subr.bf16.mxu0 0
      %340 = vmatpush1.bf16.msra.mxu0 0
      %341 = vmatprep.subr.bf16.mxu0 0
      %342 = vmatpush1.bf16.msra.mxu0 0
      %343 = vmatprep.subr.bf16.mxu0 0
      %344 = vmatpush1.bf16.msra.mxu0 0
      %345 = vmatprep.subr.bf16.mxu0 0
      %346 = vmatpush1.bf16.msra.mxu0 0
      %347 = vmatprep.subr.bf16.mxu0 0
      %348 = vmatpush1.bf16.msra.mxu0 0
      %349 = vmatprep.mubr.bf16.mxu0 0
      %350 = vmatmul.mubr.bf16.gmra.mrb[0].mxu0 %v315
      %v351 = vpop.f32.mrb[0].mxu0
      %v352 = vadd.f32 %v297, %v351
      %v353 = vpop.f32.mrb[0].mxu0
      %v354 = vpop.f32.mrb[0].mxu0
      %v355 = vpop.f32.mrb[0].mxu0
      %356 = vdwg.mxu0
      %v357 = vld [vmem:[%s2] sm:$0x1]
      %v359 = vlaneseq
      %v360 = vshrl.u32 %v359, 7
      %v361 = vsub.s32 0, %v360
      %v362 = vrot.slane %v357, %v361
      %v364 = vadd.f32 %v352, %v362
      %v365 = vmax.f32 %v364, 0.0
      %v366 = vpack.c.bf16 %v365, %v365
      %v367 = vld [vmem:[%s3] sm:$0xf]
      %v368 = vld [vmem:[%s3 + $0x4] sm:$0xf]
      %v369 = vld [vmem:[%s3 + $0x8] sm:$0xf]
      %v370 = vld [vmem:[%s3 + $0xc] sm:$0xf]
      %v371 = vld [vmem:[%s4] sm:$0x1]
      %v373 = vlaneseq
      %v374 = vshrl.u32 %v373, 7
      %v375 = vsub.s32 0, %v374
      %v376 = vrot.slane %v371, %v375
      %v382 = vunpack.c.l.b16 %v367
      %v383 = vunpack.c.l.b16 %v368
      %v384 = vunpack.c.l.b16 %v369
      %v385 = vunpack.c.l.b16 %v370
      %v386 = vpack.c.b16 %v383, %v382
      %v387 = vpack.c.b16 %v385, %v384
      %v391 = vsel %vm258, %v366, 0
      %393 = vmatprep.subr.bf16.mxu0 0
      %394 = vmatpush1.bf16.msra.mxu0 %v386
      %395 = vmatprep.subr.bf16.mxu0 0
      %396 = vmatpush1.bf16.msra.mxu0 %v387
      %397 = vmatprep.subr.bf16.mxu0 0
      %398 = vmatpush1.bf16.msra.mxu0 0
      %399 = vmatprep.subr.bf16.mxu0 0
      %400 = vmatpush1.bf16.msra.mxu0 0
      %401 = vmatprep.subr.bf16.mxu0 0
      %402 = vmatpush1.bf16.msra.mxu0 0
      %403 = vmatprep.subr.bf16.mxu0 0
      %404 = vmatpush1.bf16.msra.mxu0 0
      %405 = vmatprep.subr.bf16.mxu0 0
      %406 = vmatpush1.bf16.msra.mxu0 0
      %407 = vmatprep.subr.bf16.mxu0 0
      %408 = vmatpush1.bf16.msra.mxu0 0
      %409 = vmatprep.subr.bf16.mxu0 0
      %410 = vmatpush1.bf16.msra.mxu0 0
      %411 = vmatprep.subr.bf16.mxu0 0
      %412 = vmatpush1.bf16.msra.mxu0 0
      %413 = vmatprep.subr.bf16.mxu0 0
      %414 = vmatpush1.bf16.msra.mxu0 0
      %415 = vmatprep.subr.bf16.mxu0 0
      %416 = vmatpush1.bf16.msra.mxu0 0
      %417 = vmatprep.subr.bf16.mxu0 0
      %418 = vmatpush1.bf16.msra.mxu0 0
      %419 = vmatprep.subr.bf16.mxu0 0
      %420 = vmatpush1.bf16.msra.mxu0 0
      %421 = vmatprep.subr.bf16.mxu0 0
      %422 = vmatpush1.bf16.msra.mxu0 0
      %423 = vmatprep.subr.bf16.mxu0 0
      %424 = vmatpush1.bf16.msra.mxu0 0
      %425 = vmatprep.mubr.bf16.mxu0 0
      %426 = vmatmul.mubr.bf16.gmra.mrb[0].mxu0 %v391
      %v427 = vpop.f32.mrb[0].mxu0
      %v428 = vadd.f32 %v376, %v427
      %v429 = vpop.f32.mrb[0].mxu0
      %v430 = vpop.f32.mrb[0].mxu0
      %v431 = vpop.f32.mrb[0].mxu0
      %432 = vdwg.mxu0
      %v433 = vsub.f32 0.0, %v428
      %v434 = vmul.f32 %v433, 1.442695
      %v435 = vpow.pop %v434
      %v436 = vadd.f32 %v435, 1.0
      %v437 = vrcp.pop %v436
      %439 = vrot.lane.b32.xlu0 %v437, 96
      %v440 = vpop.permute.xlu0 %439
      %v442 = vmul.f32 %v428, %v440
      %v443 = vpack.c.bf16 %v442, %v442
      %vm444 = vcmask 257024
      %445 = vst.msk [vmem:[%s222] sm:$0xf] %vm444, %v443
      %p446 = scmp.lt.s32.totalorder %s16, 1
      %s447 = scalar_select %p446, %s16, 1
      %s448 = smul.addr %s447, 4
      %s449 = scalar_lea.vmem %s5, %s448
      // Predicated region
      $region41: #{_lambda_.9} parent=39 // pred_check
        %p450 = pneg %p144
      $region42: #{_lambda_.9} parent=39 // pred_check_branch
        %452 = sbr.rel (%p450) target = $region44
      $region43: #{_lambda_.9} parent=39 // pred_region
        _
      $region44: #{_lambda_.9} parent=39 // pred_fallthru
        _
    $region40: #{_lambda_.9} parent=5 // pred_fallthru
      _
    %p453 = scmp.le.s32.totalorder 2, %s11
    // Predicated region
    $region45: #{_lambda_.9} parent=5 // pred_check
      %p454 = pneg %p453
    $region46: #{_lambda_.9} parent=5 // pred_check_branch
      %456 = sbr.rel (%p454) target = $region48
    $region47: #{_lambda_.9} parent=5 // pred_region
      %s457 = ssub.s32 %s11, 2
      // Predicated region
      $region49: #{_lambda_.9} parent=47 // pred_check
        %p458 = pneg %p150
      $region50: #{_lambda_.9} parent=47 // pred_check_branch
        %460 = sbr.rel (%p458) target = $region52
      $region51: #{_lambda_.9} parent=47 // pred_region
        %p461 = scmp.lt.s32.totalorder %s17, 1
        %s462 = scalar_select %p461, %s17, 1
        %s463 = smul.addr %s462, 4
        %s464 = scalar_lea.vmem %s5, %s463
      $region52: #{_lambda_.9} parent=47 // pred_fallthru
        _
    $region48: #{_lambda_.9} parent=5 // pred_fallthru
      _
  $region6: #{_lambda_.9} parent=0 // loop_footer
    %s15 = sadd.s32 1, %s11
  $region7: #{_lambda_.9} parent=0 // loop_footer_branch
    %10 = sbr.rel target = $region3
  $region8: #{_lambda_.9} parent=0 // loop_exit
    _

// kernel: _lambda_.10
$region0: #{_lambda_.10}
  #allocation0 [shape = 'u32[]', space=smem, size = 0x4, offset = 0x4, fixed_abs, tag = 'smem constant byte address 0x4 - core index']
  #allocation1 [shape = 'u32[144,128]{1,0:T(1,128)}', space=vmem, size = 0x12000, scoped, tag = 'internal scratch']
  %s0 = inlined_call_operand.vmem [shape: bf16[2,8,32], index: 0, kind: input, shape index: {}]
  %s1 = inlined_call_operand.vmem [shape: bf16[32,64], index: 1, kind: input, shape index: {}]
  %s2 = inlined_call_operand.vmem [shape: f32[1,64], index: 2, kind: input, shape index: {}]
  %s3 = inlined_call_operand.vmem [shape: f32[1,64], index: 3, kind: input, shape index: {}]
  %s4 = inlined_call_operand.vmem [shape: f32[1,64], index: 4, kind: input, shape index: {}]
  %s5 = inlined_call_operand.vmem [shape: bf16[64,192], index: 5, kind: input, shape index: {}]
  %s6 = inlined_call_operand.vmem [shape: bf16[64,64], index: 6, kind: input, shape index: {}]
  %s7 = inlined_call_operand.vmem [shape: f32[1,64], index: 7, kind: input, shape index: {}]
  %s8 = inlined_call_operand.vmem [shape: f32[1,64], index: 8, kind: input, shape index: {}]
  %s9 = inlined_call_operand.vmem [shape: bf16[64,128], index: 9, kind: input, shape index: {}]
  %s10 = inlined_call_operand.vmem [shape: f32[1,128], index: 10, kind: input, shape index: {}]
  %s11 = inlined_call_operand.vmem [shape: bf16[128,64], index: 11, kind: input, shape index: {}]
  %s12 = inlined_call_operand.vmem [shape: f32[1,64], index: 12, kind: input, shape index: {}]
  %s13 = inlined_call_operand.vmem [shape: f32[1,64], index: 13, kind: input, shape index: {}]
  %s14 = inlined_call_operand.vmem [shape: f32[1,64], index: 14, kind: input, shape index: {}]
  %s15 = inlined_call_operand.vmem [shape: bf16[2,8,64], index: 15, kind: output, shape index: {}]
  %s16 = sld [smem:[#allocation0]]
  $region93: #{_lambda_.10} parent=0
    _
  %s18 = ssub.s32 1, %s16
  %s19 = scalar_select 0, %s18, %s16
  loop: start=0, step=1, limit=4
  $region2: #{_lambda_.10} parent=0 // loop_pre_header
    _
  $region3: #{_lambda_.10} parent=0 // loop_header
    %s21 = sphi 0, %s25
    %p22 = scmp.ge.s32.totalorder %s21, 4
    %s31 = sphi 0, %s33
    %s34 = sphi 0, %s31
    %s35 = sphi 0, %s34
    %s51 = sphi 0, %s35
    %s55 = sphi 0, %s55
    %s57 = sphi 0, %s55
    %s58 = sphi 0, %s57
    %s72 = sphi 0, %s58
    %s76 = sphi 0, %s76
    %s78 = sphi 0, %s76
    %s79 = sphi 0, %s78
    %s93 = sphi 0, %s79
    %s97 = sphi 0, %s97
    %s99 = sphi 0, %s97
    %s100 = sphi 0, %s99
    %s114 = sphi 0, %s100
    %s118 = sphi 0, %s118
    %s120 = sphi 0, %s118
    %s121 = sphi 0, %s120
    %s135 = sphi 0, %s121
    %s139 = sphi 0, %s139
    %s141 = sphi 0, %s139
    %s142 = sphi 0, %s141
    %s156 = sphi 0, %s142
    %s160 = sphi 0, %s160
    %s162 = sphi 0, %s160
    %s163 = sphi 0, %s162
    %s177 = sphi 0, %s163
    %s181 = sphi 0, %s181
    %s183 = sphi 0, %s181
    %s184 = sphi 0, %s183
    %s198 = sphi 0, %s184
    %s202 = sphi 0, %s202
    %s204 = sphi 0, %s202
    %s205 = sphi 0, %s204
    %s219 = sphi 0, %s205
    %s223 = sphi 0, %s223
    %s225 = sphi 0, %s223
    %s226 = sphi 0, %s225
    %s240 = sphi 0, %s226
    %s244 = sphi 0, %s244
    %s246 = sphi 0, %s244
    %s247 = sphi 0, %s246
    %s261 = sphi 0, %s247
    %s265 = sphi 0, %s265
    %s267 = sphi 0, %s265
    %s268 = sphi 0, %s267
    %s282 = sphi 0, %s268
    %s286 = sphi 0, %s286
    %s288 = sphi 0, %s286
    %s289 = sphi 0, %s288
    %s303 = sphi 0, %s289
    %s307 = sphi 0, %s307
    %s309 = sphi 0, %s307
    %s310 = sphi 0, %s309
    %s324 = sphi 0, %s310
    %s328 = sphi 0, %s328
    %s330 = sphi 0, %s328
    %s331 = sphi 0, %s330
    %s345 = sphi 0, %s331
    %s351 = sphi 0, %s353
    %s354 = sphi 0, %s351
    %s355 = sphi 0, %s354
    %s371 = sphi 0, %s355
  $region4: #{_lambda_.10} parent=0 // loop_header_branch
    %24 = sbr.rel (%p22) target = $region8
  $region5: #{_lambda_.10} parent=0 // loop_body
    %s26 = ssub.s32 %s21, 1
    %s27 = ssub.s32 %s21, 2
    %s28 = sadd.s32 %s21, 1
    %s29 = ssub.s32 %s21, %s28
    %p30 = scmp.eq.s32.totalorder %s29, 0
    %s32 = sadd.s32 %s31, 1
    %s33 = scalar_select %p30, %s31, %s32
    %p36 = pneg %p30
    %p37 = scmp.eq.s32.totalorder %s21, 1
    %p38 = por %p36, %p37
    %p39 = scmp.ne.s32.totalorder %s31, %s34
    %p40 = scmp.eq.s32.totalorder %s21, 0
    %p41 = por %p39, %p40
    %p42 = scmp.ne.s32.totalorder %s31, %s34
    %p43 = scmp.eq.s32.totalorder %s26, 1
    %p44 = por %p42, %p43
    %p45 = scmp.ne.s32.totalorder %s34, %s35
    %p46 = scmp.eq.s32.totalorder %s26, 0
    %p47 = por %p45, %p46
    %p48 = scmp.ne.s32.totalorder %s34, %s35
    %p49 = scmp.eq.s32.totalorder %s27, 1
    %p50 = por %p48, %p49
    %p52 = scmp.ne.s32.totalorder %s35, %s51
    %p53 = scmp.eq.s32.totalorder %s27, 0
    %p54 = por %p52, %p53
    %s56 = sadd.s32 %s55, 1
    %p59 = scmp.eq.s32.totalorder %s21, 1
    %p60 = scmp.ne.s32.totalorder %s55, %s57
    %p61 = scmp.eq.s32.totalorder %s21, 0
    %p62 = por %p60, %p61
    %p63 = scmp.ne.s32.totalorder %s55, %s57
    %p64 = scmp.eq.s32.totalorder %s26, 1
    %p65 = por %p63, %p64
    %p66 = scmp.ne.s32.totalorder %s57, %s58
    %p67 = scmp.eq.s32.totalorder %s26, 0
    %p68 = por %p66, %p67
    %p69 = scmp.ne.s32.totalorder %s57, %s58
    %p70 = scmp.eq.s32.totalorder %s27, 1
    %p71 = por %p69, %p70
    %p73 = scmp.ne.s32.totalorder %s58, %s72
    %p74 = scmp.eq.s32.totalorder %s27, 0
    %p75 = por %p73, %p74
    %s77 = sadd.s32 %s76, 1
    %p80 = scmp.eq.s32.totalorder %s21, 1
    %p81 = scmp.ne.s32.totalorder %s76, %s78
    %p82 = scmp.eq.s32.totalorder %s21, 0
    %p83 = por %p81, %p82
    %p84 = scmp.ne.s32.totalorder %s76, %s78
    %p85 = scmp.eq.s32.totalorder %s26, 1
    %p86 = por %p84, %p85
    %p87 = scmp.ne.s32.totalorder %s78, %s79
    %p88 = scmp.eq.s32.totalorder %s26, 0
    %p89 = por %p87, %p88
    %p90 = scmp.ne.s32.totalorder %s78, %s79
    %p91 = scmp.eq.s32.totalorder %s27, 1
    %p92 = por %p90, %p91
    %p94 = scmp.ne.s32.totalorder %s79, %s93
    %p95 = scmp.eq.s32.totalorder %s27, 0
    %p96 = por %p94, %p95
    %s98 = sadd.s32 %s97, 1
    %p101 = scmp.eq.s32.totalorder %s21, 1
    %p102 = scmp.ne.s32.totalorder %s97, %s99
    %p103 = scmp.eq.s32.totalorder %s21, 0
    %p104 = por %p102, %p103
    %p105 = scmp.ne.s32.totalorder %s97, %s99
    %p106 = scmp.eq.s32.totalorder %s26, 1
    %p107 = por %p105, %p106
    %p108 = scmp.ne.s32.totalorder %s99, %s100
    %p109 = scmp.eq.s32.totalorder %s26, 0
    %p110 = por %p108, %p109
    %p111 = scmp.ne.s32.totalorder %s99, %s100
    %p112 = scmp.eq.s32.totalorder %s27, 1
    %p113 = por %p111, %p112
    %p115 = scmp.ne.s32.totalorder %s100, %s114
    %p116 = scmp.eq.s32.totalorder %s27, 0
    %p117 = por %p115, %p116
    %s119 = sadd.s32 %s118, 1
    %p122 = scmp.eq.s32.totalorder %s21, 1
    %p123 = scmp.ne.s32.totalorder %s118, %s120
    %p124 = scmp.eq.s32.totalorder %s21, 0
    %p125 = por %p123, %p124
    %p126 = scmp.ne.s32.totalorder %s118, %s120
    %p127 = scmp.eq.s32.totalorder %s26, 1
    %p128 = por %p126, %p127
    %p129 = scmp.ne.s32.totalorder %s120, %s121
    %p130 = scmp.eq.s32.totalorder %s26, 0
    %p131 = por %p129, %p130
    %p132 = scmp.ne.s32.totalorder %s120, %s121
    %p133 = scmp.eq.s32.totalorder %s27, 1
    %p134 = por %p132, %p133
    %p136 = scmp.ne.s32.totalorder %s121, %s135
    %p137 = scmp.eq.s32.totalorder %s27, 0
    %p138 = por %p136, %p137
    %s140 = sadd.s32 %s139, 1
    %p143 = scmp.eq.s32.totalorder %s21, 1
    %p144 = scmp.ne.s32.totalorder %s139, %s141
    %p145 = scmp.eq.s32.totalorder %s21, 0
    %p146 = por %p144, %p145
    %p147 = scmp.ne.s32.totalorder %s139, %s141
    %p148 = scmp.eq.s32.totalorder %s26, 1
    %p149 = por %p147, %p148
    %p150 = scmp.ne.s32.totalorder %s141, %s142
    %p151 = scmp.eq.s32.totalorder %s26, 0
    %p152 = por %p150, %p151
    %p153 = scmp.ne.s32.totalorder %s141, %s142
    %p154 = scmp.eq.s32.totalorder %s27, 1
    %p155 = por %p153, %p154
    %p157 = scmp.ne.s32.totalorder %s142, %s156
    %p158 = scmp.eq.s32.totalorder %s27, 0
    %p159 = por %p157, %p158
    %s161 = sadd.s32 %s160, 1
    %p164 = scmp.eq.s32.totalorder %s21, 1
    %p165 = scmp.ne.s32.totalorder %s160, %s162
    %p166 = scmp.eq.s32.totalorder %s21, 0
    %p167 = por %p165, %p166
    %p168 = scmp.ne.s32.totalorder %s160, %s162
    %p169 = scmp.eq.s32.totalorder %s26, 1
    %p170 = por %p168, %p169
    %p171 = scmp.ne.s32.totalorder %s162, %s163
    %p172 = scmp.eq.s32.totalorder %s26, 0
    %p173 = por %p171, %p172
    %p174 = scmp.ne.s32.totalorder %s162, %s163
    %p175 = scmp.eq.s32.totalorder %s27, 1
    %p176 = por %p174, %p175
    %p178 = scmp.ne.s32.totalorder %s163, %s177
    %p179 = scmp.eq.s32.totalorder %s27, 0
    %p180 = por %p178, %p179
    %s182 = sadd.s32 %s181, 1
    %p185 = scmp.eq.s32.totalorder %s21, 1
    %p186 = scmp.ne.s32.totalorder %s181, %s183
    %p187 = scmp.eq.s32.totalorder %s21, 0
    %p188 = por %p186, %p187
    %p189 = scmp.ne.s32.totalorder %s181, %s183
    %p190 = scmp.eq.s32.totalorder %s26, 1
    %p191 = por %p189, %p190
    %p192 = scmp.ne.s32.totalorder %s183, %s184
    %p193 = scmp.eq.s32.totalorder %s26, 0
    %p194 = por %p192, %p193
    %p195 = scmp.ne.s32.totalorder %s183, %s184
    %p196 = scmp.eq.s32.totalorder %s27, 1
    %p197 = por %p195, %p196
    %p199 = scmp.ne.s32.totalorder %s184, %s198
    %p200 = scmp.eq.s32.totalorder %s27, 0
    %p201 = por %p199, %p200
    %s203 = sadd.s32 %s202, 1
    %p206 = scmp.eq.s32.totalorder %s21, 1
    %p207 = scmp.ne.s32.totalorder %s202, %s204
    %p208 = scmp.eq.s32.totalorder %s21, 0
    %p209 = por %p207, %p208
    %p210 = scmp.ne.s32.totalorder %s202, %s204
    %p211 = scmp.eq.s32.totalorder %s26, 1
    %p212 = por %p210, %p211
    %p213 = scmp.ne.s32.totalorder %s204, %s205
    %p214 = scmp.eq.s32.totalorder %s26, 0
    %p215 = por %p213, %p214
    %p216 = scmp.ne.s32.totalorder %s204, %s205
    %p217 = scmp.eq.s32.totalorder %s27, 1
    %p218 = por %p216, %p217
    %p220 = scmp.ne.s32.totalorder %s205, %s219
    %p221 = scmp.eq.s32.totalorder %s27, 0
    %p222 = por %p220, %p221
    %s224 = sadd.s32 %s223, 1
    %p227 = scmp.eq.s32.totalorder %s21, 1
    %p228 = scmp.ne.s32.totalorder %s223, %s225
    %p229 = scmp.eq.s32.totalorder %s21, 0
    %p230 = por %p228, %p229
    %p231 = scmp.ne.s32.totalorder %s223, %s225
    %p232 = scmp.eq.s32.totalorder %s26, 1
    %p233 = por %p231, %p232
    %p234 = scmp.ne.s32.totalorder %s225, %s226
    %p235 = scmp.eq.s32.totalorder %s26, 0
    %p236 = por %p234, %p235
    %p237 = scmp.ne.s32.totalorder %s225, %s226
    %p238 = scmp.eq.s32.totalorder %s27, 1
    %p239 = por %p237, %p238
    %p241 = scmp.ne.s32.totalorder %s226, %s240
    %p242 = scmp.eq.s32.totalorder %s27, 0
    %p243 = por %p241, %p242
    %s245 = sadd.s32 %s244, 1
    %p248 = scmp.eq.s32.totalorder %s21, 1
    %p249 = scmp.ne.s32.totalorder %s244, %s246
    %p250 = scmp.eq.s32.totalorder %s21, 0
    %p251 = por %p249, %p250
    %p252 = scmp.ne.s32.totalorder %s244, %s246
    %p253 = scmp.eq.s32.totalorder %s26, 1
    %p254 = por %p252, %p253
    %p255 = scmp.ne.s32.totalorder %s246, %s247
    %p256 = scmp.eq.s32.totalorder %s26, 0
    %p257 = por %p255, %p256
    %p258 = scmp.ne.s32.totalorder %s246, %s247
    %p259 = scmp.eq.s32.totalorder %s27, 1
    %p260 = por %p258, %p259
    %p262 = scmp.ne.s32.totalorder %s247, %s261
    %p263 = scmp.eq.s32.totalorder %s27, 0
    %p264 = por %p262, %p263
    %s266 = sadd.s32 %s265, 1
    %p269 = scmp.eq.s32.totalorder %s21, 1
    %p270 = scmp.ne.s32.totalorder %s265, %s267
    %p271 = scmp.eq.s32.totalorder %s21, 0
    %p272 = por %p270, %p271
    %p273 = scmp.ne.s32.totalorder %s265, %s267
    %p274 = scmp.eq.s32.totalorder %s26, 1
    %p275 = por %p273, %p274
    %p276 = scmp.ne.s32.totalorder %s267, %s268
    %p277 = scmp.eq.s32.totalorder %s26, 0
    %p278 = por %p276, %p277
    %p279 = scmp.ne.s32.totalorder %s267, %s268
    %p280 = scmp.eq.s32.totalorder %s27, 1
    %p281 = por %p279, %p280
    %p283 = scmp.ne.s32.totalorder %s268, %s282
    %p284 = scmp.eq.s32.totalorder %s27, 0
    %p285 = por %p283, %p284
    %s287 = sadd.s32 %s286, 1
    %p290 = scmp.eq.s32.totalorder %s21, 1
    %p291 = scmp.ne.s32.totalorder %s286, %s288
    %p292 = scmp.eq.s32.totalorder %s21, 0
    %p293 = por %p291, %p292
    %p294 = scmp.ne.s32.totalorder %s286, %s288
    %p295 = scmp.eq.s32.totalorder %s26, 1
    %p296 = por %p294, %p295
    %p297 = scmp.ne.s32.totalorder %s288, %s289
    %p298 = scmp.eq.s32.totalorder %s26, 0
    %p299 = por %p297, %p298
    %p300 = scmp.ne.s32.totalorder %s288, %s289
    %p301 = scmp.eq.s32.totalorder %s27, 1
    %p302 = por %p300, %p301
    %p304 = scmp.ne.s32.totalorder %s289, %s303
    %p305 = scmp.eq.s32.totalorder %s27, 0
    %p306 = por %p304, %p305
    %s308 = sadd.s32 %s307, 1
    %p311 = scmp.eq.s32.totalorder %s21, 1
    %p312 = scmp.ne.s32.totalorder %s307, %s309
    %p313 = scmp.eq.s32.totalorder %s21, 0
    %p314 = por %p312, %p313
    %p315 = scmp.ne.s32.totalorder %s307, %s309
    %p316 = scmp.eq.s32.totalorder %s26, 1
    %p317 = por %p315, %p316
    %p318 = scmp.ne.s32.totalorder %s309, %s310
    %p319 = scmp.eq.s32.totalorder %s26, 0
    %p320 = por %p318, %p319
    %p321 = scmp.ne.s32.totalorder %s309, %s310
    %p322 = scmp.eq.s32.totalorder %s27, 1
    %p323 = por %p321, %p322
    %p325 = scmp.ne.s32.totalorder %s310, %s324
    %p326 = scmp.eq.s32.totalorder %s27, 0
    %p327 = por %p325, %p326
    %s329 = sadd.s32 %s328, 1
    %p332 = scmp.eq.s32.totalorder %s21, 1
    %p333 = scmp.ne.s32.totalorder %s328, %s330
    %p334 = scmp.eq.s32.totalorder %s21, 0
    %p335 = por %p333, %p334
    %p336 = scmp.ne.s32.totalorder %s328, %s330
    %p337 = scmp.eq.s32.totalorder %s26, 1
    %p338 = por %p336, %p337
    %p339 = scmp.ne.s32.totalorder %s330, %s331
    %p340 = scmp.eq.s32.totalorder %s26, 0
    %p341 = por %p339, %p340
    %p342 = scmp.ne.s32.totalorder %s330, %s331
    %p343 = scmp.eq.s32.totalorder %s27, 1
    %p344 = por %p342, %p343
    %p346 = scmp.ne.s32.totalorder %s331, %s345
    %p347 = scmp.eq.s32.totalorder %s27, 0
    %p348 = por %p346, %p347
    %s349 = ssub.s32 %s21, %s28
    %p350 = scmp.eq.s32.totalorder %s349, 0
    %s352 = sadd.s32 %s351, 1
    %s353 = scalar_select %p350, %s351, %s352
    %p356 = pneg %p350
    %p357 = scmp.eq.s32.totalorder %s21, 1
    %p358 = por %p356, %p357
    %p359 = scmp.ne.s32.totalorder %s351, %s354
    %p360 = scmp.eq.s32.totalorder %s21, 0
    %p361 = por %p359, %p360
    %p362 = scmp.ne.s32.totalorder %s351, %s354
    %p363 = scmp.eq.s32.totalorder %s26, 1
    %p364 = por %p362, %p363
    %p365 = scmp.ne.s32.totalorder %s354, %s355
    %p366 = scmp.eq.s32.totalorder %s26, 0
    %p367 = por %p365, %p366
    %p368 = scmp.ne.s32.totalorder %s354, %s355
    %p369 = scmp.eq.s32.totalorder %s27, 1
    %p370 = por %p368, %p369
    %p372 = scmp.ne.s32.totalorder %s355, %s371
    %p373 = scmp.eq.s32.totalorder %s27, 0
    %p374 = por %p372, %p373
    %p375 = scmp.le.s32.totalorder 1, %s21
    %p376 = scmp.lt.s32.totalorder %s21, 3
    %p377 = pnand %p375, %p376
    %p378 = pneg %p377
    // Predicated region
    $region9: #{_lambda_.10} parent=5 // pred_check
      _
    $region10: #{_lambda_.10} parent=5 // pred_check_branch
      %380 = sbr.rel (%p377) target = $region12
    $region11: #{_lambda_.10} parent=5 // pred_region
      %s381 = ssub.s32 %s21, 1
      // Predicated region
      $region13: #{_lambda_.10} parent=11 // pred_check
        %p382 = pneg %p68
      $region14: #{_lambda_.10} parent=11 // pred_check_branch
        %384 = sbr.rel (%p382) target = $region16
      $region15: #{_lambda_.10} parent=11 // pred_region
        _
      $region16: #{_lambda_.10} parent=11 // pred_fallthru
        _
      // Predicated region
      $region17: #{_lambda_.10} parent=11 // pred_check
        %p385 = pneg %p89
      $region18: #{_lambda_.10} parent=11 // pred_check_branch
        %387 = sbr.rel (%p385) target = $region20
      $region19: #{_lambda_.10} parent=11 // pred_region
        _
      $region20: #{_lambda_.10} parent=11 // pred_fallthru
        _
      // Predicated region
      $region21: #{_lambda_.10} parent=11 // pred_check
        %p388 = pneg %p110
      $region22: #{_lambda_.10} parent=11 // pred_check_branch
        %390 = sbr.rel (%p388) target = $region24
      $region23: #{_lambda_.10} parent=11 // pred_region
        _
      $region24: #{_lambda_.10} parent=11 // pred_fallthru
        _
      // Predicated region
      $region25: #{_lambda_.10} parent=11 // pred_check
        %p391 = pneg %p131
      $region26: #{_lambda_.10} parent=11 // pred_check_branch
        %393 = sbr.rel (%p391) target = $region28
      $region27: #{_lambda_.10} parent=11 // pred_region
        _
      $region28: #{_lambda_.10} parent=11 // pred_fallthru
        _
      // Predicated region
      $region29: #{_lambda_.10} parent=11 // pred_check
        %p394 = pneg %p152
      $region30: #{_lambda_.10} parent=11 // pred_check_branch
        %396 = sbr.rel (%p394) target = $region32
      $region31: #{_lambda_.10} parent=11 // pred_region
        _
      $region32: #{_lambda_.10} parent=11 // pred_fallthru
        _
      // Predicated region
      $region33: #{_lambda_.10} parent=11 // pred_check
        %p397 = pneg %p173
      $region34: #{_lambda_.10} parent=11 // pred_check_branch
        %399 = sbr.rel (%p397) target = $region36
      $region35: #{_lambda_.10} parent=11 // pred_region
        _
      $region36: #{_lambda_.10} parent=11 // pred_fallthru
        _
      // Predicated region
      $region37: #{_lambda_.10} parent=11 // pred_check
        %p400 = pneg %p194
      $region38: #{_lambda_.10} parent=11 // pred_check_branch
        %402 = sbr.rel (%p400) target = $region40
      $region39: #{_lambda_.10} parent=11 // pred_region
        _
      $region40: #{_lambda_.10} parent=11 // pred_fallthru
        _
      // Predicated region
      $region41: #{_lambda_.10} parent=11 // pred_check
        %p403 = pneg %p215
      $region42: #{_lambda_.10} parent=11 // pred_check_branch
        %405 = sbr.rel (%p403) target = $region44
      $region43: #{_lambda_.10} parent=11 // pred_region
        _
      $region44: #{_lambda_.10} parent=11 // pred_fallthru
        _
      // Predicated region
      $region45: #{_lambda_.10} parent=11 // pred_check
        %p406 = pneg %p236
      $region46: #{_lambda_.10} parent=11 // pred_check_branch
        %408 = sbr.rel (%p406) target = $region48
      $region47: #{_lambda_.10} parent=11 // pred_region
        _
      $region48: #{_lambda_.10} parent=11 // pred_fallthru
        _
      // Predicated region
      $region49: #{_lambda_.10} parent=11 // pred_check
        %p409 = pneg %p257
      $region50: #{_lambda_.10} parent=11 // pred_check_branch
        %411 = sbr.rel (%p409) target = $region52
      $region51: #{_lambda_.10} parent=11 // pred_region
        _
      $region52: #{_lambda_.10} parent=11 // pred_fallthru
        _
      // Predicated region
      $region53: #{_lambda_.10} parent=11 // pred_check
        %p412 = pneg %p278
      $region54: #{_lambda_.10} parent=11 // pred_check_branch
        %414 = sbr.rel (%p412) target = $region56
      $region55: #{_lambda_.10} parent=11 // pred_region
        _
      $region56: #{_lambda_.10} parent=11 // pred_fallthru
        _
      // Predicated region
      $region57: #{_lambda_.10} parent=11 // pred_check
        %p415 = pneg %p299
      $region58: #{_lambda_.10} parent=11 // pred_check_branch
        %417 = sbr.rel (%p415) target = $region60
      $region59: #{_lambda_.10} parent=11 // pred_region
        _
      $region60: #{_lambda_.10} parent=11 // pred_fallthru
        _
      // Predicated region
      $region61: #{_lambda_.10} parent=11 // pred_check
        %p418 = pneg %p320
      $region62: #{_lambda_.10} parent=11 // pred_check_branch
        %420 = sbr.rel (%p418) target = $region64
      $region63: #{_lambda_.10} parent=11 // pred_region
        _
      $region64: #{_lambda_.10} parent=11 // pred_fallthru
        _
      // Predicated region
      $region65: #{_lambda_.10} parent=11 // pred_check
        %p421 = pneg %p341
      $region66: #{_lambda_.10} parent=11 // pred_check_branch
        %423 = sbr.rel (%p421) target = $region68
      $region67: #{_lambda_.10} parent=11 // pred_region
        _
      $region68: #{_lambda_.10} parent=11 // pred_fallthru
        _
    $region12: #{_lambda_.10} parent=5 // pred_fallthru
      _
    %p424 = scmp.lt.s32.totalorder %s21, 2
    // Predicated region
    $region69: #{_lambda_.10} parent=5 // pred_check
      %p425 = pneg %p424
    $region70: #{_lambda_.10} parent=5 // pred_check_branch
      %427 = sbr.rel (%p425) target = $region72
    $region71: #{_lambda_.10} parent=5 // pred_region
      // Predicated region
      $region73: #{_lambda_.10} parent=71 // pred_check
        %p428 = pneg %p41
      $region74: #{_lambda_.10} parent=71 // pred_check_branch
        %430 = sbr.rel (%p428) target = $region76
      $region75: #{_lambda_.10} parent=71 // pred_region
        %p431 = scmp.lt.s32.totalorder %s21, 1
        %s432 = scalar_select %p431, %s21, 1
        %s433 = smul.addr %s432, 4
        %s434 = scalar_lea.vmem %s0, %s433
      $region76: #{_lambda_.10} parent=71 // pred_fallthru
        _
    $region72: #{_lambda_.10} parent=5 // pred_fallthru
      _
    %p435 = scmp.le.s32.totalorder 1, %s21
    %p436 = scmp.lt.s32.totalorder %s21, 3
    %p437 = pnand %p435, %p436
    %p438 = pneg %p437
    // Predicated region
    $region77: #{_lambda_.10} parent=5 // pred_check
      _
    $region78: #{_lambda_.10} parent=5 // pred_check_branch
      %440 = sbr.rel (%p437) target = $region80
    $region79: #{_lambda_.10} parent=5 // pred_region
      %s441 = ssub.s32 %s21, 1
      %p442 = scmp.lt.s32.totalorder %s26, 1
      %s443 = scalar_select %p442, %s26, 1
      %s444 = smul.addr %s443, 4
      %s445 = scalar_lea.vmem %s0, %s444
      %p446 = pneg %p47
      %p447 = pneg %p44
      %p448 = pneg %p68
      %p449 = pneg %p65
      %p450 = pneg %p89
      %p451 = pneg %p86
      %p452 = pneg %p110
      %p453 = pneg %p107
      %p454 = pneg %p131
      %p455 = pneg %p128
      %p456 = pneg %p152
      %p457 = pneg %p149
      %p458 = pneg %p173
      %p459 = pneg %p170
      %p460 = pneg %p194
      %p461 = pneg %p191
      %p462 = pneg %p215
      %p463 = pneg %p212
      %p464 = pneg %p236
      %p465 = pneg %p233
      %p466 = pneg %p257
      %p467 = pneg %p254
      %p468 = pneg %p278
      %p469 = pneg %p275
      %p470 = pneg %p299
      %p471 = pneg %p296
      %p472 = pneg %p320
      %p473 = pneg %p317
      %p474 = pneg %p341
      %p475 = pneg %p338
      %p476 = pneg %p367
      %p477 = pneg %p364
      %p478 = scmp.lt.s32.totalorder %s26, 1
      %s479 = scalar_select %p478, %s26, 1
      %s480 = smul.addr %s479, 4
      %s481 = scalar_lea.vmem %s15, %s480
      %p482 = scmp.lt.s32.totalorder %s26, 1
      %s483 = scalar_select %p482, %s26, 1
      %s484 = smul.addr %s483, 4
      %s485 = scalar_lea.vmem %s0, %s484
      %p486 = scmp.lt.s32.totalorder %s26, 1
      %s487 = scalar_select %p486, %s26, 1
      %s488 = smul.addr %s487, 4
      %s489 = scalar_lea.vmem %s15, %s488
      %v491 = vld [vmem:[%s485] sm:$0xf]
      %v492 = vld [vmem:[%s1] sm:$0xf]
      %v493 = vld [vmem:[%s1 + $0x4] sm:$0xf]
      %v494 = vld [vmem:[%s1 + $0x8] sm:$0xf]
      %v495 = vld [vmem:[%s1 + $0xc] sm:$0xf]
      %v496 = vld [vmem:[%s2] sm:$0x1]
      %v498 = vlaneseq
      %v499 = vshrl.u32 %v498, 7
      %v500 = vsub.s32 0, %v499
      %v501 = vrot.slane %v496, %v500
      %v507 = vunpack.c.l.b16 %v492
      %v508 = vunpack.c.l.b16 %v493
      %v509 = vunpack.c.l.b16 %v494
      %v510 = vunpack.c.l.b16 %v495
      %v511 = vpack.c.b16 %v508, %v507
      %v512 = vpack.c.b16 %v510, %v509
      %vm515 = vcmask 261120
      %v517 = vsel %vm515, %v491, 0
      %519 = vmatprep.subr.bf16.mxu0 0
      %520 = vmatpush1.bf16.msra.mxu0 %v511
      %521 = vmatprep.subr.bf16.mxu0 0
      %522 = vmatpush1.bf16.msra.mxu0 %v512
      %523 = vmatprep.subr.bf16.mxu0 0
      %524 = vmatpush1.bf16.msra.mxu0 0
      %525 = vmatprep.subr.bf16.mxu0 0
      %526 = vmatpush1.bf16.msra.mxu0 0
      %527 = vmatprep.subr.bf16.mxu0 0
      %528 = vmatpush1.bf16.msra.mxu0 0
      %529 = vmatprep.subr.bf16.mxu0 0
      %530 = vmatpush1.bf16.msra.mxu0 0
      %531 = vmatprep.subr.bf16.mxu0 0
      %532 = vmatpush1.bf16.msra.mxu0 0
      %533 = vmatprep.subr.bf16.mxu0 0
      %534 = vmatpush1.bf16.msra.mxu0 0
      %535 = vmatprep.subr.bf16.mxu0 0
      %536 = vmatpush1.bf16.msra.mxu0 0
      %537 = vmatprep.subr.bf16.mxu0 0
      %538 = vmatpush1.bf16.msra.mxu0 0
      %539 = vmatprep.subr.bf16.mxu0 0
      %540 = vmatpush1.bf16.msra.mxu0 0
      %541 = vmatprep.subr.bf16.mxu0 0
      %542 = vmatpush1.bf16.msra.mxu0 0
      %543 = vmatprep.subr.bf16.mxu0 0
      %544 = vmatpush1.bf16.msra.mxu0 0
      %545 = vmatprep.subr.bf16.mxu0 0
      %546 = vmatpush1.bf16.msra.mxu0 0
      %547 = vmatprep.subr.bf16.mxu0 0
      %548 = vmatpush1.bf16.msra.mxu0 0
      %549 = vmatprep.subr.bf16.mxu0 0
      %550 = vmatpush1.bf16.msra.mxu0 0
      %551 = vmatprep.mubr.bf16.mxu0 0
      %552 = vmatmul.mubr.bf16.gmra.mrb[0].mxu0 %v517
      %v553 = vpop.f32.mrb[0].mxu0
      %v554 = vadd.f32 %v501, %v553
      %v555 = vpop.f32.mrb[0].mxu0
      %v556 = vpop.f32.mrb[0].mxu0
      %v557 = vpop.f32.mrb[0].mxu0
      %558 = vdwg.mxu0
      %v559 = vld [vmem:[%s3] sm:$0x1]
      %v560 = vld [vmem:[%s4] sm:$0x1]
      %vm561 = vcmask 523264
      %v562 = vsel %vm561, %v554, 0.0
      %563 = vadd.xlane.f32.xlu0 %v562
      %v564 = vpop.xlane.xlu0 %563
      %v565 = vrcp.pop 64.0
      %v566 = vmul.f32 %v564, %v565
      %v567 = vsub.f32 %v554, %v566
      %v568 = vmul.f32 %v567, %v567
      %v569 = vsel %vm561, %v568, 0.0
      %570 = vadd.xlane.f32.xlu0 %v569
      %v571 = vpop.xlane.xlu0 %570
      %v572 = vmul.f32 %v571, %v565
      %v573 = vadd.f32 %v572, 1e-06
      %v574 = vrsqrt.pop %v573
      %v575 = vmul.f32 %v567, %v574
      %v577 = vlaneseq
      %v578 = vshrl.u32 %v577, 7
      %v579 = vsub.s32 0, %v578
      %v580 = vrot.slane %v559, %v579
      %v582 = vmul.f32 %v575, %v580
      %v584 = vlaneseq
      %v585 = vshrl.u32 %v584, 7
      %v586 = vsub.s32 0, %v585
      %v587 = vrot.slane %v560, %v586
      %v589 = vadd.f32 %v582, %v587
      %v590 = vpack.c.bf16 %v589, %v589
      %v591 = vld [vmem:[%s5] sm:$0xff]
      %v592 = vld [vmem:[%s5 + $0x8] sm:$0xff]
      %v593 = vld [vmem:[%s5 + $0x10] sm:$0xff]
      %v594 = vld [vmem:[%s5 + $0x18] sm:$0xff]
      %v595 = vld [vmem:[%s5 + $0x20] sm:$0xff]
      %v596 = vld [vmem:[%s5 + $0x28] sm:$0xff]
      %v597 = vld [vmem:[%s5 + $0x30] sm:$0xff]
      %v598 = vld [vmem:[%s5 + $0x38] sm:$0xff]
      %v607 = vunpack.c.l.b16 %v591
      %v608 = vunpack.c.h.b16 %v591
      %v609 = vunpack.c.l.b16 %v592
      %v610 = vunpack.c.h.b16 %v592
      %v611 = vunpack.c.l.b16 %v593
      %v612 = vunpack.c.h.b16 %v593
      %v613 = vunpack.c.l.b16 %v594
      %v614 = vunpack.c.h.b16 %v594
      %v615 = vunpack.c.l.b16 %v595
      %v616 = vunpack.c.h.b16 %v595
      %v617 = vunpack.c.l.b16 %v596
      %v618 = vunpack.c.h.b16 %v596
      %v619 = vunpack.c.l.b16 %v597
      %v620 = vunpack.c.h.b16 %v597
      %v621 = vunpack.c.l.b16 %v598
      %v622 = vunpack.c.h.b16 %v598
      %v623 = vpack.c.b16 %v609, %v607
      %v624 = vpack.c.b16 %v610, %v608
      %v625 = vpack.c.b16 %v613, %v611
      %v626 = vpack.c.b16 %v614, %v612
      %v627 = vpack.c.b16 %v617, %v615
      %v628 = vpack.c.b16 %v618, %v616
      %v629 = vpack.c.b16 %v621, %v619
      %v630 = vpack.c.b16 %v622, %v620
      %v640 = vsel %vm561, %v590, 0
      %642 = vmatprep.subr.bf16.mxu0 %v624
      %643 = vmatpush1.bf16.msra.mxu0 %v623
      %644 = vmatprep.subr.bf16.mxu0 %v626
      %645 = vmatpush1.bf16.msra.mxu0 %v625
      %646 = vmatprep.subr.bf16.mxu0 %v628
      %647 = vmatpush1.bf16.msra.mxu0 %v627
      %648 = vmatprep.subr.bf16.mxu0 %v630
      %649 = vmatpush1.bf16.msra.mxu0 %v629
      %650 = vmatprep.subr.bf16.mxu0 0
      %651 = vmatpush1.bf16.msra.mxu0 0
      %652 = vmatprep.subr.bf16.mxu0 0
      %653 = vmatpush1.bf16.msra.mxu0 0
      %654 = vmatprep.subr.bf16.mxu0 0
      %655 = vmatpush1.bf16.msra.mxu0 0
      %656 = vmatprep.subr.bf16.mxu0 0
      %657 = vmatpush1.bf16.msra.mxu0 0
      %658 = vmatprep.subr.bf16.mxu0 0
      %659 = vmatpush1.bf16.msra.mxu0 0
      %660 = vmatprep.subr.bf16.mxu0 0
      %661 = vmatpush1.bf16.msra.mxu0 0
      %662 = vmatprep.subr.bf16.mxu0 0
      %663 = vmatpush1.bf16.msra.mxu0 0
      %664 = vmatprep.subr.bf16.mxu0 0
      %665 = vmatpush1.bf16.msra.mxu0 0
      %666 = vmatprep.subr.bf16.mxu0 0
      %667 = vmatpush1.bf16.msra.mxu0 0
      %668 = vmatprep.subr.bf16.mxu0 0
      %669 = vmatpush1.bf16.msra.mxu0 0
      %670 = vmatprep.subr.bf16.mxu0 0
      %671 = vmatpush1.bf16.msra.mxu0 0
      %672 = vmatprep.subr.bf16.mxu0 0
      %673 = vmatpush1.bf16.msra.mxu0 0
      %674 = vmatprep.mubr.bf16.mxu0 0
      %675 = vmatmul.mubr.bf16.gmra.mrb[0].mxu0 %v640
      %v676 = vpop.f32.mrb[0].mxu0
      %v677 = vadd.f32 0.0, %v676
      %v678 = vpop.f32.mrb[0].mxu0
      %v679 = vadd.f32 0.0, %v678
      %v680 = vpop.f32.mrb[0].mxu0
      %v681 = vpop.f32.mrb[0].mxu0
      %682 = vdwg.mxu0
      %v683 = vpack.c.bf16 %v677, %v677
      %685 = vrot.lane.b32.xlu0 %v683, 64
      %v686 = vpop.permute.xlu0 %685
      %vm687 = vcmask 130048
      %v689 = vsel %vm687, %v683, 0
      %v692 = vsel %vm687, %v686, 0
      %694 = vmatprep.subr.bf16.mxu0 0
      %695 = vmatpush1.bf16.xpose.msra.mxu0 %v692
      %696 = vmatprep.subr.bf16.mxu0 0
      %697 = vmatpush1.bf16.xpose.msra.mxu0 0
      %698 = vmatprep.subr.bf16.mxu0 0
      %699 = vmatpush1.bf16.xpose.msra.mxu0 0
      %700 = vmatprep.subr.bf16.mxu0 0
      %701 = vmatpush1.bf16.xpose.msra.mxu0 0
      %702 = vmatprep.subr.bf16.mxu0 0
      %703 = vmatpush1.bf16.xpose.msra.mxu0 0
      %704 = vmatprep.subr.bf16.mxu0 0
      %705 = vmatpush1.bf16.xpose.msra.mxu0 0
      %706 = vmatprep.subr.bf16.mxu0 0
      %707 = vmatpush1.bf16.xpose.msra.mxu0 0
      %708 = vmatprep.subr.bf16.mxu0 0
      %709 = vmatpush1.bf16.xpose.msra.mxu0 0
      %710 = vmatprep.subr.bf16.mxu0 0
      %711 = vmatpush1.bf16.xpose.msra.mxu0 0
      %712 = vmatprep.subr.bf16.mxu0 0
      %713 = vmatpush1.bf16.xpose.msra.mxu0 0
      %714 = vmatprep.subr.bf16.mxu0 0
      %715 = vmatpush1.bf16.xpose.msra.mxu0 0
      %716 = vmatprep.subr.bf16.mxu0 0
      %717 = vmatpush1.bf16.xpose.msra.mxu0 0
      %718 = vmatprep.subr.bf16.mxu0 0
      %719 = vmatpush1.bf16.xpose.msra.mxu0 0
      %720 = vmatprep.subr.bf16.mxu0 0
      %721 = vmatpush1.bf16.xpose.msra.mxu0 0
      %722 = vmatprep.subr.bf16.mxu0 0
      %723 = vmatpush1.bf16.xpose.msra.mxu0 0
      %724 = vmatprep.subr.bf16.mxu0 0
      %725 = vmatpush1.bf16.xpose.msra.mxu0 0
      %726 = vmatprep.mubr.bf16.mxu0 0
      %727 = vmatmul.mubr.bf16.gmra.mrb[0].mxu0 %v689
      %v728 = vpop.f32.mrb[0].mxu0
      %v729 = vadd.f32 0.0, %v728
      %v730 = vpop.f32.mrb[0].mxu0
      %v731 = vpop.f32.mrb[0].mxu0
      %v732 = vpop.f32.mrb[0].mxu0
      %733 = vdwg.mxu0
      %v734 = vmul.f32 %v729, 0.25
      %vm735 = vcmask 64512
      %v736 = vsel %vm735, %v734, -inf
      %737 = vmax.xlane.f32.xlu0 %v736
      %v738 = vpop.xlane.xlu0 %737
      %v739 = vsub.f32 %v734, %v738
      %v740 = vmul.f32 %v739, 1.442695
      %v741 = vpow.pop %v740
      %v742 = vsel %vm735, %v741, 0.0
      %743 = vadd.xlane.f32.xlu0 %v742
      %v744 = vpop.xlane.xlu0 %743
      %v745 = vrcp.pop %v744
      %v746 = vmul.f32 %v741, %v745
      %v747 = vpack.c.bf16 %v746, %v746
      %v748 = vpack.c.bf16 %v679, %v679
      %v750 = vsel %vm735, %v747, 0
      %vm752 = vcmask 1043456
      %v754 = vsel %vm752, %v748, 0
      %756 = vmatprep.subr.bf16.mxu0 0
      %757 = vmatpush1.bf16.msra.mxu0 %v754
      %758 = vmatprep.subr.bf16.mxu0 0
      %759 = vmatpush1.bf16.msra.mxu0 0
      %760 = vmatprep.subr.bf16.mxu0 0
      %761 = vmatpush1.bf16.msra.mxu0 0
      %762 = vmatprep.subr.bf16.mxu0 0
      %763 = vmatpush1.bf16.msra.mxu0 0
      %764 = vmatprep.subr.bf16.mxu0 0
      %765 = vmatpush1.bf16.msra.mxu0 0
      %766 = vmatprep.subr.bf16.mxu0 0
      %767 = vmatpush1.bf16.msra.mxu0 0
      %768 = vmatprep.subr.bf16.mxu0 0
      %769 = vmatpush1.bf16.msra.mxu0 0
      %770 = vmatprep.subr.bf16.mxu0 0
      %771 = vmatpush1.bf16.msra.mxu0 0
      %772 = vmatprep.subr.bf16.mxu0 0
      %773 = vmatpush1.bf16.msra.mxu0 0
      %774 = vmatprep.subr.bf16.mxu0 0
      %775 = vmatpush1.bf16.msra.mxu0 0
      %776 = vmatprep.subr.bf16.mxu0 0
      %777 = vmatpush1.bf16.msra.mxu0 0
      %778 = vmatprep.subr.bf16.mxu0 0
      %779 = vmatpush1.bf16.msra.mxu0 0
      %780 = vmatprep.subr.bf16.mxu0 0
      %781 = vmatpush1.bf16.msra.mxu0 0
      %782 = vmatprep.subr.bf16.mxu0 0
      %783 = vmatpush1.bf16.msra.mxu0 0
      %784 = vmatprep.subr.bf16.mxu0 0
      %785 = vmatpush1.bf16.msra.mxu0 0
      %786 = vmatprep.subr.bf16.mxu0 0
      %787 = vmatpush1.bf16.msra.mxu0 0
      %788 = vmatprep.mubr.bf16.mxu0 0
      %789 = vmatmul.mubr.bf16.gmra.mrb[0].mxu0 %v750
      %v790 = vpop.f32.mrb[0].mxu0
      %v791 = vadd.f32 0.0, %v790
      %v792 = vpop.f32.mrb[0].mxu0
      %v793 = vpop.f32.mrb[0].mxu0
      %v794 = vpop.f32.mrb[0].mxu0
      %795 = vdwg.mxu0
      %796 = vrot.lane.b32.xlu0 %v683, 112
      %v797 = vpop.permute.xlu0 %796
      %798 = vrot.lane.b32.xlu0 %v683, 48
      %v799 = vpop.permute.xlu0 %798
      %v801 = vsel %vm687, %v797, 0
      %v804 = vsel %vm687, %v799, 0
      %806 = vmatprep.subr.bf16.mxu0 0
      %807 = vmatpush1.bf16.xpose.msra.mxu0 %v804
      %808 = vmatprep.subr.bf16.mxu0 0
      %809 = vmatpush1.bf16.xpose.msra.mxu0 0
      %810 = vmatprep.subr.bf16.mxu0 0
      %811 = vmatpush1.bf16.xpose.msra.mxu0 0
      %812 = vmatprep.subr.bf16.mxu0 0
      %813 = vmatpush1.bf16.xpose.msra.mxu0 0
      %814 = vmatprep.subr.bf16.mxu0 0
      %815 = vmatpush1.bf16.xpose.msra.mxu0 0
      %816 = vmatprep.subr.bf16.mxu0 0
      %817 = vmatpush1.bf16.xpose.msra.mxu0 0
      %818 = vmatprep.subr.bf16.mxu0 0
      %819 = vmatpush1.bf16.xpose.msra.mxu0 0
      %820 = vmatprep.subr.bf16.mxu0 0
      %821 = vmatpush1.bf16.xpose.msra.mxu0 0
      %822 = vmatprep.subr.bf16.mxu0 0
      %823 = vmatpush1.bf16.xpose.msra.mxu0 0
      %824 = vmatprep.subr.bf16.mxu0 0
      %825 = vmatpush1.bf16.xpose.msra.mxu0 0
      %826 = vmatprep.subr.bf16.mxu0 0
      %827 = vmatpush1.bf16.xpose.msra.mxu0 0
      %828 = vmatprep.subr.bf16.mxu0 0
      %829 = vmatpush1.bf16.xpose.msra.mxu0 0
      %830 = vmatprep.subr.bf16.mxu0 0
      %831 = vmatpush1.bf16.xpose.msra.mxu0 0
      %832 = vmatprep.subr.bf16.mxu0 0
      %833 = vmatpush1.bf16.xpose.msra.mxu0 0
      %834 = vmatprep.subr.bf16.mxu0 0
      %835 = vmatpush1.bf16.xpose.msra.mxu0 0
      %836 = vmatprep.subr.bf16.mxu0 0
      %837 = vmatpush1.bf16.xpose.msra.mxu0 0
      %838 = vmatprep.mubr.bf16.mxu0 0
      %839 = vmatmul.mubr.bf16.gmra.mrb[0].mxu0 %v801
      %v840 = vpop.f32.mrb[0].mxu0
      %v841 = vadd.f32 0.0, %v840
      %v842 = vpop.f32.mrb[0].mxu0
      %v843 = vpop.f32.mrb[0].mxu0
      %v844 = vpop.f32.mrb[0].mxu0
      %845 = vdwg.mxu0
      %v846 = vmul.f32 %v841, 0.25
      %v847 = vsel %vm735, %v846, -inf
      %848 = vmax.xlane.f32.xlu0 %v847
      %v849 = vpop.xlane.xlu0 %848
      %v850 = vsub.f32 %v846, %v849
      %v851 = vmul.f32 %v850, 1.442695
      %v852 = vpow.pop %v851
      %v853 = vsel %vm735, %v852, 0.0
      %854 = vadd.xlane.f32.xlu0 %v853
      %v855 = vpop.xlane.xlu0 %854
      %v856 = vrcp.pop %v855
      %v857 = vmul.f32 %v852, %v856
      %v858 = vpack.c.bf16 %v857, %v857
      %860 = vrot.lane.b32.xlu0 %v748, 112
      %v861 = vpop.permute.xlu0 %860
      %v863 = vsel %vm735, %v858, 0
      %v866 = vsel %vm752, %v861, 0
      %868 = vmatprep.subr.bf16.mxu0 0
      %869 = vmatpush1.bf16.msra.mxu0 %v866
      %870 = vmatprep.subr.bf16.mxu0 0
      %871 = vmatpush1.bf16.msra.mxu0 0
      %872 = vmatprep.subr.bf16.mxu0 0
      %873 = vmatpush1.bf16.msra.mxu0 0
      %874 = vmatprep.subr.bf16.mxu0 0
      %875 = vmatpush1.bf16.msra.mxu0 0
      %876 = vmatprep.subr.bf16.mxu0 0
      %877 = vmatpush1.bf16.msra.mxu0 0
      %878 = vmatprep.subr.bf16.mxu0 0
      %879 = vmatpush1.bf16.msra.mxu0 0
      %880 = vmatprep.subr.bf16.mxu0 0
      %881 = vmatpush1.bf16.msra.mxu0 0
      %882 = vmatprep.subr.bf16.mxu0 0
      %883 = vmatpush1.bf16.msra.mxu0 0
      %884 = vmatprep.subr.bf16.mxu0 0
      %885 = vmatpush1.bf16.msra.mxu0 0
      %886 = vmatprep.subr.bf16.mxu0 0
      %887 = vmatpush1.bf16.msra.mxu0 0
      %888 = vmatprep.subr.bf16.mxu0 0
      %889 = vmatpush1.bf16.msra.mxu0 0
      %890 = vmatprep.subr.bf16.mxu0 0
      %891 = vmatpush1.bf16.msra.mxu0 0
      %892 = vmatprep.subr.bf16.mxu0 0
      %893 = vmatpush1.bf16.msra.mxu0 0
      %894 = vmatprep.subr.bf16.mxu0 0
      %895 = vmatpush1.bf16.msra.mxu0 0
      %896 = vmatprep.subr.bf16.mxu0 0
      %897 = vmatpush1.bf16.msra.mxu0 0
      %898 = vmatprep.subr.bf16.mxu0 0
      %899 = vmatpush1.bf16.msra.mxu0 0
      %900 = vmatprep.mubr.bf16.mxu0 0
      %901 = vmatmul.mubr.bf16.gmra.mrb[0].mxu0 %v863
      %v902 = vpop.f32.mrb[0].mxu0
      %v903 = vadd.f32 0.0, %v902
      %v904 = vpop.f32.mrb[0].mxu0
      %v905 = vpop.f32.mrb[0].mxu0
      %v906 = vpop.f32.mrb[0].mxu0
      %907 = vdwg.mxu0
      %908 = vrot.lane.b32.xlu0 %v683, 96
      %v909 = vpop.permute.xlu0 %908
      %910 = vrot.lane.b32.xlu0 %v683, 32
      %v911 = vpop.permute.xlu0 %910
      %v913 = vsel %vm687, %v909, 0
      %v916 = vsel %vm687, %v911, 0
      %918 = vmatprep.subr.bf16.mxu0 0
      %919 = vmatpush1.bf16.xpose.msra.mxu0 %v916
      %920 = vmatprep.subr.bf16.mxu0 0
      %921 = vmatpush1.bf16.xpose.msra.mxu0 0
      %922 = vmatprep.subr.bf16.mxu0 0
      %923 = vmatpush1.bf16.xpose.msra.mxu0 0
      %924 = vmatprep.subr.bf16.mxu0 0
      %925 = vmatpush1.bf16.xpose.msra.mxu0 0
      %926 = vmatprep.subr.bf16.mxu0 0
      %927 = vmatpush1.bf16.xpose.msra.mxu0 0
      %928 = vmatprep.subr.bf16.mxu0 0
      %929 = vmatpush1.bf16.xpose.msra.mxu0 0
      %930 = vmatprep.subr.bf16.mxu0 0
      %931 = vmatpush1.bf16.xpose.msra.mxu0 0
      %932 = vmatprep.subr.bf16.mxu0 0
      %933 = vmatpush1.bf16.xpose.msra.mxu0 0
      %934 = vmatprep.subr.bf16.mxu0 0
      %935 = vmatpush1.bf16.xpose.msra.mxu0 0
      %936 = vmatprep.subr.bf16.mxu0 0
      %937 = vmatpush1.bf16.xpose.msra.mxu0 0
      %938 = vmatprep.subr.bf16.mxu0 0
      %939 = vmatpush1.bf16.xpose.msra.mxu0 0
      %940 = vmatprep.subr.bf16.mxu0 0
      %941 = vmatpush1.bf16.xpose.msra.mxu0 0
      %942 = vmatprep.subr.bf16.mxu0 0
      %943 = vmatpush1.bf16.xpose.msra.mxu0 0
      %944 = vmatprep.subr.bf16.mxu0 0
      %945 = vmatpush1.bf16.xpose.msra.mxu0 0
      %946 = vmatprep.subr.bf16.mxu0 0
      %947 = vmatpush1.bf16.xpose.msra.mxu0 0
      %948 = vmatprep.subr.bf16.mxu0 0
      %949 = vmatpush1.bf16.xpose.msra.mxu0 0
      %950 = vmatprep.mubr.bf16.mxu0 0
      %951 = vmatmul.mubr.bf16.gmra.mrb[0].mxu0 %v913
      %v952 = vpop.f32.mrb[0].mxu0
      %v953 = vadd.f32 0.0, %v952
      %v954 = vpop.f32.mrb[0].mxu0
      %v955 = vpop.f32.mrb[0].mxu0
      %v956 = vpop.f32.mrb[0].mxu0
      %957 = vdwg.mxu0
      %v958 = vmul.f32 %v953, 0.25
      %v959 = vsel %vm735, %v958, -inf
      %960 = vmax.xlane.f32.xlu0 %v959
      %v961 = vpop.xlane.xlu0 %960
      %v962 = vsub.f32 %v958, %v961
      %v963 = vmul.f32 %v962, 1.442695
      %v964 = vpow.pop %v963
      %v965 = vsel %vm735, %v964, 0.0
      %966 = vadd.xlane.f32.xlu0 %v965
      %v967 = vpop.xlane.xlu0 %966
      %v968 = vrcp.pop %v967
      %v969 = vmul.f32 %v964, %v968
      %v970 = vpack.c.bf16 %v969, %v969
      %971 = vrot.lane.b32.xlu0 %v748, 96
      %v972 = vpop.permute.xlu0 %971
      %v974 = vsel %vm735, %v970, 0
      %v977 = vsel %vm752, %v972, 0
      %979 = vmatprep.subr.bf16.mxu0 0
      %980 = vmatpush1.bf16.msra.mxu0 %v977
      %981 = vmatprep.subr.bf16.mxu0 0
      %982 = vmatpush1.bf16.msra.mxu0 0
      %983 = vmatprep.subr.bf16.mxu0 0
      %984 = vmatpush1.bf16.msra.mxu0 0
      %985 = vmatprep.subr.bf16.mxu0 0
      %986 = vmatpush1.bf16.msra.mxu0 0
      %987 = vmatprep.subr.bf16.mxu0 0
      %988 = vmatpush1.bf16.msra.mxu0 0
      %989 = vmatprep.subr.bf16.mxu0 0
      %990 = vmatpush1.bf16.msra.mxu0 0
      %991 = vmatprep.subr.bf16.mxu0 0
      %992 = vmatpush1.bf16.msra.mxu0 0
      %993 = vmatprep.subr.bf16.mxu0 0
      %994 = vmatpush1.bf16.msra.mxu0 0
      %995 = vmatprep.subr.bf16.mxu0 0
      %996 = vmatpush1.bf16.msra.mxu0 0
      %997 = vmatprep.subr.bf16.mxu0 0
      %998 = vmatpush1.bf16.msra.mxu0 0
      %999 = vmatprep.subr.bf16.mxu0 0
      %1000 = vmatpush1.bf16.msra.mxu0 0
      %1001 = vmatprep.subr.bf16.mxu0 0
      %1002 = vmatpush1.bf16.msra.mxu0 0
      %1003 = vmatprep.subr.bf16.mxu0 0
      %1004 = vmatpush1.bf16.msra.mxu0 0
      %1005 = vmatprep.subr.bf16.mxu0 0
      %1006 = vmatpush1.bf16.msra.mxu0 0
      %1007 = vmatprep.subr.bf16.mxu0 0
      %1008 = vmatpush1.bf16.msra.mxu0 0
      %1009 = vmatprep.subr.bf16.mxu0 0
      %1010 = vmatpush1.bf16.msra.mxu0 0
      %1011 = vmatprep.mubr.bf16.mxu0 0
      %1012 = vmatmul.mubr.bf16.gmra.mrb[0].mxu0 %v974
      %v1013 = vpop.f32.mrb[0].mxu0
      %v1014 = vadd.f32 0.0, %v1013
      %v1015 = vpop.f32.mrb[0].mxu0
      %v1016 = vpop.f32.mrb[0].mxu0
      %v1017 = vpop.f32.mrb[0].mxu0
      %1018 = vdwg.mxu0
      %1019 = vrot.lane.b32.xlu0 %v683, 80
      %v1020 = vpop.permute.xlu0 %1019
      %1021 = vrot.lane.b32.xlu0 %v683, 16
      %v1022 = vpop.permute.xlu0 %1021
      %v1024 = vsel %vm687, %v1020, 0
      %v1027 = vsel %vm687, %v1022, 0
      %1029 = vmatprep.subr.bf16.mxu0 0
      %1030 = vmatpush1.bf16.xpose.msra.mxu0 %v1027
      %1031 = vmatprep.subr.bf16.mxu0 0
      %1032 = vmatpush1.bf16.xpose.msra.mxu0 0
      %1033 = vmatprep.subr.bf16.mxu0 0
      %1034 = vmatpush1.bf16.xpose.msra.mxu0 0
      %1035 = vmatprep.subr.bf16.mxu0 0
      %1036 = vmatpush1.bf16.xpose.msra.mxu0 0
      %1037 = vmatprep.subr.bf16.mxu0 0
      %1038 = vmatpush1.bf16.xpose.msra.mxu0 0
      %1039 = vmatprep.subr.bf16.mxu0 0
      %1040 = vmatpush1.bf16.xpose.msra.mxu0 0
      %1041 = vmatprep.subr.bf16.mxu0 0
      %1042 = vmatpush1.bf16.xpose.msra.mxu0 0
      %1043 = vmatprep.subr.bf16.mxu0 0
      %1044 = vmatpush1.bf16.xpose.msra.mxu0 0
      %1045 = vmatprep.subr.bf16.mxu0 0
      %1046 = vmatpush1.bf16.xpose.msra.mxu0 0
      %1047 = vmatprep.subr.bf16.mxu0 0
      %1048 = vmatpush1.bf16.xpose.msra.mxu0 0
      %1049 = vmatprep.subr.bf16.mxu0 0
      %1050 = vmatpush1.bf16.xpose.msra.mxu0 0
      %1051 = vmatprep.subr.bf16.mxu0 0
      %1052 = vmatpush1.bf16.xpose.msra.mxu0 0
      %1053 = vmatprep.subr.bf16.mxu0 0
      %1054 = vmatpush1.bf16.xpose.msra.mxu0 0
      %1055 = vmatprep.subr.bf16.mxu0 0
      %1056 = vmatpush1.bf16.xpose.msra.mxu0 0
      %1057 = vmatprep.subr.bf16.mxu0 0
      %1058 = vmatpush1.bf16.xpose.msra.mxu0 0
      %1059 = vmatprep.subr.bf16.mxu0 0
      %1060 = vmatpush1.bf16.xpose.msra.mxu0 0
      %1061 = vmatprep.mubr.bf16.mxu0 0
      %1062 = vmatmul.mubr.bf16.gmra.mrb[0].mxu0 %v1024
      %v1063 = vpop.f32.mrb[0].mxu0
      %v1064 = vadd.f32 0.0, %v1063
      %v1065 = vpop.f32.mrb[0].mxu0
      %v1066 = vpop.f32.mrb[0].mxu0
      %v1067 = vpop.f32.mrb[0].mxu0
      %1068 = vdwg.mxu0
      %v1069 = vmul.f32 %v1064, 0.25
      %v1070 = vsel %vm735, %v1069, -inf
      %1071 = vmax.xlane.f32.xlu0 %v1070
      %v1072 = vpop.xlane.xlu0 %1071
      %v1073 = vsub.f32 %v1069, %v1072
      %v1074 = vmul.f32 %v1073, 1.442695
      %v1075 = vpow.pop %v1074
      %v1076 = vsel %vm735, %v1075, 0.0
      %1077 = vadd.xlane.f32.xlu0 %v1076
      %v1078 = vpop.xlane.xlu0 %1077
      %v1079 = vrcp.pop %v1078
      %v1080 = vmul.f32 %v1075, %v1079
      %v1081 = vpack.c.bf16 %v1080, %v1080
      %1082 = vrot.lane.b32.xlu0 %v748, 80
      %v1083 = vpop.permute.xlu0 %1082
      %v1085 = vsel %vm735, %v1081, 0
      %v1088 = vsel %vm752, %v1083, 0
      %1090 = vmatprep.subr.bf16.mxu0 0
      %1091 = vmatpush1.bf16.msra.mxu0 %v1088
      %1092 = vmatprep.subr.bf16.mxu0 0
      %1093 = vmatpush1.bf16.msra.mxu0 0
      %1094 = vmatprep.subr.bf16.mxu0 0
      %1095 = vmatpush1.bf16.msra.mxu0 0
      %1096 = vmatprep.subr.bf16.mxu0 0
      %1097 = vmatpush1.bf16.msra.mxu0 0
      %1098 = vmatprep.subr.bf16.mxu0 0
      %1099 = vmatpush1.bf16.msra.mxu0 0
      %1100 = vmatprep.subr.bf16.mxu0 0
      %1101 = vmatpush1.bf16.msra.mxu0 0
      %1102 = vmatprep.subr.bf16.mxu0 0
      %1103 = vmatpush1.bf16.msra.mxu0 0
      %1104 = vmatprep.subr.bf16.mxu0 0
      %1105 = vmatpush1.bf16.msra.mxu0 0
      %1106 = vmatprep.subr.bf16.mxu0 0
      %1107 = vmatpush1.bf16.msra.mxu0 0
      %1108 = vmatprep.subr.bf16.mxu0 0
      %1109 = vmatpush1.bf16.msra.mxu0 0
      %1110 = vmatprep.subr.bf16.mxu0 0
      %1111 = vmatpush1.bf16.msra.mxu0 0
      %1112 = vmatprep.subr.bf16.mxu0 0
      %1113 = vmatpush1.bf16.msra.mxu0 0
      %1114 = vmatprep.subr.bf16.mxu0 0
      %1115 = vmatpush1.bf16.msra.mxu0 0
      %1116 = vmatprep.subr.bf16.mxu0 0
      %1117 = vmatpush1.bf16.msra.mxu0 0
      %1118 = vmatprep.subr.bf16.mxu0 0
      %1119 = vmatpush1.bf16.msra.mxu0 0
      %1120 = vmatprep.subr.bf16.mxu0 0
      %1121 = vmatpush1.bf16.msra.mxu0 0
      %1122 = vmatprep.mubr.bf16.mxu0 0
      %1123 = vmatmul.mubr.bf16.gmra.mrb[0].mxu0 %v1085
      %v1124 = vpop.f32.mrb[0].mxu0
      %v1125 = vadd.f32 0.0, %v1124
      %v1126 = vpop.f32.mrb[0].mxu0
      %v1127 = vpop.f32.mrb[0].mxu0
      %v1128 = vpop.f32.mrb[0].mxu0
      %1129 = vdwg.mxu0
      %1131 = vrot.lane.b32.xlu0 %v903, 16
      %v1132 = vpop.permute.xlu0 %1131
      %1135 = vrot.lane.b32.xlu0 %v1014, 32
      %v1136 = vpop.permute.xlu0 %1135
      %1139 = vrot.lane.b32.xlu0 %v1125, 48
      %v1140 = vpop.permute.xlu0 %1139
      %v1142 = vsel %vm687, %v791, %v1132
      %v1143 = vsel %vm515, %v1142, %v1136
      %vm1144 = vcmask 392192
      %v1145 = vsel %vm1144, %v1143, %v1140
      %v1146 = vpack.c.bf16 %v1145, %v1145
      %v1147 = vld [vmem:[%s6] sm:$0xf]
      %v1148 = vld [vmem:[%s6 + $0x4] sm:$0xf]
      %v1149 = vld [vmem:[%s6 + $0x8] sm:$0xf]
      %v1150 = vld [vmem:[%s6 + $0xc] sm:$0xf]
      %v1151 = vld [vmem:[%s6 + $0x10] sm:$0xf]
      %v1152 = vld [vmem:[%s6 + $0x14] sm:$0xf]
      %v1153 = vld [vmem:[%s6 + $0x18] sm:$0xf]
      %v1154 = vld [vmem:[%s6 + $0x1c] sm:$0xf]
      %v1163 = vunpack.c.l.b16 %v1147
      %v1164 = vunpack.c.l.b16 %v1148
      %v1165 = vunpack.c.l.b16 %v1149
      %v1166 = vunpack.c.l.b16 %v1150
      %v1167 = vunpack.c.l.b16 %v1151
      %v1168 = vunpack.c.l.b16 %v1152
      %v1169 = vunpack.c.l.b16 %v1153
      %v1170 = vunpack.c.l.b16 %v1154
      %v1171 = vpack.c.b16 %v1164, %v1163
      %v1172 = vpack.c.b16 %v1166, %v1165
      %v1173 = vpack.c.b16 %v1168, %v1167
      %v1174 = vpack.c.b16 %v1170, %v1169
      %v1180 = vsel %vm561, %v1146, 0
      %1182 = vmatprep.subr.bf16.mxu0 0
      %1183 = vmatpush1.bf16.msra.mxu0 %v1171
      %1184 = vmatprep.subr.bf16.mxu0 0
      %1185 = vmatpush1.bf16.msra.mxu0 %v1172
      %1186 = vmatprep.subr.bf16.mxu0 0
      %1187 = vmatpush1.bf16.msra.mxu0 %v1173
      %1188 = vmatprep.subr.bf16.mxu0 0
      %1189 = vmatpush1.bf16.msra.mxu0 %v1174
      %1190 = vmatprep.subr.bf16.mxu0 0
      %1191 = vmatpush1.bf16.msra.mxu0 0
      %1192 = vmatprep.subr.bf16.mxu0 0
      %1193 = vmatpush1.bf16.msra.mxu0 0
      %1194 = vmatprep.subr.bf16.mxu0 0
      %1195 = vmatpush1.bf16.msra.mxu0 0
      %1196 = vmatprep.subr.bf16.mxu0 0
      %1197 = vmatpush1.bf16.msra.mxu0 0
      %1198 = vmatprep.subr.bf16.mxu0 0
      %1199 = vmatpush1.bf16.msra.mxu0 0
      %1200 = vmatprep.subr.bf16.mxu0 0
      %1201 = vmatpush1.bf16.msra.mxu0 0
      %1202 = vmatprep.subr.bf16.mxu0 0
      %1203 = vmatpush1.bf16.msra.mxu0 0
      %1204 = vmatprep.subr.bf16.mxu0 0
      %1205 = vmatpush1.bf16.msra.mxu0 0
      %1206 = vmatprep.subr.bf16.mxu0 0
      %1207 = vmatpush1.bf16.msra.mxu0 0
      %1208 = vmatprep.subr.bf16.mxu0 0
      %1209 = vmatpush1.bf16.msra.mxu0 0
      %1210 = vmatprep.subr.bf16.mxu0 0
      %1211 = vmatpush1.bf16.msra.mxu0 0
      %1212 = vmatprep.subr.bf16.mxu0 0
      %1213 = vmatpush1.bf16.msra.mxu0 0
      %1214 = vmatprep.mubr.bf16.mxu0 0
      %1215 = vmatmul.mubr.bf16.gmra.mrb[0].mxu0 %v1180
      %v1216 = vpop.f32.mrb[0].mxu0
      %v1217 = vadd.f32 %v589, %v1216
      %v1218 = vpop.f32.mrb[0].mxu0
      %v1219 = vpop.f32.mrb[0].mxu0
      %v1220 = vpop.f32.mrb[0].mxu0
      %1221 = vdwg.mxu0
      %v1222 = vld [vmem:[%s7] sm:$0x1]
      %v1223 = vld [vmem:[%s8] sm:$0x1]
      %v1224 = vsel %vm561, %v1217, 0.0
      %1225 = vadd.xlane.f32.xlu0 %v1224
      %v1226 = vpop.xlane.xlu0 %1225
      %v1227 = vmul.f32 %v1226, %v565
      %v1228 = vsub.f32 %v1217, %v1227
      %v1229 = vmul.f32 %v1228, %v1228
      %v1230 = vsel %vm561, %v1229, 0.0
      %1231 = vadd.xlane.f32.xlu0 %v1230
      %v1232 = vpop.xlane.xlu0 %1231
      %v1233 = vmul.f32 %v1232, %v565
      %v1234 = vadd.f32 %v1233, 1e-06
      %v1235 = vrsqrt.pop %v1234
      %v1236 = vmul.f32 %v1228, %v1235
      %v1238 = vlaneseq
      %v1239 = vshrl.u32 %v1238, 7
      %v1240 = vsub.s32 0, %v1239
      %v1241 = vrot.slane %v1222, %v1240
      %v1243 = vmul.f32 %v1236, %v1241
      %v1245 = vlaneseq
      %v1246 = vshrl.u32 %v1245, 7
      %v1247 = vsub.s32 0, %v1246
      %v1248 = vrot.slane %v1223, %v1247
      %v1250 = vadd.f32 %v1243, %v1248
      %v1251 = vpack.c.bf16 %v1250, %v1250
      %v1252 = vld [vmem:[%s9] sm:$0xf]
      %v1253 = vld [vmem:[%s9 + $0x4] sm:$0xf]
      %v1254 = vld [vmem:[%s9 + $0x8] sm:$0xf]
      %v1255 = vld [vmem:[%s9 + $0xc] sm:$0xf]
      %v1256 = vld [vmem:[%s9 + $0x10] sm:$0xf]
      %v1257 = vld [vmem:[%s9 + $0x14] sm:$0xf]
      %v1258 = vld [vmem:[%s9 + $0x18] sm:$0xf]
      %v1259 = vld [vmem:[%s9 + $0x1c] sm:$0xf]
      %v1260 = vld [vmem:[%s10] sm:$0x1]
      %v1262 = vlaneseq
      %v1263 = vshrl.u32 %v1262, 7
      %v1264 = vsub.s32 0, %v1263
      %v1265 = vrot.slane %v1260, %v1264
      %v1275 = vunpack.c.l.b16 %v1252
      %v1276 = vunpack.c.l.b16 %v1253
      %v1277 = vunpack.c.l.b16 %v1254
      %v1278 = vunpack.c.l.b16 %v1255
      %v1279 = vunpack.c.l.b16 %v1256
      %v1280 = vunpack.c.l.b16 %v1257
      %v1281 = vunpack.c.l.b16 %v1258
      %v1282 = vunpack.c.l.b16 %v1259
      %v1283 = vpack.c.b16 %v1276, %v1275
      %v1284 = vpack.c.b16 %v1278, %v1277
      %v1285 = vpack.c.b16 %v1280, %v1279
      %v1286 = vpack.c.b16 %v1282, %v1281
      %v1292 = vsel %vm561, %v1251, 0
      %1294 = vmatprep.subr.bf16.mxu0 0
      %1295 = vmatpush1.bf16.msra.mxu0 %v1283
      %1296 = vmatprep.subr.bf16.mxu0 0
      %1297 = vmatpush1.bf16.msra.mxu0 %v1284
      %1298 = vmatprep.subr.bf16.mxu0 0
      %1299 = vmatpush1.bf16.msra.mxu0 %v1285
      %1300 = vmatprep.subr.bf16.mxu0 0
      %1301 = vmatpush1.bf16.msra.mxu0 %v1286
      %1302 = vmatprep.subr.bf16.mxu0 0
      %1303 = vmatpush1.bf16.msra.mxu0 0
      %1304 = vmatprep.subr.bf16.mxu0 0
      %1305 = vmatpush1.bf16.msra.mxu0 0
      %1306 = vmatprep.subr.bf16.mxu0 0
      %1307 = vmatpush1.bf16.msra.mxu0 0
      %1308 = vmatprep.subr.bf16.mxu0 0
      %1309 = vmatpush1.bf16.msra.mxu0 0
      %1310 = vmatprep.subr.bf16.mxu0 0
      %1311 = vmatpush1.bf16.msra.mxu0 0
      %1312 = vmatprep.subr.bf16.mxu0 0
      %1313 = vmatpush1.bf16.msra.mxu0 0
      %1314 = vmatprep.subr.bf16.mxu0 0
      %1315 = vmatpush1.bf16.msra.mxu0 0
      %1316 = vmatprep.subr.bf16.mxu0 0
      %1317 = vmatpush1.bf16.msra.mxu0 0
      %1318 = vmatprep.subr.bf16.mxu0 0
      %1319 = vmatpush1.bf16.msra.mxu0 0
      %1320 = vmatprep.subr.bf16.mxu0 0
      %1321 = vmatpush1.bf16.msra.mxu0 0
      %1322 = vmatprep.subr.bf16.mxu0 0
      %1323 = vmatpush1.bf16.msra.mxu0 0
      %1324 = vmatprep.subr.bf16.mxu0 0
      %1325 = vmatpush1.bf16.msra.mxu0 0
      %1326 = vmatprep.mubr.bf16.mxu0 0
      %1327 = vmatmul.mubr.bf16.gmra.mrb[0].mxu0 %v1292
      %v1328 = vpop.f32.mrb[0].mxu0
      %v1329 = vadd.f32 %v1265, %v1328
      %v1330 = vpop.f32.mrb[0].mxu0
      %v1331 = vpop.f32.mrb[0].mxu0
      %v1332 = vpop.f32.mrb[0].mxu0
      %1333 = vdwg.mxu0
      %v1334 = vmax.f32 %v1329, 0.0
      %v1335 = vpack.c.bf16 %v1334, %v1334
      %v1336 = vld [vmem:[%s11] sm:$0xf]
      %v1337 = vld [vmem:[%s11 + $0x4] sm:$0xf]
      %v1338 = vld [vmem:[%s11 + $0x8] sm:$0xf]
      %v1339 = vld [vmem:[%s11 + $0xc] sm:$0xf]
      %v1340 = vld [vmem:[%s11 + $0x10] sm:$0xf]
      %v1341 = vld [vmem:[%s11 + $0x14] sm:$0xf]
      %v1342 = vld [vmem:[%s11 + $0x18] sm:$0xf]
      %v1343 = vld [vmem:[%s11 + $0x1c] sm:$0xf]
      %v1344 = vld [vmem:[%s11 + $0x20] sm:$0xf]
      %v1345 = vld [vmem:[%s11 + $0x24] sm:$0xf]
      %v1346 = vld [vmem:[%s11 + $0x28] sm:$0xf]
      %v1347 = vld [vmem:[%s11 + $0x2c] sm:$0xf]
      %v1348 = vld [vmem:[%s11 + $0x30] sm:$0xf]
      %v1349 = vld [vmem:[%s11 + $0x34] sm:$0xf]
      %v1350 = vld [vmem:[%s11 + $0x38] sm:$0xf]
      %v1351 = vld [vmem:[%s11 + $0x3c] sm:$0xf]
      %v1352 = vld [vmem:[%s12] sm:$0x1]
      %v1354 = vlaneseq
      %v1355 = vshrl.u32 %v1354, 7
      %v1356 = vsub.s32 0, %v1355
      %v1357 = vrot.slane %v1352, %v1356
      %v1375 = vunpack.c.l.b16 %v1336
      %v1376 = vunpack.c.l.b16 %v1337
      %v1377 = vunpack.c.l.b16 %v1338
      %v1378 = vunpack.c.l.b16 %v1339
      %v1379 = vunpack.c.l.b16 %v1340
      %v1380 = vunpack.c.l.b16 %v1341
      %v1381 = vunpack.c.l.b16 %v1342
      %v1382 = vunpack.c.l.b16 %v1343
      %v1383 = vunpack.c.l.b16 %v1344
      %v1384 = vunpack.c.l.b16 %v1345
      %v1385 = vunpack.c.l.b16 %v1346
      %v1386 = vunpack.c.l.b16 %v1347
      %v1387 = vunpack.c.l.b16 %v1348
      %v1388 = vunpack.c.l.b16 %v1349
      %v1389 = vunpack.c.l.b16 %v1350
      %v1390 = vunpack.c.l.b16 %v1351
      %v1391 = vpack.c.b16 %v1376, %v1375
      %v1392 = vpack.c.b16 %v1378, %v1377
      %v1393 = vpack.c.b16 %v1380, %v1379
      %v1394 = vpack.c.b16 %v1382, %v1381
      %v1395 = vpack.c.b16 %v1384, %v1383
      %v1396 = vpack.c.b16 %v1386, %v1385
      %v1397 = vpack.c.b16 %v1388, %v1387
      %v1398 = vpack.c.b16 %v1390, %v1389
      %1407 = vmatprep.subr.bf16.mxu0 0
      %1408 = vmatpush1.bf16.msra.mxu0 %v1391
      %1409 = vmatprep.subr.bf16.mxu0 0
      %1410 = vmatpush1.bf16.msra.mxu0 %v1392
      %1411 = vmatprep.subr.bf16.mxu0 0
      %1412 = vmatpush1.bf16.msra.mxu0 %v1393
      %1413 = vmatprep.subr.bf16.mxu0 0
      %1414 = vmatpush1.bf16.msra.mxu0 %v1394
      %1415 = vmatprep.subr.bf16.mxu0 0
      %1416 = vmatpush1.bf16.msra.mxu0 %v1395
      %1417 = vmatprep.subr.bf16.mxu0 0
      %1418 = vmatpush1.bf16.msra.mxu0 %v1396
      %1419 = vmatprep.subr.bf16.mxu0 0
      %1420 = vmatpush1.bf16.msra.mxu0 %v1397
      %1421 = vmatprep.subr.bf16.mxu0 0
      %1422 = vmatpush1.bf16.msra.mxu0 %v1398
      %1423 = vmatprep.subr.bf16.mxu0 0
      %1424 = vmatpush1.bf16.msra.mxu0 0
      %1425 = vmatprep.subr.bf16.mxu0 0
      %1426 = vmatpush1.bf16.msra.mxu0 0
      %1427 = vmatprep.subr.bf16.mxu0 0
      %1428 = vmatpush1.bf16.msra.mxu0 0
      %1429 = vmatprep.subr.bf16.mxu0 0
      %1430 = vmatpush1.bf16.msra.mxu0 0
      %1431 = vmatprep.subr.bf16.mxu0 0
      %1432 = vmatpush1.bf16.msra.mxu0 0
      %1433 = vmatprep.subr.bf16.mxu0 0
      %1434 = vmatpush1.bf16.msra.mxu0 0
      %1435 = vmatprep.subr.bf16.mxu0 0
      %1436 = vmatpush1.bf16.msra.mxu0 0
      %1437 = vmatprep.subr.bf16.mxu0 0
      %1438 = vmatpush1.bf16.msra.mxu0 0
      %1439 = vmatprep.mubr.bf16.mxu0 0
      %1440 = vmatmul.mubr.bf16.gmra.mrb[0].mxu0 %v1335
      %v1441 = vpop.f32.mrb[0].mxu0
      %v1442 = vadd.f32 %v1357, %v1441
      %v1443 = vpop.f32.mrb[0].mxu0
      %v1444 = vpop.f32.mrb[0].mxu0
      %v1445 = vpop.f32.mrb[0].mxu0
      %1446 = vdwg.mxu0
      %v1447 = vadd.f32 %v1442, %v1250
      %v1448 = vld [vmem:[%s13] sm:$0x1]
      %v1449 = vld [vmem:[%s14] sm:$0x1]
      %v1450 = vsel %vm561, %v1447, 0.0
      %1451 = vadd.xlane.f32.xlu0 %v1450
      %v1452 = vpop.xlane.xlu0 %1451
      %v1453 = vmul.f32 %v1452, %v565
      %v1454 = vsub.f32 %v1447, %v1453
      %v1455 = vmul.f32 %v1454, %v1454
      %v1456 = vsel %vm561, %v1455, 0.0
      %1457 = vadd.xlane.f32.xlu0 %v1456
      %v1458 = vpop.xlane.xlu0 %1457
      %v1459 = vmul.f32 %v1458, %v565
      %v1460 = vadd.f32 %v1459, 1e-06
      %v1461 = vrsqrt.pop %v1460
      %v1462 = vmul.f32 %v1454, %v1461
      %v1464 = vlaneseq
      %v1465 = vshrl.u32 %v1464, 7
      %v1466 = vsub.s32 0, %v1465
      %v1467 = vrot.slane %v1448, %v1466
      %v1469 = vmul.f32 %v1462, %v1467
      %v1471 = vlaneseq
      %v1472 = vshrl.u32 %v1471, 7
      %v1473 = vsub.s32 0, %v1472
      %v1474 = vrot.slane %v1449, %v1473
      %v1476 = vadd.f32 %v1469, %v1474
      %v1477 = vpack.c.bf16 %v1476, %v1476
      %vm1478 = vcmask 519168
      %1479 = vst.msk [vmem:[%s489] sm:$0xf] %vm1478, %v1477
      %p1480 = scmp.lt.s32.totalorder %s26, 1
      %s1481 = scalar_select %p1480, %s26, 1
      %s1482 = smul.addr %s1481, 4
      %s1483 = scalar_lea.vmem %s15, %s1482
      // Predicated region
      $region81: #{_lambda_.10} parent=79 // pred_check
        %p1484 = pneg %p364
      $region82: #{_lambda_.10} parent=79 // pred_check_branch
        %1486 = sbr.rel (%p1484) target = $region84
      $region83: #{_lambda_.10} parent=79 // pred_region
        _
      $region84: #{_lambda_.10} parent=79 // pred_fallthru
        _
    $region80: #{_lambda_.10} parent=5 // pred_fallthru
      _
    %p1487 = scmp.le.s32.totalorder 2, %s21
    // Predicated region
    $region85: #{_lambda_.10} parent=5 // pred_check
      %p1488 = pneg %p1487
    $region86: #{_lambda_.10} parent=5 // pred_check_branch
      %1490 = sbr.rel (%p1488) target = $region88
    $region87: #{_lambda_.10} parent=5 // pred_region
      %s1491 = ssub.s32 %s21, 2
      // Predicated region
      $region89: #{_lambda_.10} parent=87 // pred_check
        %p1492 = pneg %p370
      $region90: #{_lambda_.10} parent=87 // pred_check_branch
        %1494 = sbr.rel (%p1492) target = $region92
      $region91: #{_lambda_.10} parent=87 // pred_region
        %p1495 = scmp.lt.s32.totalorder %s27, 1
        %s1496 = scalar_select %p1495, %s27, 1
        %s1497 = smul.addr %s1496, 4
        %s1498 = scalar_lea.vmem %s15, %s1497
      $region92: #{_lambda_.10} parent=87 // pred_fallthru
        _
    $region88: #{_lambda_.10} parent=5 // pred_fallthru
      _
  $region6: #{_lambda_.10} parent=0 // loop_footer
    %s25 = sadd.s32 1, %s21
  $region7: #{_lambda_.10} parent=0 // loop_footer_branch
    %20 = sbr.rel target = $region3
  $region8: #{_lambda_.10} parent=0 // loop_exit
    _

// kernel: _lambda_.11
$region0: #{_lambda_.11}
  #allocation0 [shape = 'u32[]', space=smem, size = 0x4, offset = 0x4, fixed_abs, tag = 'smem constant byte address 0x4 - core index']
  #allocation1 [shape = 'u32[144,128]{1,0:T(1,128)}', space=vmem, size = 0x12000, scoped, tag = 'internal scratch']
  %s0 = inlined_call_operand.vmem [shape: bf16[2,8,64], index: 0, kind: input, shape index: {}]
  %s1 = inlined_call_operand.vmem [shape: bf16[2,8,32], index: 1, kind: input, shape index: {}]
  %s2 = inlined_call_operand.vmem [shape: bf16[64,32], index: 2, kind: input, shape index: {}]
  %s3 = inlined_call_operand.vmem [shape: f32[1,32], index: 3, kind: input, shape index: {}]
  %s4 = inlined_call_operand.vmem [shape: bf16[32,64], index: 4, kind: input, shape index: {}]
  %s5 = inlined_call_operand.vmem [shape: f32[1,64], index: 5, kind: input, shape index: {}]
  %s6 = inlined_call_operand.vmem [shape: bf16[32,64], index: 6, kind: input, shape index: {}]
  %s7 = inlined_call_operand.vmem [shape: f32[1,32], index: 7, kind: input, shape index: {}]
  %s8 = inlined_call_operand.vmem [shape: bf16[2,9,32], index: 8, kind: output, shape index: {}]
  %s9 = sld [smem:[#allocation0]]
  $region65: #{_lambda_.11} parent=0
    _
  %s11 = ssub.s32 1, %s9
  %s12 = scalar_select 0, %s11, %s9
  loop: start=0, step=1, limit=4
  $region2: #{_lambda_.11} parent=0 // loop_pre_header
    _
  $region3: #{_lambda_.11} parent=0 // loop_header
    %s14 = sphi 0, %s18
    %p15 = scmp.ge.s32.totalorder %s14, 4
    %s24 = sphi 0, %s26
    %s27 = sphi 0, %s24
    %s28 = sphi 0, %s27
    %s44 = sphi 0, %s28
    %s50 = sphi 0, %s52
    %s53 = sphi 0, %s50
    %s54 = sphi 0, %s53
    %s70 = sphi 0, %s54
    %s74 = sphi 0, %s74
    %s76 = sphi 0, %s74
    %s77 = sphi 0, %s76
    %s91 = sphi 0, %s77
    %s95 = sphi 0, %s95
    %s97 = sphi 0, %s95
    %s98 = sphi 0, %s97
    %s112 = sphi 0, %s98
    %s116 = sphi 0, %s116
    %s118 = sphi 0, %s116
    %s119 = sphi 0, %s118
    %s133 = sphi 0, %s119
    %s137 = sphi 0, %s137
    %s139 = sphi 0, %s137
    %s140 = sphi 0, %s139
    %s154 = sphi 0, %s140
    %s158 = sphi 0, %s158
    %s160 = sphi 0, %s158
    %s161 = sphi 0, %s160
    %s175 = sphi 0, %s161
    %s179 = sphi 0, %s179
    %s181 = sphi 0, %s179
    %s182 = sphi 0, %s181
    %s196 = sphi 0, %s182
    %s202 = sphi 0, %s204
    %s205 = sphi 0, %s202
    %s206 = sphi 0, %s205
    %s222 = sphi 0, %s206
  $region4: #{_lambda_.11} parent=0 // loop_header_branch
    %17 = sbr.rel (%p15) target = $region8
  $region5: #{_lambda_.11} parent=0 // loop_body
    %s19 = ssub.s32 %s14, 1
    %s20 = ssub.s32 %s14, 2
    %s21 = sadd.s32 %s14, 1
    %s22 = ssub.s32 %s14, %s21
    %p23 = scmp.eq.s32.totalorder %s22, 0
    %s25 = sadd.s32 %s24, 1
    %s26 = scalar_select %p23, %s24, %s25
    %p29 = pneg %p23
    %p30 = scmp.eq.s32.totalorder %s14, 1
    %p31 = por %p29, %p30
    %p32 = scmp.ne.s32.totalorder %s24, %s27
    %p33 = scmp.eq.s32.totalorder %s14, 0
    %p34 = por %p32, %p33
    %p35 = scmp.ne.s32.totalorder %s24, %s27
    %p36 = scmp.eq.s32.totalorder %s19, 1
    %p37 = por %p35, %p36
    %p38 = scmp.ne.s32.totalorder %s27, %s28
    %p39 = scmp.eq.s32.totalorder %s19, 0
    %p40 = por %p38, %p39
    %p41 = scmp.ne.s32.totalorder %s27, %s28
    %p42 = scmp.eq.s32.totalorder %s20, 1
    %p43 = por %p41, %p42
    %p45 = scmp.ne.s32.totalorder %s28, %s44
    %p46 = scmp.eq.s32.totalorder %s20, 0
    %p47 = por %p45, %p46
    %s48 = ssub.s32 %s14, %s21
    %p49 = scmp.eq.s32.totalorder %s48, 0
    %s51 = sadd.s32 %s50, 1
    %s52 = scalar_select %p49, %s50, %s51
    %p55 = pneg %p49
    %p56 = scmp.eq.s32.totalorder %s14, 1
    %p57 = por %p55, %p56
    %p58 = scmp.ne.s32.totalorder %s50, %s53
    %p59 = scmp.eq.s32.totalorder %s14, 0
    %p60 = por %p58, %p59
    %p61 = scmp.ne.s32.totalorder %s50, %s53
    %p62 = scmp.eq.s32.totalorder %s19, 1
    %p63 = por %p61, %p62
    %p64 = scmp.ne.s32.totalorder %s53, %s54
    %p65 = scmp.eq.s32.totalorder %s19, 0
    %p66 = por %p64, %p65
    %p67 = scmp.ne.s32.totalorder %s53, %s54
    %p68 = scmp.eq.s32.totalorder %s20, 1
    %p69 = por %p67, %p68
    %p71 = scmp.ne.s32.totalorder %s54, %s70
    %p72 = scmp.eq.s32.totalorder %s20, 0
    %p73 = por %p71, %p72
    %s75 = sadd.s32 %s74, 1
    %p78 = scmp.eq.s32.totalorder %s14, 1
    %p79 = scmp.ne.s32.totalorder %s74, %s76
    %p80 = scmp.eq.s32.totalorder %s14, 0
    %p81 = por %p79, %p80
    %p82 = scmp.ne.s32.totalorder %s74, %s76
    %p83 = scmp.eq.s32.totalorder %s19, 1
    %p84 = por %p82, %p83
    %p85 = scmp.ne.s32.totalorder %s76, %s77
    %p86 = scmp.eq.s32.totalorder %s19, 0
    %p87 = por %p85, %p86
    %p88 = scmp.ne.s32.totalorder %s76, %s77
    %p89 = scmp.eq.s32.totalorder %s20, 1
    %p90 = por %p88, %p89
    %p92 = scmp.ne.s32.totalorder %s77, %s91
    %p93 = scmp.eq.s32.totalorder %s20, 0
    %p94 = por %p92, %p93
    %s96 = sadd.s32 %s95, 1
    %p99 = scmp.eq.s32.totalorder %s14, 1
    %p100 = scmp.ne.s32.totalorder %s95, %s97
    %p101 = scmp.eq.s32.totalorder %s14, 0
    %p102 = por %p100, %p101
    %p103 = scmp.ne.s32.totalorder %s95, %s97
    %p104 = scmp.eq.s32.totalorder %s19, 1
    %p105 = por %p103, %p104
    %p106 = scmp.ne.s32.totalorder %s97, %s98
    %p107 = scmp.eq.s32.totalorder %s19, 0
    %p108 = por %p106, %p107
    %p109 = scmp.ne.s32.totalorder %s97, %s98
    %p110 = scmp.eq.s32.totalorder %s20, 1
    %p111 = por %p109, %p110
    %p113 = scmp.ne.s32.totalorder %s98, %s112
    %p114 = scmp.eq.s32.totalorder %s20, 0
    %p115 = por %p113, %p114
    %s117 = sadd.s32 %s116, 1
    %p120 = scmp.eq.s32.totalorder %s14, 1
    %p121 = scmp.ne.s32.totalorder %s116, %s118
    %p122 = scmp.eq.s32.totalorder %s14, 0
    %p123 = por %p121, %p122
    %p124 = scmp.ne.s32.totalorder %s116, %s118
    %p125 = scmp.eq.s32.totalorder %s19, 1
    %p126 = por %p124, %p125
    %p127 = scmp.ne.s32.totalorder %s118, %s119
    %p128 = scmp.eq.s32.totalorder %s19, 0
    %p129 = por %p127, %p128
    %p130 = scmp.ne.s32.totalorder %s118, %s119
    %p131 = scmp.eq.s32.totalorder %s20, 1
    %p132 = por %p130, %p131
    %p134 = scmp.ne.s32.totalorder %s119, %s133
    %p135 = scmp.eq.s32.totalorder %s20, 0
    %p136 = por %p134, %p135
    %s138 = sadd.s32 %s137, 1
    %p141 = scmp.eq.s32.totalorder %s14, 1
    %p142 = scmp.ne.s32.totalorder %s137, %s139
    %p143 = scmp.eq.s32.totalorder %s14, 0
    %p144 = por %p142, %p143
    %p145 = scmp.ne.s32.totalorder %s137, %s139
    %p146 = scmp.eq.s32.totalorder %s19, 1
    %p147 = por %p145, %p146
    %p148 = scmp.ne.s32.totalorder %s139, %s140
    %p149 = scmp.eq.s32.totalorder %s19, 0
    %p150 = por %p148, %p149
    %p151 = scmp.ne.s32.totalorder %s139, %s140
    %p152 = scmp.eq.s32.totalorder %s20, 1
    %p153 = por %p151, %p152
    %p155 = scmp.ne.s32.totalorder %s140, %s154
    %p156 = scmp.eq.s32.totalorder %s20, 0
    %p157 = por %p155, %p156
    %s159 = sadd.s32 %s158, 1
    %p162 = scmp.eq.s32.totalorder %s14, 1
    %p163 = scmp.ne.s32.totalorder %s158, %s160
    %p164 = scmp.eq.s32.totalorder %s14, 0
    %p165 = por %p163, %p164
    %p166 = scmp.ne.s32.totalorder %s158, %s160
    %p167 = scmp.eq.s32.totalorder %s19, 1
    %p168 = por %p166, %p167
    %p169 = scmp.ne.s32.totalorder %s160, %s161
    %p170 = scmp.eq.s32.totalorder %s19, 0
    %p171 = por %p169, %p170
    %p172 = scmp.ne.s32.totalorder %s160, %s161
    %p173 = scmp.eq.s32.totalorder %s20, 1
    %p174 = por %p172, %p173
    %p176 = scmp.ne.s32.totalorder %s161, %s175
    %p177 = scmp.eq.s32.totalorder %s20, 0
    %p178 = por %p176, %p177
    %s180 = sadd.s32 %s179, 1
    %p183 = scmp.eq.s32.totalorder %s14, 1
    %p184 = scmp.ne.s32.totalorder %s179, %s181
    %p185 = scmp.eq.s32.totalorder %s14, 0
    %p186 = por %p184, %p185
    %p187 = scmp.ne.s32.totalorder %s179, %s181
    %p188 = scmp.eq.s32.totalorder %s19, 1
    %p189 = por %p187, %p188
    %p190 = scmp.ne.s32.totalorder %s181, %s182
    %p191 = scmp.eq.s32.totalorder %s19, 0
    %p192 = por %p190, %p191
    %p193 = scmp.ne.s32.totalorder %s181, %s182
    %p194 = scmp.eq.s32.totalorder %s20, 1
    %p195 = por %p193, %p194
    %p197 = scmp.ne.s32.totalorder %s182, %s196
    %p198 = scmp.eq.s32.totalorder %s20, 0
    %p199 = por %p197, %p198
    %s200 = ssub.s32 %s14, %s21
    %p201 = scmp.eq.s32.totalorder %s200, 0
    %s203 = sadd.s32 %s202, 1
    %s204 = scalar_select %p201, %s202, %s203
    %p207 = pneg %p201
    %p208 = scmp.eq.s32.totalorder %s14, 1
    %p209 = por %p207, %p208
    %p210 = scmp.ne.s32.totalorder %s202, %s205
    %p211 = scmp.eq.s32.totalorder %s14, 0
    %p212 = por %p210, %p211
    %p213 = scmp.ne.s32.totalorder %s202, %s205
    %p214 = scmp.eq.s32.totalorder %s19, 1
    %p215 = por %p213, %p214
    %p216 = scmp.ne.s32.totalorder %s205, %s206
    %p217 = scmp.eq.s32.totalorder %s19, 0
    %p218 = por %p216, %p217
    %p219 = scmp.ne.s32.totalorder %s205, %s206
    %p220 = scmp.eq.s32.totalorder %s20, 1
    %p221 = por %p219, %p220
    %p223 = scmp.ne.s32.totalorder %s206, %s222
    %p224 = scmp.eq.s32.totalorder %s20, 0
    %p225 = por %p223, %p224
    %p226 = scmp.le.s32.totalorder 1, %s14
    %p227 = scmp.lt.s32.totalorder %s14, 3
    %p228 = pnand %p226, %p227
    %p229 = pneg %p228
    // Predicated region
    $region9: #{_lambda_.11} parent=5 // pred_check
      _
    $region10: #{_lambda_.11} parent=5 // pred_check_branch
      %231 = sbr.rel (%p228) target = $region12
    $region11: #{_lambda_.11} parent=5 // pred_region
      %s232 = ssub.s32 %s14, 1
      // Predicated region
      $region13: #{_lambda_.11} parent=11 // pred_check
        %p233 = pneg %p87
      $region14: #{_lambda_.11} parent=11 // pred_check_branch
        %235 = sbr.rel (%p233) target = $region16
      $region15: #{_lambda_.11} parent=11 // pred_region
        _
      $region16: #{_lambda_.11} parent=11 // pred_fallthru
        _
      // Predicated region
      $region17: #{_lambda_.11} parent=11 // pred_check
        %p236 = pneg %p108
      $region18: #{_lambda_.11} parent=11 // pred_check_branch
        %238 = sbr.rel (%p236) target = $region20
      $region19: #{_lambda_.11} parent=11 // pred_region
        _
      $region20: #{_lambda_.11} parent=11 // pred_fallthru
        _
      // Predicated region
      $region21: #{_lambda_.11} parent=11 // pred_check
        %p239 = pneg %p129
      $region22: #{_lambda_.11} parent=11 // pred_check_branch
        %241 = sbr.rel (%p239) target = $region24
      $region23: #{_lambda_.11} parent=11 // pred_region
        _
      $region24: #{_lambda_.11} parent=11 // pred_fallthru
        _
      // Predicated region
      $region25: #{_lambda_.11} parent=11 // pred_check
        %p242 = pneg %p150
      $region26: #{_lambda_.11} parent=11 // pred_check_branch
        %244 = sbr.rel (%p242) target = $region28
      $region27: #{_lambda_.11} parent=11 // pred_region
        _
      $region28: #{_lambda_.11} parent=11 // pred_fallthru
        _
      // Predicated region
      $region29: #{_lambda_.11} parent=11 // pred_check
        %p245 = pneg %p171
      $region30: #{_lambda_.11} parent=11 // pred_check_branch
        %247 = sbr.rel (%p245) target = $region32
      $region31: #{_lambda_.11} parent=11 // pred_region
        _
      $region32: #{_lambda_.11} parent=11 // pred_fallthru
        _
      // Predicated region
      $region33: #{_lambda_.11} parent=11 // pred_check
        %p248 = pneg %p192
      $region34: #{_lambda_.11} parent=11 // pred_check_branch
        %250 = sbr.rel (%p248) target = $region36
      $region35: #{_lambda_.11} parent=11 // pred_region
        _
      $region36: #{_lambda_.11} parent=11 // pred_fallthru
        _
    $region12: #{_lambda_.11} parent=5 // pred_fallthru
      _
    %p251 = scmp.lt.s32.totalorder %s14, 2
    // Predicated region
    $region37: #{_lambda_.11} parent=5 // pred_check
      %p252 = pneg %p251
    $region38: #{_lambda_.11} parent=5 // pred_check_branch
      %254 = sbr.rel (%p252) target = $region40
    $region39: #{_lambda_.11} parent=5 // pred_region
      // Predicated region
      $region41: #{_lambda_.11} parent=39 // pred_check
        %p255 = pneg %p34
      $region42: #{_lambda_.11} parent=39 // pred_check_branch
        %257 = sbr.rel (%p255) target = $region44
      $region43: #{_lambda_.11} parent=39 // pred_region
        %p258 = scmp.lt.s32.totalorder %s14, 1
        %s259 = scalar_select %p258, %s14, 1
        %s260 = smul.addr %s259, 4
        %s261 = scalar_lea.vmem %s0, %s260
      $region44: #{_lambda_.11} parent=39 // pred_fallthru
        _
      // Predicated region
      $region45: #{_lambda_.11} parent=39 // pred_check
        %p262 = pneg %p60
      $region46: #{_lambda_.11} parent=39 // pred_check_branch
        %264 = sbr.rel (%p262) target = $region48
      $region47: #{_lambda_.11} parent=39 // pred_region
        %p265 = scmp.lt.s32.totalorder %s14, 1
        %s266 = scalar_select %p265, %s14, 1
        %s267 = smul.addr %s266, 4
        %s268 = scalar_lea.vmem %s1, %s267
      $region48: #{_lambda_.11} parent=39 // pred_fallthru
        _
    $region40: #{_lambda_.11} parent=5 // pred_fallthru
      _
    %p269 = scmp.le.s32.totalorder 1, %s14
    %p270 = scmp.lt.s32.totalorder %s14, 3
    %p271 = pnand %p269, %p270
    %p272 = pneg %p271
    // Predicated region
    $region49: #{_lambda_.11} parent=5 // pred_check
      _
    $region50: #{_lambda_.11} parent=5 // pred_check_branch
      %274 = sbr.rel (%p271) target = $region52
    $region51: #{_lambda_.11} parent=5 // pred_region
      %s275 = ssub.s32 %s14, 1
      %p276 = scmp.lt.s32.totalorder %s19, 1
      %s277 = scalar_select %p276, %s19, 1
      %s278 = smul.addr %s277, 4
      %s279 = scalar_lea.vmem %s0, %s278
      %p280 = pneg %p40
      %p281 = pneg %p37
      %p282 = scmp.lt.s32.totalorder %s19, 1
      %s283 = scalar_select %p282, %s19, 1
      %s284 = smul.addr %s283, 4
      %s285 = scalar_lea.vmem %s1, %s284
      %p286 = pneg %p66
      %p287 = pneg %p63
      %p288 = pneg %p87
      %p289 = pneg %p84
      %p290 = pneg %p108
      %p291 = pneg %p105
      %p292 = pneg %p129
      %p293 = pneg %p126
      %p294 = pneg %p150
      %p295 = pneg %p147
      %p296 = pneg %p171
      %p297 = pneg %p168
      %p298 = pneg %p192
      %p299 = pneg %p189
      %p300 = pneg %p218
      %p301 = pneg %p215
      %p302 = scmp.lt.s32.totalorder %s19, 1
      %s303 = scalar_select %p302, %s19, 1
      %s304 = smul.addr %s303, 2
      %s305 = smul.addr %s304, 4
      %s306 = scalar_lea.vmem %s8, %s305
      %p307 = scmp.lt.s32.totalorder %s19, 1
      %s308 = scalar_select %p307, %s19, 1
      %s309 = smul.addr %s308, 4
      %s310 = scalar_lea.vmem %s0, %s309
      %p311 = scmp.lt.s32.totalorder %s19, 1
      %s312 = scalar_select %p311, %s19, 1
      %s313 = smul.addr %s312, 4
      %s314 = scalar_lea.vmem %s1, %s313
      %p315 = scmp.lt.s32.totalorder %s19, 1
      %s316 = scalar_select %p315, %s19, 1
      %s317 = smul.addr %s316, 2
      %s318 = smul.addr %s317, 4
      %s319 = scalar_lea.vmem %s8, %s318
      %v321 = vld [vmem:[%s310] sm:$0xf]
      %v322 = vld [vmem:[%s2] sm:$0xf]
      %v323 = vld [vmem:[%s2 + $0x4] sm:$0xf]
      %v324 = vld [vmem:[%s2 + $0x8] sm:$0xf]
      %v325 = vld [vmem:[%s2 + $0xc] sm:$0xf]
      %v326 = vld [vmem:[%s2 + $0x10] sm:$0xf]
      %v327 = vld [vmem:[%s2 + $0x14] sm:$0xf]
      %v328 = vld [vmem:[%s2 + $0x18] sm:$0xf]
      %v329 = vld [vmem:[%s2 + $0x1c] sm:$0xf]
      %v330 = vld [vmem:[%s3] sm:$0x1]
      %v332 = vlaneseq
      %v333 = vshrl.u32 %v332, 7
      %v334 = vsub.s32 0, %v333
      %v335 = vrot.slane %v330, %v334
      %v345 = vunpack.c.l.b16 %v322
      %v346 = vunpack.c.l.b16 %v323
      %v347 = vunpack.c.l.b16 %v324
      %v348 = vunpack.c.l.b16 %v325
      %v349 = vunpack.c.l.b16 %v326
      %v350 = vunpack.c.l.b16 %v327
      %v351 = vunpack.c.l.b16 %v328
      %v352 = vunpack.c.l.b16 %v329
      %v353 = vpack.c.b16 %v346, %v345
      %v354 = vpack.c.b16 %v348, %v347
      %v355 = vpack.c.b16 %v350, %v349
      %v356 = vpack.c.b16 %v352, %v351
      %vm361 = vcmask 523264
      %v363 = vsel %vm361, %v321, 0
      %365 = vmatprep.subr.bf16.mxu0 0
      %366 = vmatpush1.bf16.msra.mxu0 %v353
      %367 = vmatprep.subr.bf16.mxu0 0
      %368 = vmatpush1.bf16.msra.mxu0 %v354
      %369 = vmatprep.subr.bf16.mxu0 0
      %370 = vmatpush1.bf16.msra.mxu0 %v355
      %371 = vmatprep.subr.bf16.mxu0 0
      %372 = vmatpush1.bf16.msra.mxu0 %v356
      %373 = vmatprep.subr.bf16.mxu0 0
      %374 = vmatpush1.bf16.msra.mxu0 0
      %375 = vmatprep.subr.bf16.mxu0 0
      %376 = vmatpush1.bf16.msra.mxu0 0
      %377 = vmatprep.subr.bf16.mxu0 0
      %378 = vmatpush1.bf16.msra.mxu0 0
      %379 = vmatprep.subr.bf16.mxu0 0
      %380 = vmatpush1.bf16.msra.mxu0 0
      %381 = vmatprep.subr.bf16.mxu0 0
      %382 = vmatpush1.bf16.msra.mxu0 0
      %383 = vmatprep.subr.bf16.mxu0 0
      %384 = vmatpush1.bf16.msra.mxu0 0
      %385 = vmatprep.subr.bf16.mxu0 0
      %386 = vmatpush1.bf16.msra.mxu0 0
      %387 = vmatprep.subr.bf16.mxu0 0
      %388 = vmatpush1.bf16.msra.mxu0 0
      %389 = vmatprep.subr.bf16.mxu0 0
      %390 = vmatpush1.bf16.msra.mxu0 0
      %391 = vmatprep.subr.bf16.mxu0 0
      %392 = vmatpush1.bf16.msra.mxu0 0
      %393 = vmatprep.subr.bf16.mxu0 0
      %394 = vmatpush1.bf16.msra.mxu0 0
      %395 = vmatprep.subr.bf16.mxu0 0
      %396 = vmatpush1.bf16.msra.mxu0 0
      %397 = vmatprep.mubr.bf16.mxu0 0
      %398 = vmatmul.mubr.bf16.gmra.mrb[0].mxu0 %v363
      %v399 = vpop.f32.mrb[0].mxu0
      %v400 = vadd.f32 %v335, %v399
      %v401 = vpop.f32.mrb[0].mxu0
      %v402 = vpop.f32.mrb[0].mxu0
      %v403 = vpop.f32.mrb[0].mxu0
      %404 = vdwg.mxu0
      %v405 = vld [vmem:[%s314] sm:$0xf]
      %v406 = vunpack.c.l.bf16 %v405
      %v407 = vadd.f32 %v400, %v406
      %v408 = vpack.c.bf16 %v407, %v407
      %v409 = vld [vmem:[%s4] sm:$0xf]
      %v410 = vld [vmem:[%s4 + $0x4] sm:$0xf]
      %v411 = vld [vmem:[%s4 + $0x8] sm:$0xf]
      %v412 = vld [vmem:[%s4 + $0xc] sm:$0xf]
      %v413 = vld [vmem:[%s5] sm:$0x1]
      %v415 = vlaneseq
      %v416 = vshrl.u32 %v415, 7
      %v417 = vsub.s32 0, %v416
      %v418 = vrot.slane %v413, %v417
      %v424 = vunpack.c.l.b16 %v409
      %v425 = vunpack.c.l.b16 %v410
      %v426 = vunpack.c.l.b16 %v411
      %v427 = vunpack.c.l.b16 %v412
      %v428 = vpack.c.b16 %v425, %v424
      %v429 = vpack.c.b16 %v427, %v426
      %vm432 = vcmask 261120
      %v434 = vsel %vm432, %v408, 0
      %436 = vmatprep.subr.bf16.mxu0 0
      %437 = vmatpush1.bf16.msra.mxu0 %v428
      %438 = vmatprep.subr.bf16.mxu0 0
      %439 = vmatpush1.bf16.msra.mxu0 %v429
      %440 = vmatprep.subr.bf16.mxu0 0
      %441 = vmatpush1.bf16.msra.mxu0 0
      %442 = vmatprep.subr.bf16.mxu0 0
      %443 = vmatpush1.bf16.msra.mxu0 0
      %444 = vmatprep.subr.bf16.mxu0 0
      %445 = vmatpush1.bf16.msra.mxu0 0
      %446 = vmatprep.subr.bf16.mxu0 0
      %447 = vmatpush1.bf16.msra.mxu0 0
      %448 = vmatprep.subr.bf16.mxu0 0
      %449 = vmatpush1.bf16.msra.mxu0 0
      %450 = vmatprep.subr.bf16.mxu0 0
      %451 = vmatpush1.bf16.msra.mxu0 0
      %452 = vmatprep.subr.bf16.mxu0 0
      %453 = vmatpush1.bf16.msra.mxu0 0
      %454 = vmatprep.subr.bf16.mxu0 0
      %455 = vmatpush1.bf16.msra.mxu0 0
      %456 = vmatprep.subr.bf16.mxu0 0
      %457 = vmatpush1.bf16.msra.mxu0 0
      %458 = vmatprep.subr.bf16.mxu0 0
      %459 = vmatpush1.bf16.msra.mxu0 0
      %460 = vmatprep.subr.bf16.mxu0 0
      %461 = vmatpush1.bf16.msra.mxu0 0
      %462 = vmatprep.subr.bf16.mxu0 0
      %463 = vmatpush1.bf16.msra.mxu0 0
      %464 = vmatprep.subr.bf16.mxu0 0
      %465 = vmatpush1.bf16.msra.mxu0 0
      %466 = vmatprep.subr.bf16.mxu0 0
      %467 = vmatpush1.bf16.msra.mxu0 0
      %468 = vmatprep.mubr.bf16.mxu0 0
      %469 = vmatmul.mubr.bf16.gmra.mrb[0].mxu0 %v434
      %v470 = vpop.f32.mrb[0].mxu0
      %v471 = vadd.f32 %v418, %v470
      %v472 = vpop.f32.mrb[0].mxu0
      %v473 = vpop.f32.mrb[0].mxu0
      %v474 = vpop.f32.mrb[0].mxu0
      %475 = vdwg.mxu0
      %v476 = vsub.f32 0.0, %v471
      %v477 = vmul.f32 %v476, 1.442695
      %v478 = vpow.pop %v477
      %v479 = vadd.f32 %v478, 1.0
      %v480 = vrcp.pop %v479
      %482 = vrot.lane.b32.xlu0 %v480, 96
      %v483 = vpop.permute.xlu0 %482
      %v485 = vmul.f32 %v471, %v483
      %v486 = vpack.c.bf16 %v485, %v485
      %v487 = vld [vmem:[%s6] sm:$0xf]
      %v488 = vld [vmem:[%s6 + $0x4] sm:$0xf]
      %v489 = vld [vmem:[%s6 + $0x8] sm:$0xf]
      %v490 = vld [vmem:[%s6 + $0xc] sm:$0xf]
      %v495 = vunpack.c.l.b16 %v487
      %v496 = vunpack.c.l.b16 %v488
      %v497 = vunpack.c.l.b16 %v489
      %v498 = vunpack.c.l.b16 %v490
      %v499 = vpack.c.b16 %v496, %v495
      %v500 = vpack.c.b16 %v498, %v497
      %v504 = vsel %vm432, %v486, 0
      %506 = vmatprep.subr.bf16.mxu0 0
      %507 = vmatpush1.bf16.msra.mxu0 %v499
      %508 = vmatprep.subr.bf16.mxu0 0
      %509 = vmatpush1.bf16.msra.mxu0 %v500
      %510 = vmatprep.subr.bf16.mxu0 0
      %511 = vmatpush1.bf16.msra.mxu0 0
      %512 = vmatprep.subr.bf16.mxu0 0
      %513 = vmatpush1.bf16.msra.mxu0 0
      %514 = vmatprep.subr.bf16.mxu0 0
      %515 = vmatpush1.bf16.msra.mxu0 0
      %516 = vmatprep.subr.bf16.mxu0 0
      %517 = vmatpush1.bf16.msra.mxu0 0
      %518 = vmatprep.subr.bf16.mxu0 0
      %519 = vmatpush1.bf16.msra.mxu0 0
      %520 = vmatprep.subr.bf16.mxu0 0
      %521 = vmatpush1.bf16.msra.mxu0 0
      %522 = vmatprep.subr.bf16.mxu0 0
      %523 = vmatpush1.bf16.msra.mxu0 0
      %524 = vmatprep.subr.bf16.mxu0 0
      %525 = vmatpush1.bf16.msra.mxu0 0
      %526 = vmatprep.subr.bf16.mxu0 0
      %527 = vmatpush1.bf16.msra.mxu0 0
      %528 = vmatprep.subr.bf16.mxu0 0
      %529 = vmatpush1.bf16.msra.mxu0 0
      %530 = vmatprep.subr.bf16.mxu0 0
      %531 = vmatpush1.bf16.msra.mxu0 0
      %532 = vmatprep.subr.bf16.mxu0 0
      %533 = vmatpush1.bf16.msra.mxu0 0
      %534 = vmatprep.subr.bf16.mxu0 0
      %535 = vmatpush1.bf16.msra.mxu0 0
      %536 = vmatprep.subr.bf16.mxu0 0
      %537 = vmatpush1.bf16.msra.mxu0 0
      %538 = vmatprep.mubr.bf16.mxu0 0
      %539 = vmatmul.mubr.bf16.gmra.mrb[0].mxu0 %v504
      %v540 = vpop.f32.mrb[0].mxu0
      %v541 = vadd.f32 0.0, %v540
      %v542 = vpop.f32.mrb[0].mxu0
      %v543 = vpop.f32.mrb[0].mxu0
      %v544 = vpop.f32.mrb[0].mxu0
      %545 = vdwg.mxu0
      %546 = vrot.lane.b32.xlu0 %v499, 96
      %v547 = vpop.permute.xlu0 %546
      %548 = vrot.lane.b32.xlu0 %v500, 96
      %v549 = vpop.permute.xlu0 %548
      %552 = vmatprep.subr.bf16.mxu0 0
      %553 = vmatpush1.bf16.msra.mxu0 %v547
      %554 = vmatprep.subr.bf16.mxu0 0
      %555 = vmatpush1.bf16.msra.mxu0 %v549
      %556 = vmatprep.subr.bf16.mxu0 0
      %557 = vmatpush1.bf16.msra.mxu0 0
      %558 = vmatprep.subr.bf16.mxu0 0
      %559 = vmatpush1.bf16.msra.mxu0 0
      %560 = vmatprep.subr.bf16.mxu0 0
      %561 = vmatpush1.bf16.msra.mxu0 0
      %562 = vmatprep.subr.bf16.mxu0 0
      %563 = vmatpush1.bf16.msra.mxu0 0
      %564 = vmatprep.subr.bf16.mxu0 0
      %565 = vmatpush1.bf16.msra.mxu0 0
      %566 = vmatprep.subr.bf16.mxu0 0
      %567 = vmatpush1.bf16.msra.mxu0 0
      %568 = vmatprep.subr.bf16.mxu0 0
      %569 = vmatpush1.bf16.msra.mxu0 0
      %570 = vmatprep.subr.bf16.mxu0 0
      %571 = vmatpush1.bf16.msra.mxu0 0
      %572 = vmatprep.subr.bf16.mxu0 0
      %573 = vmatpush1.bf16.msra.mxu0 0
      %574 = vmatprep.subr.bf16.mxu0 0
      %575 = vmatpush1.bf16.msra.mxu0 0
      %576 = vmatprep.subr.bf16.mxu0 0
      %577 = vmatpush1.bf16.msra.mxu0 0
      %578 = vmatprep.subr.bf16.mxu0 0
      %579 = vmatpush1.bf16.msra.mxu0 0
      %580 = vmatprep.subr.bf16.mxu0 0
      %581 = vmatpush1.bf16.msra.mxu0 0
      %582 = vmatprep.subr.bf16.mxu0 0
      %583 = vmatpush1.bf16.msra.mxu0 0
      %584 = vmatprep.mubr.bf16.mxu0 0
      %585 = vmatmul.mubr.bf16.gmra.mrb[0].mxu0 %v504
      %v586 = vpop.f32.mrb[0].mxu0
      %v587 = vadd.f32 0.0, %v586
      %v588 = vpop.f32.mrb[0].mxu0
      %v589 = vpop.f32.mrb[0].mxu0
      %v590 = vpop.f32.mrb[0].mxu0
      %591 = vdwg.mxu0
      %v592 = vld [vmem:[%s7] sm:$0x1]
      %v594 = vlaneseq
      %v595 = vshrl.u32 %v594, 7
      %v596 = vsub.s32 0, %v595
      %v597 = vrot.slane %v592, %v596
      %v599 = vadd.f32 %v597, %v541
      %v600 = vadd.f32 %v597, 0.0
      %v602 = vrot.slane %v587, 7
      %vm604 = vcmask 1040384
      %v605 = vsel %vm604, 0.0, %v602
      %v606 = vadd.f32 %v599, %v605
      %v607 = vadd.f32 %v600, %v602
      %v608 = vmax.f32 %v606, 0.0
      %v609 = vmax.f32 %v607, 0.0
      %v610 = vpack.c.bf16 %v609, %v608
      %v612 = vunpack.c.l.b16 %v610
      %v613 = vunpack.c.h.b16 %v610
      %v614 = vpack.c.b16 %v612, %v612
      %v615 = vpack.c.b16 %v613, %v613
      %vm618 = vcmask 257024
      %619 = vst.msk [vmem:[%s319] sm:$0xf] %vm618, %v614
      %vm620 = vcmask 253952
      %vm621 = vsmask.f32 256
      %vm622 = vmand %vm620, %vm621
      %v623 = vld [vmem:[%s319 + $0x4] sm:$0x1]
      %v624 = vsel %vm622, %v615, %v623
      %625 = vst [vmem:[%s319 + $0x4] sm:$0x1] %v624
      %p626 = scmp.lt.s32.totalorder %s19, 1
      %s627 = scalar_select %p626, %s19, 1
      %s628 = smul.addr %s627, 2
      %s629 = smul.addr %s628, 4
      %s630 = scalar_lea.vmem %s8, %s629
      // Predicated region
      $region53: #{_lambda_.11} parent=51 // pred_check
        %p631 = pneg %p215
      $region54: #{_lambda_.11} parent=51 // pred_check_branch
        %633 = sbr.rel (%p631) target = $region56
      $region55: #{_lambda_.11} parent=51 // pred_region
        _
      $region56: #{_lambda_.11} parent=51 // pred_fallthru
        _
    $region52: #{_lambda_.11} parent=5 // pred_fallthru
      _
    %p634 = scmp.le.s32.totalorder 2, %s14
    // Predicated region
    $region57: #{_lambda_.11} parent=5 // pred_check
      %p635 = pneg %p634
    $region58: #{_lambda_.11} parent=5 // pred_check_branch
      %637 = sbr.rel (%p635) target = $region60
    $region59: #{_lambda_.11} parent=5 // pred_region
      %s638 = ssub.s32 %s14, 2
      // Predicated region
      $region61: #{_lambda_.11} parent=59 // pred_check
        %p639 = pneg %p221
      $region62: #{_lambda_.11} parent=59 // pred_check_branch
        %641 = sbr.rel (%p639) target = $region64
      $region63: #{_lambda_.11} parent=59 // pred_region
        %p642 = scmp.lt.s32.totalorder %s20, 1
        %s643 = scalar_select %p642, %s20, 1
        %s644 = smul.addr %s643, 2
        %s645 = smul.addr %s644, 4
        %s646 = scalar_lea.vmem %s8, %s645
      $region64: #{_lambda_.11} parent=59 // pred_fallthru
        _
    $region60: #{_lambda_.11} parent=5 // pred_fallthru
      _
  $region6: #{_lambda_.11} parent=0 // loop_footer
    %s18 = sadd.s32 1, %s14
  $region7: #{_lambda_.11} parent=0 // loop_footer_branch
    %13 = sbr.rel target = $region3
  $region8: #{_lambda_.11} parent=0 // loop_exit
    _

// kernel: _lambda_.12
$region0: #{_lambda_.12}
  #allocation0 [shape = 'u32[]', space=smem, size = 0x4, offset = 0x4, fixed_abs, tag = 'smem constant byte address 0x4 - core index']
  #allocation1 [shape = 'u32[144,128]{1,0:T(1,128)}', space=vmem, size = 0x12000, scoped, tag = 'internal scratch']
  %s0 = inlined_call_operand.vmem [shape: bf16[2,18,16], index: 0, kind: input, shape index: {}]
  %s1 = inlined_call_operand.vmem [shape: bf16[2,18,16], index: 1, kind: input, shape index: {}]
  %s2 = inlined_call_operand.vmem [shape: bf16[16,32], index: 2, kind: input, shape index: {}]
  %s3 = inlined_call_operand.vmem [shape: f32[1,32], index: 3, kind: input, shape index: {}]
  %s4 = inlined_call_operand.vmem [shape: bf16[16,32], index: 4, kind: input, shape index: {}]
  %s5 = inlined_call_operand.vmem [shape: f32[1,16], index: 5, kind: input, shape index: {}]
  %s6 = inlined_call_operand.vmem [shape: bf16[2,19,16], index: 6, kind: output, shape index: {}]
  %s7 = sld [smem:[#allocation0]]
  $region57: #{_lambda_.12} parent=0
    _
  %s9 = ssub.s32 1, %s7
  %s10 = scalar_select 0, %s9, %s7
  loop: start=0, step=1, limit=4
  $region2: #{_lambda_.12} parent=0 // loop_pre_header
    _
  $region3: #{_lambda_.12} parent=0 // loop_header
    %s12 = sphi 0, %s16
    %p13 = scmp.ge.s32.totalorder %s12, 4
    %s22 = sphi 0, %s24
    %s25 = sphi 0, %s22
    %s26 = sphi 0, %s25
    %s42 = sphi 0, %s26
    %s48 = sphi 0, %s50
    %s51 = sphi 0, %s48
    %s52 = sphi 0, %s51
    %s68 = sphi 0, %s52
    %s72 = sphi 0, %s72
    %s74 = sphi 0, %s72
    %s75 = sphi 0, %s74
    %s89 = sphi 0, %s75
    %s93 = sphi 0, %s93
    %s95 = sphi 0, %s93
    %s96 = sphi 0, %s95
    %s110 = sphi 0, %s96
    %s114 = sphi 0, %s114
    %s116 = sphi 0, %s114
    %s117 = sphi 0, %s116
    %s131 = sphi 0, %s117
    %s135 = sphi 0, %s135
    %s137 = sphi 0, %s135
    %s138 = sphi 0, %s137
    %s152 = sphi 0, %s138
    %s158 = sphi 0, %s160
    %s161 = sphi 0, %s158
    %s162 = sphi 0, %s161
    %s178 = sphi 0, %s162
  $region4: #{_lambda_.12} parent=0 // loop_header_branch
    %15 = sbr.rel (%p13) target = $region8
  $region5: #{_lambda_.12} parent=0 // loop_body
    %s17 = ssub.s32 %s12, 1
    %s18 = ssub.s32 %s12, 2
    %s19 = sadd.s32 %s12, 1
    %s20 = ssub.s32 %s12, %s19
    %p21 = scmp.eq.s32.totalorder %s20, 0
    %s23 = sadd.s32 %s22, 1
    %s24 = scalar_select %p21, %s22, %s23
    %p27 = pneg %p21
    %p28 = scmp.eq.s32.totalorder %s12, 1
    %p29 = por %p27, %p28
    %p30 = scmp.ne.s32.totalorder %s22, %s25
    %p31 = scmp.eq.s32.totalorder %s12, 0
    %p32 = por %p30, %p31
    %p33 = scmp.ne.s32.totalorder %s22, %s25
    %p34 = scmp.eq.s32.totalorder %s17, 1
    %p35 = por %p33, %p34
    %p36 = scmp.ne.s32.totalorder %s25, %s26
    %p37 = scmp.eq.s32.totalorder %s17, 0
    %p38 = por %p36, %p37
    %p39 = scmp.ne.s32.totalorder %s25, %s26
    %p40 = scmp.eq.s32.totalorder %s18, 1
    %p41 = por %p39, %p40
    %p43 = scmp.ne.s32.totalorder %s26, %s42
    %p44 = scmp.eq.s32.totalorder %s18, 0
    %p45 = por %p43, %p44
    %s46 = ssub.s32 %s12, %s19
    %p47 = scmp.eq.s32.totalorder %s46, 0
    %s49 = sadd.s32 %s48, 1
    %s50 = scalar_select %p47, %s48, %s49
    %p53 = pneg %p47
    %p54 = scmp.eq.s32.totalorder %s12, 1
    %p55 = por %p53, %p54
    %p56 = scmp.ne.s32.totalorder %s48, %s51
    %p57 = scmp.eq.s32.totalorder %s12, 0
    %p58 = por %p56, %p57
    %p59 = scmp.ne.s32.totalorder %s48, %s51
    %p60 = scmp.eq.s32.totalorder %s17, 1
    %p61 = por %p59, %p60
    %p62 = scmp.ne.s32.totalorder %s51, %s52
    %p63 = scmp.eq.s32.totalorder %s17, 0
    %p64 = por %p62, %p63
    %p65 = scmp.ne.s32.totalorder %s51, %s52
    %p66 = scmp.eq.s32.totalorder %s18, 1
    %p67 = por %p65, %p66
    %p69 = scmp.ne.s32.totalorder %s52, %s68
    %p70 = scmp.eq.s32.totalorder %s18, 0
    %p71 = por %p69, %p70
    %s73 = sadd.s32 %s72, 1
    %p76 = scmp.eq.s32.totalorder %s12, 1
    %p77 = scmp.ne.s32.totalorder %s72, %s74
    %p78 = scmp.eq.s32.totalorder %s12, 0
    %p79 = por %p77, %p78
    %p80 = scmp.ne.s32.totalorder %s72, %s74
    %p81 = scmp.eq.s32.totalorder %s17, 1
    %p82 = por %p80, %p81
    %p83 = scmp.ne.s32.totalorder %s74, %s75
    %p84 = scmp.eq.s32.totalorder %s17, 0
    %p85 = por %p83, %p84
    %p86 = scmp.ne.s32.totalorder %s74, %s75
    %p87 = scmp.eq.s32.totalorder %s18, 1
    %p88 = por %p86, %p87
    %p90 = scmp.ne.s32.totalorder %s75, %s89
    %p91 = scmp.eq.s32.totalorder %s18, 0
    %p92 = por %p90, %p91
    %s94 = sadd.s32 %s93, 1
    %p97 = scmp.eq.s32.totalorder %s12, 1
    %p98 = scmp.ne.s32.totalorder %s93, %s95
    %p99 = scmp.eq.s32.totalorder %s12, 0
    %p100 = por %p98, %p99
    %p101 = scmp.ne.s32.totalorder %s93, %s95
    %p102 = scmp.eq.s32.totalorder %s17, 1
    %p103 = por %p101, %p102
    %p104 = scmp.ne.s32.totalorder %s95, %s96
    %p105 = scmp.eq.s32.totalorder %s17, 0
    %p106 = por %p104, %p105
    %p107 = scmp.ne.s32.totalorder %s95, %s96
    %p108 = scmp.eq.s32.totalorder %s18, 1
    %p109 = por %p107, %p108
    %p111 = scmp.ne.s32.totalorder %s96, %s110
    %p112 = scmp.eq.s32.totalorder %s18, 0
    %p113 = por %p111, %p112
    %s115 = sadd.s32 %s114, 1
    %p118 = scmp.eq.s32.totalorder %s12, 1
    %p119 = scmp.ne.s32.totalorder %s114, %s116
    %p120 = scmp.eq.s32.totalorder %s12, 0
    %p121 = por %p119, %p120
    %p122 = scmp.ne.s32.totalorder %s114, %s116
    %p123 = scmp.eq.s32.totalorder %s17, 1
    %p124 = por %p122, %p123
    %p125 = scmp.ne.s32.totalorder %s116, %s117
    %p126 = scmp.eq.s32.totalorder %s17, 0
    %p127 = por %p125, %p126
    %p128 = scmp.ne.s32.totalorder %s116, %s117
    %p129 = scmp.eq.s32.totalorder %s18, 1
    %p130 = por %p128, %p129
    %p132 = scmp.ne.s32.totalorder %s117, %s131
    %p133 = scmp.eq.s32.totalorder %s18, 0
    %p134 = por %p132, %p133
    %s136 = sadd.s32 %s135, 1
    %p139 = scmp.eq.s32.totalorder %s12, 1
    %p140 = scmp.ne.s32.totalorder %s135, %s137
    %p141 = scmp.eq.s32.totalorder %s12, 0
    %p142 = por %p140, %p141
    %p143 = scmp.ne.s32.totalorder %s135, %s137
    %p144 = scmp.eq.s32.totalorder %s17, 1
    %p145 = por %p143, %p144
    %p146 = scmp.ne.s32.totalorder %s137, %s138
    %p147 = scmp.eq.s32.totalorder %s17, 0
    %p148 = por %p146, %p147
    %p149 = scmp.ne.s32.totalorder %s137, %s138
    %p150 = scmp.eq.s32.totalorder %s18, 1
    %p151 = por %p149, %p150
    %p153 = scmp.ne.s32.totalorder %s138, %s152
    %p154 = scmp.eq.s32.totalorder %s18, 0
    %p155 = por %p153, %p154
    %s156 = ssub.s32 %s12, %s19
    %p157 = scmp.eq.s32.totalorder %s156, 0
    %s159 = sadd.s32 %s158, 1
    %s160 = scalar_select %p157, %s158, %s159
    %p163 = pneg %p157
    %p164 = scmp.eq.s32.totalorder %s12, 1
    %p165 = por %p163, %p164
    %p166 = scmp.ne.s32.totalorder %s158, %s161
    %p167 = scmp.eq.s32.totalorder %s12, 0
    %p168 = por %p166, %p167
    %p169 = scmp.ne.s32.totalorder %s158, %s161
    %p170 = scmp.eq.s32.totalorder %s17, 1
    %p171 = por %p169, %p170
    %p172 = scmp.ne.s32.totalorder %s161, %s162
    %p173 = scmp.eq.s32.totalorder %s17, 0
    %p174 = por %p172, %p173
    %p175 = scmp.ne.s32.totalorder %s161, %s162
    %p176 = scmp.eq.s32.totalorder %s18, 1
    %p177 = por %p175, %p176
    %p179 = scmp.ne.s32.totalorder %s162, %s178
    %p180 = scmp.eq.s32.totalorder %s18, 0
    %p181 = por %p179, %p180
    %p182 = scmp.le.s32.totalorder 1, %s12
    %p183 = scmp.lt.s32.totalorder %s12, 3
    %p184 = pnand %p182, %p183
    %p185 = pneg %p184
    // Predicated region
    $region9: #{_lambda_.12} parent=5 // pred_check
      _
    $region10: #{_lambda_.12} parent=5 // pred_check_branch
      %187 = sbr.rel (%p184) target = $region12
    $region11: #{_lambda_.12} parent=5 // pred_region
      %s188 = ssub.s32 %s12, 1
      // Predicated region
      $region13: #{_lambda_.12} parent=11 // pred_check
        %p189 = pneg %p85
      $region14: #{_lambda_.12} parent=11 // pred_check_branch
        %191 = sbr.rel (%p189) target = $region16
      $region15: #{_lambda_.12} parent=11 // pred_region
        _
      $region16: #{_lambda_.12} parent=11 // pred_fallthru
        _
      // Predicated region
      $region17: #{_lambda_.12} parent=11 // pred_check
        %p192 = pneg %p106
      $region18: #{_lambda_.12} parent=11 // pred_check_branch
        %194 = sbr.rel (%p192) target = $region20
      $region19: #{_lambda_.12} parent=11 // pred_region
        _
      $region20: #{_lambda_.12} parent=11 // pred_fallthru
        _
      // Predicated region
      $region21: #{_lambda_.12} parent=11 // pred_check
        %p195 = pneg %p127
      $region22: #{_lambda_.12} parent=11 // pred_check_branch
        %197 = sbr.rel (%p195) target = $region24
      $region23: #{_lambda_.12} parent=11 // pred_region
        _
      $region24: #{_lambda_.12} parent=11 // pred_fallthru
        _
      // Predicated region
      $region25: #{_lambda_.12} parent=11 // pred_check
        %p198 = pneg %p148
      $region26: #{_lambda_.12} parent=11 // pred_check_branch
        %200 = sbr.rel (%p198) target = $region28
      $region27: #{_lambda_.12} parent=11 // pred_region
        _
      $region28: #{_lambda_.12} parent=11 // pred_fallthru
        _
    $region12: #{_lambda_.12} parent=5 // pred_fallthru
      _
    %p201 = scmp.lt.s32.totalorder %s12, 2
    // Predicated region
    $region29: #{_lambda_.12} parent=5 // pred_check
      %p202 = pneg %p201
    $region30: #{_lambda_.12} parent=5 // pred_check_branch
      %204 = sbr.rel (%p202) target = $region32
    $region31: #{_lambda_.12} parent=5 // pred_region
      // Predicated region
      $region33: #{_lambda_.12} parent=31 // pred_check
        %p205 = pneg %p32
      $region34: #{_lambda_.12} parent=31 // pred_check_branch
        %207 = sbr.rel (%p205) target = $region36
      $region35: #{_lambda_.12} parent=31 // pred_region
        %p208 = scmp.lt.s32.totalorder %s12, 1
        %s209 = scalar_select %p208, %s12, 1
        %s210 = smul.addr %s209, 3
        %s211 = smul.addr %s210, 4
        %s212 = scalar_lea.vmem %s0, %s211
      $region36: #{_lambda_.12} parent=31 // pred_fallthru
        _
      // Predicated region
      $region37: #{_lambda_.12} parent=31 // pred_check
        %p213 = pneg %p58
      $region38: #{_lambda_.12} parent=31 // pred_check_branch
        %215 = sbr.rel (%p213) target = $region40
      $region39: #{_lambda_.12} parent=31 // pred_region
        %p216 = scmp.lt.s32.totalorder %s12, 1
        %s217 = scalar_select %p216, %s12, 1
        %s218 = smul.addr %s217, 3
        %s219 = smul.addr %s218, 4
        %s220 = scalar_lea.vmem %s1, %s219
      $region40: #{_lambda_.12} parent=31 // pred_fallthru
        _
    $region32: #{_lambda_.12} parent=5 // pred_fallthru
      _
    %p221 = scmp.le.s32.totalorder 1, %s12
    %p222 = scmp.lt.s32.totalorder %s12, 3
    %p223 = pnand %p221, %p222
    %p224 = pneg %p223
    // Predicated region
    $region41: #{_lambda_.12} parent=5 // pred_check
      _
    $region42: #{_lambda_.12} parent=5 // pred_check_branch
      %226 = sbr.rel (%p223) target = $region44
    $region43: #{_lambda_.12} parent=5 // pred_region
      %s227 = ssub.s32 %s12, 1
      %p228 = scmp.lt.s32.totalorder %s17, 1
      %s229 = scalar_select %p228, %s17, 1
      %s230 = smul.addr %s229, 3
      %s231 = smul.addr %s230, 4
      %s232 = scalar_lea.vmem %s0, %s231
      %p233 = pneg %p38
      %p234 = pneg %p35
      %p235 = scmp.lt.s32.totalorder %s17, 1
      %s236 = scalar_select %p235, %s17, 1
      %s237 = smul.addr %s236, 3
      %s238 = smul.addr %s237, 4
      %s239 = scalar_lea.vmem %s1, %s238
      %p240 = pneg %p64
      %p241 = pneg %p61
      %p242 = pneg %p85
      %p243 = pneg %p82
      %p244 = pneg %p106
      %p245 = pneg %p103
      %p246 = pneg %p127
      %p247 = pneg %p124
      %p248 = pneg %p148
      %p249 = pneg %p145
      %p250 = pneg %p174
      %p251 = pneg %p171
      %p252 = scmp.lt.s32.totalorder %s17, 1
      %s253 = scalar_select %p252, %s17, 1
      %s254 = smul.addr %s253, 3
      %s255 = smul.addr %s254, 4
      %s256 = scalar_lea.vmem %s6, %s255
      %p257 = scmp.lt.s32.totalorder %s17, 1
      %s258 = scalar_select %p257, %s17, 1
      %s259 = smul.addr %s258, 3
      %s260 = smul.addr %s259, 4
      %s261 = scalar_lea.vmem %s0, %s260
      %p262 = scmp.lt.s32.totalorder %s17, 1
      %s263 = scalar_select %p262, %s17, 1
      %s264 = smul.addr %s263, 3
      %s265 = smul.addr %s264, 4
      %s266 = scalar_lea.vmem %s1, %s265
      %p267 = scmp.lt.s32.totalorder %s17, 1
      %s268 = scalar_select %p267, %s17, 1
      %s269 = smul.addr %s268, 3
      %s270 = smul.addr %s269, 4
      %s271 = scalar_lea.vmem %s6, %s270
      %v273 = vld [vmem:[%s261] sm:$0xf]
      %v274 = vld [vmem:[%s261 + $0x4] sm:$0xf]
      %v275 = vld [vmem:[%s261 + $0x8] sm:$0x1]
      %v276 = vunpack.c.l.bf16 %v273
      %v277 = vunpack.c.l.bf16 %v274
      %v278 = vunpack.c.l.bf16 %v275
      %v279 = vld [vmem:[%s266] sm:$0xf]
      %v280 = vld [vmem:[%s266 + $0x4] sm:$0xf]
      %v281 = vld [vmem:[%s266 + $0x8] sm:$0x1]
      %v282 = vunpack.c.l.bf16 %v279
      %v283 = vunpack.c.l.bf16 %v280
      %v284 = vunpack.c.l.bf16 %v281
      %v285 = vadd.f32 %v276, %v282
      %v286 = vadd.f32 %v277, %v283
      %v287 = vadd.f32 %v278, %v284
      %v288 = vpack.c.bf16 %v286, %v285
      %v289 = vpack.c.bf16 %v287, %v287
      %v290 = vld [vmem:[%s2] sm:$0xf]
      %v291 = vld [vmem:[%s2 + $0x4] sm:$0xf]
      %v292 = vld [vmem:[%s3] sm:$0x1]
      %v294 = vlaneseq
      %v295 = vshrl.u32 %v294, 7
      %v296 = vsub.s32 0, %v295
      %v297 = vrot.slane %v292, %v296
      %v301 = vunpack.c.l.b16 %v290
      %v302 = vunpack.c.l.b16 %v291
      %v303 = vpack.c.b16 %v302, %v301
      %vm305 = vcmask 130048
      %v307 = vsel %vm305, %v288, 0
      %v310 = vsel %vm305, %v289, 0
      %312 = vmatprep.subr.bf16.mxu0 0
      %313 = vmatpush1.bf16.msra.mxu0 %v303
      %314 = vmatprep.subr.bf16.mxu0 0
      %315 = vmatpush1.bf16.msra.mxu0 0
      %316 = vmatprep.subr.bf16.mxu0 0
      %317 = vmatpush1.bf16.msra.mxu0 0
      %318 = vmatprep.subr.bf16.mxu0 0
      %319 = vmatpush1.bf16.msra.mxu0 0
      %320 = vmatprep.subr.bf16.mxu0 0
      %321 = vmatpush1.bf16.msra.mxu0 0
      %322 = vmatprep.subr.bf16.mxu0 0
      %323 = vmatpush1.bf16.msra.mxu0 0
      %324 = vmatprep.subr.bf16.mxu0 0
      %325 = vmatpush1.bf16.msra.mxu0 0
      %326 = vmatprep.subr.bf16.mxu0 0
      %327 = vmatpush1.bf16.msra.mxu0 0
      %328 = vmatprep.subr.bf16.mxu0 0
      %329 = vmatpush1.bf16.msra.mxu0 0
      %330 = vmatprep.subr.bf16.mxu0 0
      %331 = vmatpush1.bf16.msra.mxu0 0
      %332 = vmatprep.subr.bf16.mxu0 0
      %333 = vmatpush1.bf16.msra.mxu0 0
      %334 = vmatprep.subr.bf16.mxu0 0
      %335 = vmatpush1.bf16.msra.mxu0 0
      %336 = vmatprep.subr.bf16.mxu0 0
      %337 = vmatpush1.bf16.msra.mxu0 0
      %338 = vmatprep.subr.bf16.mxu0 0
      %339 = vmatpush1.bf16.msra.mxu0 0
      %340 = vmatprep.subr.bf16.mxu0 0
      %341 = vmatpush1.bf16.msra.mxu0 0
      %342 = vmatprep.subr.bf16.mxu0 0
      %343 = vmatpush1.bf16.msra.mxu0 0
      %344 = vmatprep.mubr.bf16.mxu0 0
      %345 = vmatmul.mubr.bf16.gmra.mrb[0].mxu0 %v307
      %v346 = vpop.f32.mrb[0].mxu0
      %v347 = vadd.f32 %v297, %v346
      %v348 = vpop.f32.mrb[0].mxu0
      %v349 = vpop.f32.mrb[0].mxu0
      %v350 = vadd.f32 %v297, %v349
      %v351 = vpop.f32.mrb[0].mxu0
      %352 = vmatprep.mubr.bf16.mxu0 0
      %353 = vmatmul.mubr.bf16.gmra.mrb[0].mxu0 %v310
      %v354 = vpop.f32.mrb[0].mxu0
      %v355 = vadd.f32 %v297, %v354
      %v356 = vpop.f32.mrb[0].mxu0
      %v357 = vpop.f32.mrb[0].mxu0
      %v358 = vpop.f32.mrb[0].mxu0
      %359 = vdwg.mxu0
      %v360 = vsub.f32 0.0, %v347
      %v361 = vsub.f32 0.0, %v350
      %v362 = vsub.f32 0.0, %v355
      %v363 = vmul.f32 %v360, 1.442695
      %v364 = vpow.pop %v363
      %v365 = vmul.f32 %v361, 1.442695
      %v366 = vpow.pop %v365
      %v367 = vmul.f32 %v362, 1.442695
      %v368 = vpow.pop %v367
      %v369 = vadd.f32 %v364, 1.0
      %v370 = vadd.f32 %v366, 1.0
      %v371 = vadd.f32 %v368, 1.0
      %v372 = vrcp.pop %v369
      %v373 = vrcp.pop %v370
      %v374 = vrcp.pop %v371
      %378 = vrot.lane.b32.xlu0 %v372, 112
      %v379 = vpop.permute.xlu0 %378
      %380 = vrot.lane.b32.xlu0 %v373, 112
      %v381 = vpop.permute.xlu0 %380
      %382 = vrot.lane.b32.xlu0 %v374, 112
      %v383 = vpop.permute.xlu0 %382
      %v387 = vmul.f32 %v347, %v379
      %v388 = vmul.f32 %v350, %v381
      %v389 = vmul.f32 %v355, %v383
      %v390 = vpack.c.bf16 %v388, %v387
      %v391 = vpack.c.bf16 %v389, %v389
      %v392 = vld [vmem:[%s4] sm:$0xf]
      %v393 = vld [vmem:[%s4 + $0x4] sm:$0xf]
      %v396 = vunpack.c.l.b16 %v392
      %v397 = vunpack.c.l.b16 %v393
      %v398 = vpack.c.b16 %v397, %v396
      %v401 = vsel %vm305, %v390, 0
      %v404 = vsel %vm305, %v391, 0
      %406 = vmatprep.subr.bf16.mxu0 0
      %407 = vmatpush1.bf16.msra.mxu0 %v398
      %408 = vmatprep.subr.bf16.mxu0 0
      %409 = vmatpush1.bf16.msra.mxu0 0
      %410 = vmatprep.subr.bf16.mxu0 0
      %411 = vmatpush1.bf16.msra.mxu0 0
      %412 = vmatprep.subr.bf16.mxu0 0
      %413 = vmatpush1.bf16.msra.mxu0 0
      %414 = vmatprep.subr.bf16.mxu0 0
      %415 = vmatpush1.bf16.msra.mxu0 0
      %416 = vmatprep.subr.bf16.mxu0 0
      %417 = vmatpush1.bf16.msra.mxu0 0
      %418 = vmatprep.subr.bf16.mxu0 0
      %419 = vmatpush1.bf16.msra.mxu0 0
      %420 = vmatprep.subr.bf16.mxu0 0
      %421 = vmatpush1.bf16.msra.mxu0 0
      %422 = vmatprep.subr.bf16.mxu0 0
      %423 = vmatpush1.bf16.msra.mxu0 0
      %424 = vmatprep.subr.bf16.mxu0 0
      %425 = vmatpush1.bf16.msra.mxu0 0
      %426 = vmatprep.subr.bf16.mxu0 0
      %427 = vmatpush1.bf16.msra.mxu0 0
      %428 = vmatprep.subr.bf16.mxu0 0
      %429 = vmatpush1.bf16.msra.mxu0 0
      %430 = vmatprep.subr.bf16.mxu0 0
      %431 = vmatpush1.bf16.msra.mxu0 0
      %432 = vmatprep.subr.bf16.mxu0 0
      %433 = vmatpush1.bf16.msra.mxu0 0
      %434 = vmatprep.subr.bf16.mxu0 0
      %435 = vmatpush1.bf16.msra.mxu0 0
      %436 = vmatprep.subr.bf16.mxu0 0
      %437 = vmatpush1.bf16.msra.mxu0 0
      %438 = vmatprep.mubr.bf16.mxu0 0
      %439 = vmatmul.mubr.bf16.gmra.mrb[0].mxu0 %v401
      %v440 = vpop.f32.mrb[0].mxu0
      %v441 = vadd.f32 0.0, %v440
      %v442 = vpop.f32.mrb[0].mxu0
      %v443 = vpop.f32.mrb[0].mxu0
      %v444 = vadd.f32 0.0, %v443
      %v445 = vpop.f32.mrb[0].mxu0
      %446 = vmatprep.mubr.bf16.mxu0 0
      %447 = vmatmul.mubr.bf16.gmra.mrb[0].mxu0 %v404
      %v448 = vpop.f32.mrb[0].mxu0
      %v449 = vadd.f32 0.0, %v448
      %v450 = vpop.f32.mrb[0].mxu0
      %v451 = vpop.f32.mrb[0].mxu0
      %v452 = vpop.f32.mrb[0].mxu0
      %453 = vdwg.mxu0
      %454 = vrot.lane.b32.xlu0 %v398, 112
      %v455 = vpop.permute.xlu0 %454
      %457 = vmatprep.subr.bf16.mxu0 0
      %458 = vmatpush1.bf16.msra.mxu0 %v455
      %459 = vmatprep.subr.bf16.mxu0 0
      %460 = vmatpush1.bf16.msra.mxu0 0
      %461 = vmatprep.subr.bf16.mxu0 0
      %462 = vmatpush1.bf16.msra.mxu0 0
      %463 = vmatprep.subr.bf16.mxu0 0
      %464 = vmatpush1.bf16.msra.mxu0 0
      %465 = vmatprep.subr.bf16.mxu0 0
      %466 = vmatpush1.bf16.msra.mxu0 0
      %467 = vmatprep.subr.bf16.mxu0 0
      %468 = vmatpush1.bf16.msra.mxu0 0
      %469 = vmatprep.subr.bf16.mxu0 0
      %470 = vmatpush1.bf16.msra.mxu0 0
      %471 = vmatprep.subr.bf16.mxu0 0
      %472 = vmatpush1.bf16.msra.mxu0 0
      %473 = vmatprep.subr.bf16.mxu0 0
      %474 = vmatpush1.bf16.msra.mxu0 0
      %475 = vmatprep.subr.bf16.mxu0 0
      %476 = vmatpush1.bf16.msra.mxu0 0
      %477 = vmatprep.subr.bf16.mxu0 0
      %478 = vmatpush1.bf16.msra.mxu0 0
      %479 = vmatprep.subr.bf16.mxu0 0
      %480 = vmatpush1.bf16.msra.mxu0 0
      %481 = vmatprep.subr.bf16.mxu0 0
      %482 = vmatpush1.bf16.msra.mxu0 0
      %483 = vmatprep.subr.bf16.mxu0 0
      %484 = vmatpush1.bf16.msra.mxu0 0
      %485 = vmatprep.subr.bf16.mxu0 0
      %486 = vmatpush1.bf16.msra.mxu0 0
      %487 = vmatprep.subr.bf16.mxu0 0
      %488 = vmatpush1.bf16.msra.mxu0 0
      %489 = vmatprep.mubr.bf16.mxu0 0
      %490 = vmatmul.mubr.bf16.gmra.mrb[0].mxu0 %v401
      %v491 = vpop.f32.mrb[0].mxu0
      %v492 = vadd.f32 0.0, %v491
      %v493 = vpop.f32.mrb[0].mxu0
      %v494 = vpop.f32.mrb[0].mxu0
      %v495 = vadd.f32 0.0, %v494
      %v496 = vpop.f32.mrb[0].mxu0
      %497 = vmatprep.mubr.bf16.mxu0 0
      %498 = vmatmul.mubr.bf16.gmra.mrb[0].mxu0 %v404
      %v499 = vpop.f32.mrb[0].mxu0
      %v500 = vadd.f32 0.0, %v499
      %v501 = vpop.f32.mrb[0].mxu0
      %v502 = vpop.f32.mrb[0].mxu0
      %v503 = vpop.f32.mrb[0].mxu0
      %504 = vdwg.mxu0
      %v505 = vld [vmem:[%s5] sm:$0x1]
      %vm506 = vcmask 1041408
      %v507 = vsel %vm506, %v449, 0.0
      %v509 = vlaneseq
      %v510 = vshrl.u32 %v509, 7
      %v511 = vsub.s32 0, %v510
      %v512 = vrot.slane %v505, %v511
      %v514 = vadd.f32 %v512, %v441
      %v515 = vadd.f32 %v512, %v444
      %v516 = vadd.f32 %v512, %v507
      %vm520 = vcmask 1040384
      %v521 = vrot.slane %v492, 7
      %v522 = vrot.slane %v495, 7
      %v523 = vsel %vm520, %v521, %v522
      %v524 = vrot.slane %v500, 7
      %v525 = vsel %vm520, %v522, %v524
      %v529 = vsel %vm520, 0.0, %v521
      %v530 = vadd.f32 %v514, %v529
      %v531 = vadd.f32 %v515, %v523
      %v532 = vadd.f32 %v516, %v525
      %v533 = vmax.f32 %v530, 0.0
      %v534 = vmax.f32 %v531, 0.0
      %v535 = vmax.f32 %v532, 0.0
      %v536 = vpack.c.bf16 %v534, %v533
      %v537 = vpack.c.bf16 %v535, %v535
      %v540 = vunpack.c.l.b16 %v536
      %v541 = vunpack.c.h.b16 %v536
      %v542 = vunpack.c.l.b16 %v537
      %v543 = vpack.c.b16 %v540, %v540
      %v544 = vpack.c.b16 %v541, %v541
      %v545 = vpack.c.b16 %v542, %v542
      %vm549 = vcmask 125952
      %550 = vst.msk [vmem:[%s271] sm:$0xf] %vm549, %v543
      %551 = vst.msk [vmem:[%s271 + $0x4] sm:$0xf] %vm549, %v544
      %vm552 = vcmask 123904
      %vm553 = vsmask.f32 1280
      %vm554 = vmand %vm552, %vm553
      %v555 = vld [vmem:[%s271 + $0x8] sm:$0x3]
      %v556 = vsel %vm554, %v545, %v555
      %557 = vst [vmem:[%s271 + $0x8] sm:$0x3] %v556
      %p558 = scmp.lt.s32.totalorder %s17, 1
      %s559 = scalar_select %p558, %s17, 1
      %s560 = smul.addr %s559, 3
      %s561 = smul.addr %s560, 4
      %s562 = scalar_lea.vmem %s6, %s561
      // Predicated region
      $region45: #{_lambda_.12} parent=43 // pred_check
        %p563 = pneg %p171
      $region46: #{_lambda_.12} parent=43 // pred_check_branch
        %565 = sbr.rel (%p563) target = $region48
      $region47: #{_lambda_.12} parent=43 // pred_region
        _
      $region48: #{_lambda_.12} parent=43 // pred_fallthru
        _
    $region44: #{_lambda_.12} parent=5 // pred_fallthru
      _
    %p566 = scmp.le.s32.totalorder 2, %s12
    // Predicated region
    $region49: #{_lambda_.12} parent=5 // pred_check
      %p567 = pneg %p566
    $region50: #{_lambda_.12} parent=5 // pred_check_branch
      %569 = sbr.rel (%p567) target = $region52
    $region51: #{_lambda_.12} parent=5 // pred_region
      %s570 = ssub.s32 %s12, 2
      // Predicated region
      $region53: #{_lambda_.12} parent=51 // pred_check
        %p571 = pneg %p177
      $region54: #{_lambda_.12} parent=51 // pred_check_branch
        %573 = sbr.rel (%p571) target = $region56
      $region55: #{_lambda_.12} parent=51 // pred_region
        %p574 = scmp.lt.s32.totalorder %s18, 1
        %s575 = scalar_select %p574, %s18, 1
        %s576 = smul.addr %s575, 3
        %s577 = smul.addr %s576, 4
        %s578 = scalar_lea.vmem %s6, %s577
      $region56: #{_lambda_.12} parent=51 // pred_fallthru
        _
    $region52: #{_lambda_.12} parent=5 // pred_fallthru
      _
  $region6: #{_lambda_.12} parent=0 // loop_footer
    %s16 = sadd.s32 1, %s12
  $region7: #{_lambda_.12} parent=0 // loop_footer_branch
    %11 = sbr.rel target = $region3
  $region8: #{_lambda_.12} parent=0 // loop_exit
    _

// kernel: _lambda_.13
$region0: #{_lambda_.13}
  #allocation0 [shape = 'u32[]', space=smem, size = 0x4, offset = 0x4, fixed_abs, tag = 'smem constant byte address 0x4 - core index']
  #allocation1 [shape = 'u32[144,128]{1,0:T(1,128)}', space=vmem, size = 0x12000, scoped, tag = 'internal scratch']
  %s0 = inlined_call_operand.vmem [shape: bf16[2,38,8], index: 0, kind: input, shape index: {}]
  %s1 = inlined_call_operand.vmem [shape: bf16[2,38,8], index: 1, kind: input, shape index: {}]
  %s2 = inlined_call_operand.vmem [shape: bf16[8,16], index: 2, kind: input, shape index: {}]
  %s3 = inlined_call_operand.vmem [shape: f32[1,16], index: 3, kind: input, shape index: {}]
  %s4 = inlined_call_operand.vmem [shape: bf16[8,12], index: 4, kind: input, shape index: {}]
  %s5 = inlined_call_operand.vmem [shape: f32[1,6], index: 5, kind: input, shape index: {}]
  %s6 = inlined_call_operand.vmem [shape: f32[2,39,6], index: 6, kind: output, shape index: {}]
  %s7 = sld [smem:[#allocation0]]
  $region57: #{_lambda_.13} parent=0
    _
  %s9 = ssub.s32 1, %s7
  %s10 = scalar_select 0, %s9, %s7
  loop: start=0, step=1, limit=4
  $region2: #{_lambda_.13} parent=0 // loop_pre_header
    _
  $region3: #{_lambda_.13} parent=0 // loop_header
    %s12 = sphi 0, %s16
    %p13 = scmp.ge.s32.totalorder %s12, 4
    %s22 = sphi 0, %s24
    %s25 = sphi 0, %s22
    %s26 = sphi 0, %s25
    %s42 = sphi 0, %s26
    %s48 = sphi 0, %s50
    %s51 = sphi 0, %s48
    %s52 = sphi 0, %s51
    %s68 = sphi 0, %s52
    %s72 = sphi 0, %s72
    %s74 = sphi 0, %s72
    %s75 = sphi 0, %s74
    %s89 = sphi 0, %s75
    %s93 = sphi 0, %s93
    %s95 = sphi 0, %s93
    %s96 = sphi 0, %s95
    %s110 = sphi 0, %s96
    %s114 = sphi 0, %s114
    %s116 = sphi 0, %s114
    %s117 = sphi 0, %s116
    %s131 = sphi 0, %s117
    %s135 = sphi 0, %s135
    %s137 = sphi 0, %s135
    %s138 = sphi 0, %s137
    %s152 = sphi 0, %s138
    %s158 = sphi 0, %s160
    %s161 = sphi 0, %s158
    %s162 = sphi 0, %s161
    %s178 = sphi 0, %s162
  $region4: #{_lambda_.13} parent=0 // loop_header_branch
    %15 = sbr.rel (%p13) target = $region8
  $region5: #{_lambda_.13} parent=0 // loop_body
    %s17 = ssub.s32 %s12, 1
    %s18 = ssub.s32 %s12, 2
    %s19 = sadd.s32 %s12, 1
    %s20 = ssub.s32 %s12, %s19
    %p21 = scmp.eq.s32.totalorder %s20, 0
    %s23 = sadd.s32 %s22, 1
    %s24 = scalar_select %p21, %s22, %s23
    %p27 = pneg %p21
    %p28 = scmp.eq.s32.totalorder %s12, 1
    %p29 = por %p27, %p28
    %p30 = scmp.ne.s32.totalorder %s22, %s25
    %p31 = scmp.eq.s32.totalorder %s12, 0
    %p32 = por %p30, %p31
    %p33 = scmp.ne.s32.totalorder %s22, %s25
    %p34 = scmp.eq.s32.totalorder %s17, 1
    %p35 = por %p33, %p34
    %p36 = scmp.ne.s32.totalorder %s25, %s26
    %p37 = scmp.eq.s32.totalorder %s17, 0
    %p38 = por %p36, %p37
    %p39 = scmp.ne.s32.totalorder %s25, %s26
    %p40 = scmp.eq.s32.totalorder %s18, 1
    %p41 = por %p39, %p40
    %p43 = scmp.ne.s32.totalorder %s26, %s42
    %p44 = scmp.eq.s32.totalorder %s18, 0
    %p45 = por %p43, %p44
    %s46 = ssub.s32 %s12, %s19
    %p47 = scmp.eq.s32.totalorder %s46, 0
    %s49 = sadd.s32 %s48, 1
    %s50 = scalar_select %p47, %s48, %s49
    %p53 = pneg %p47
    %p54 = scmp.eq.s32.totalorder %s12, 1
    %p55 = por %p53, %p54
    %p56 = scmp.ne.s32.totalorder %s48, %s51
    %p57 = scmp.eq.s32.totalorder %s12, 0
    %p58 = por %p56, %p57
    %p59 = scmp.ne.s32.totalorder %s48, %s51
    %p60 = scmp.eq.s32.totalorder %s17, 1
    %p61 = por %p59, %p60
    %p62 = scmp.ne.s32.totalorder %s51, %s52
    %p63 = scmp.eq.s32.totalorder %s17, 0
    %p64 = por %p62, %p63
    %p65 = scmp.ne.s32.totalorder %s51, %s52
    %p66 = scmp.eq.s32.totalorder %s18, 1
    %p67 = por %p65, %p66
    %p69 = scmp.ne.s32.totalorder %s52, %s68
    %p70 = scmp.eq.s32.totalorder %s18, 0
    %p71 = por %p69, %p70
    %s73 = sadd.s32 %s72, 1
    %p76 = scmp.eq.s32.totalorder %s12, 1
    %p77 = scmp.ne.s32.totalorder %s72, %s74
    %p78 = scmp.eq.s32.totalorder %s12, 0
    %p79 = por %p77, %p78
    %p80 = scmp.ne.s32.totalorder %s72, %s74
    %p81 = scmp.eq.s32.totalorder %s17, 1
    %p82 = por %p80, %p81
    %p83 = scmp.ne.s32.totalorder %s74, %s75
    %p84 = scmp.eq.s32.totalorder %s17, 0
    %p85 = por %p83, %p84
    %p86 = scmp.ne.s32.totalorder %s74, %s75
    %p87 = scmp.eq.s32.totalorder %s18, 1
    %p88 = por %p86, %p87
    %p90 = scmp.ne.s32.totalorder %s75, %s89
    %p91 = scmp.eq.s32.totalorder %s18, 0
    %p92 = por %p90, %p91
    %s94 = sadd.s32 %s93, 1
    %p97 = scmp.eq.s32.totalorder %s12, 1
    %p98 = scmp.ne.s32.totalorder %s93, %s95
    %p99 = scmp.eq.s32.totalorder %s12, 0
    %p100 = por %p98, %p99
    %p101 = scmp.ne.s32.totalorder %s93, %s95
    %p102 = scmp.eq.s32.totalorder %s17, 1
    %p103 = por %p101, %p102
    %p104 = scmp.ne.s32.totalorder %s95, %s96
    %p105 = scmp.eq.s32.totalorder %s17, 0
    %p106 = por %p104, %p105
    %p107 = scmp.ne.s32.totalorder %s95, %s96
    %p108 = scmp.eq.s32.totalorder %s18, 1
    %p109 = por %p107, %p108
    %p111 = scmp.ne.s32.totalorder %s96, %s110
    %p112 = scmp.eq.s32.totalorder %s18, 0
    %p113 = por %p111, %p112
    %s115 = sadd.s32 %s114, 1
    %p118 = scmp.eq.s32.totalorder %s12, 1
    %p119 = scmp.ne.s32.totalorder %s114, %s116
    %p120 = scmp.eq.s32.totalorder %s12, 0
    %p121 = por %p119, %p120
    %p122 = scmp.ne.s32.totalorder %s114, %s116
    %p123 = scmp.eq.s32.totalorder %s17, 1
    %p124 = por %p122, %p123
    %p125 = scmp.ne.s32.totalorder %s116, %s117
    %p126 = scmp.eq.s32.totalorder %s17, 0
    %p127 = por %p125, %p126
    %p128 = scmp.ne.s32.totalorder %s116, %s117
    %p129 = scmp.eq.s32.totalorder %s18, 1
    %p130 = por %p128, %p129
    %p132 = scmp.ne.s32.totalorder %s117, %s131
    %p133 = scmp.eq.s32.totalorder %s18, 0
    %p134 = por %p132, %p133
    %s136 = sadd.s32 %s135, 1
    %p139 = scmp.eq.s32.totalorder %s12, 1
    %p140 = scmp.ne.s32.totalorder %s135, %s137
    %p141 = scmp.eq.s32.totalorder %s12, 0
    %p142 = por %p140, %p141
    %p143 = scmp.ne.s32.totalorder %s135, %s137
    %p144 = scmp.eq.s32.totalorder %s17, 1
    %p145 = por %p143, %p144
    %p146 = scmp.ne.s32.totalorder %s137, %s138
    %p147 = scmp.eq.s32.totalorder %s17, 0
    %p148 = por %p146, %p147
    %p149 = scmp.ne.s32.totalorder %s137, %s138
    %p150 = scmp.eq.s32.totalorder %s18, 1
    %p151 = por %p149, %p150
    %p153 = scmp.ne.s32.totalorder %s138, %s152
    %p154 = scmp.eq.s32.totalorder %s18, 0
    %p155 = por %p153, %p154
    %s156 = ssub.s32 %s12, %s19
    %p157 = scmp.eq.s32.totalorder %s156, 0
    %s159 = sadd.s32 %s158, 1
    %s160 = scalar_select %p157, %s158, %s159
    %p163 = pneg %p157
    %p164 = scmp.eq.s32.totalorder %s12, 1
    %p165 = por %p163, %p164
    %p166 = scmp.ne.s32.totalorder %s158, %s161
    %p167 = scmp.eq.s32.totalorder %s12, 0
    %p168 = por %p166, %p167
    %p169 = scmp.ne.s32.totalorder %s158, %s161
    %p170 = scmp.eq.s32.totalorder %s17, 1
    %p171 = por %p169, %p170
    %p172 = scmp.ne.s32.totalorder %s161, %s162
    %p173 = scmp.eq.s32.totalorder %s17, 0
    %p174 = por %p172, %p173
    %p175 = scmp.ne.s32.totalorder %s161, %s162
    %p176 = scmp.eq.s32.totalorder %s18, 1
    %p177 = por %p175, %p176
    %p179 = scmp.ne.s32.totalorder %s162, %s178
    %p180 = scmp.eq.s32.totalorder %s18, 0
    %p181 = por %p179, %p180
    %p182 = scmp.le.s32.totalorder 1, %s12
    %p183 = scmp.lt.s32.totalorder %s12, 3
    %p184 = pnand %p182, %p183
    %p185 = pneg %p184
    // Predicated region
    $region9: #{_lambda_.13} parent=5 // pred_check
      _
    $region10: #{_lambda_.13} parent=5 // pred_check_branch
      %187 = sbr.rel (%p184) target = $region12
    $region11: #{_lambda_.13} parent=5 // pred_region
      %s188 = ssub.s32 %s12, 1
      // Predicated region
      $region13: #{_lambda_.13} parent=11 // pred_check
        %p189 = pneg %p85
      $region14: #{_lambda_.13} parent=11 // pred_check_branch
        %191 = sbr.rel (%p189) target = $region16
      $region15: #{_lambda_.13} parent=11 // pred_region
        _
      $region16: #{_lambda_.13} parent=11 // pred_fallthru
        _
      // Predicated region
      $region17: #{_lambda_.13} parent=11 // pred_check
        %p192 = pneg %p106
      $region18: #{_lambda_.13} parent=11 // pred_check_branch
        %194 = sbr.rel (%p192) target = $region20
      $region19: #{_lambda_.13} parent=11 // pred_region
        _
      $region20: #{_lambda_.13} parent=11 // pred_fallthru
        _
      // Predicated region
      $region21: #{_lambda_.13} parent=11 // pred_check
        %p195 = pneg %p127
      $region22: #{_lambda_.13} parent=11 // pred_check_branch
        %197 = sbr.rel (%p195) target = $region24
      $region23: #{_lambda_.13} parent=11 // pred_region
        _
      $region24: #{_lambda_.13} parent=11 // pred_fallthru
        _
      // Predicated region
      $region25: #{_lambda_.13} parent=11 // pred_check
        %p198 = pneg %p148
      $region26: #{_lambda_.13} parent=11 // pred_check_branch
        %200 = sbr.rel (%p198) target = $region28
      $region27: #{_lambda_.13} parent=11 // pred_region
        _
      $region28: #{_lambda_.13} parent=11 // pred_fallthru
        _
    $region12: #{_lambda_.13} parent=5 // pred_fallthru
      _
    %p201 = scmp.lt.s32.totalorder %s12, 2
    // Predicated region
    $region29: #{_lambda_.13} parent=5 // pred_check
      %p202 = pneg %p201
    $region30: #{_lambda_.13} parent=5 // pred_check_branch
      %204 = sbr.rel (%p202) target = $region32
    $region31: #{_lambda_.13} parent=5 // pred_region
      // Predicated region
      $region33: #{_lambda_.13} parent=31 // pred_check
        %p205 = pneg %p32
      $region34: #{_lambda_.13} parent=31 // pred_check_branch
        %207 = sbr.rel (%p205) target = $region36
      $region35: #{_lambda_.13} parent=31 // pred_region
        %p208 = scmp.lt.s32.totalorder %s12, 1
        %s209 = scalar_select %p208, %s12, 1
        %s210 = smul.addr %s209, 5
        %s211 = smul.addr %s210, 4
        %s212 = scalar_lea.vmem %s0, %s211
      $region36: #{_lambda_.13} parent=31 // pred_fallthru
        _
      // Predicated region
      $region37: #{_lambda_.13} parent=31 // pred_check
        %p213 = pneg %p58
      $region38: #{_lambda_.13} parent=31 // pred_check_branch
        %215 = sbr.rel (%p213) target = $region40
      $region39: #{_lambda_.13} parent=31 // pred_region
        %p216 = scmp.lt.s32.totalorder %s12, 1
        %s217 = scalar_select %p216, %s12, 1
        %s218 = smul.addr %s217, 5
        %s219 = smul.addr %s218, 4
        %s220 = scalar_lea.vmem %s1, %s219
      $region40: #{_lambda_.13} parent=31 // pred_fallthru
        _
    $region32: #{_lambda_.13} parent=5 // pred_fallthru
      _
    %p221 = scmp.le.s32.totalorder 1, %s12
    %p222 = scmp.lt.s32.totalorder %s12, 3
    %p223 = pnand %p221, %p222
    %p224 = pneg %p223
    // Predicated region
    $region41: #{_lambda_.13} parent=5 // pred_check
      _
    $region42: #{_lambda_.13} parent=5 // pred_check_branch
      %226 = sbr.rel (%p223) target = $region44
    $region43: #{_lambda_.13} parent=5 // pred_region
      %s227 = ssub.s32 %s12, 1
      %p228 = scmp.lt.s32.totalorder %s17, 1
      %s229 = scalar_select %p228, %s17, 1
      %s230 = smul.addr %s229, 5
      %s231 = smul.addr %s230, 4
      %s232 = scalar_lea.vmem %s0, %s231
      %p233 = pneg %p38
      %p234 = pneg %p35
      %p235 = scmp.lt.s32.totalorder %s17, 1
      %s236 = scalar_select %p235, %s17, 1
      %s237 = smul.addr %s236, 5
      %s238 = smul.addr %s237, 4
      %s239 = scalar_lea.vmem %s1, %s238
      %p240 = pneg %p64
      %p241 = pneg %p61
      %p242 = pneg %p85
      %p243 = pneg %p82
      %p244 = pneg %p106
      %p245 = pneg %p103
      %p246 = pneg %p127
      %p247 = pneg %p124
      %p248 = pneg %p148
      %p249 = pneg %p145
      %p250 = pneg %p174
      %p251 = pneg %p171
      %p252 = scmp.lt.s32.totalorder %s17, 1
      %s253 = scalar_select %p252, %s17, 1
      %s254 = smul.addr %s253, 5
      %s255 = smul.addr %s254, 8
      %s256 = scalar_lea.vmem %s6, %s255
      %p257 = scmp.lt.s32.totalorder %s17, 1
      %s258 = scalar_select %p257, %s17, 1
      %s259 = smul.addr %s258, 5
      %s260 = smul.addr %s259, 4
      %s261 = scalar_lea.vmem %s0, %s260
      %p262 = scmp.lt.s32.totalorder %s17, 1
      %s263 = scalar_select %p262, %s17, 1
      %s264 = smul.addr %s263, 5
      %s265 = smul.addr %s264, 4
      %s266 = scalar_lea.vmem %s1, %s265
      %p267 = scmp.lt.s32.totalorder %s17, 1
      %s268 = scalar_select %p267, %s17, 1
      %s269 = smul.addr %s268, 5
      %s270 = smul.addr %s269, 8
      %s271 = scalar_lea.vmem %s6, %s270
      %v273 = vld [vmem:[%s261] sm:$0xf]
      %v274 = vld [vmem:[%s261 + $0x4] sm:$0xf]
      %v275 = vld [vmem:[%s261 + $0x8] sm:$0xf]
      %v276 = vld [vmem:[%s261 + $0xc] sm:$0xf]
      %v277 = vld [vmem:[%s261 + $0x10] sm:$0x7]
      %v278 = vunpack.c.l.bf16 %v273
      %v279 = vunpack.c.l.bf16 %v274
      %v280 = vunpack.c.l.bf16 %v275
      %v281 = vunpack.c.l.bf16 %v276
      %v282 = vunpack.c.l.bf16 %v277
      %v283 = vld [vmem:[%s266] sm:$0xf]
      %v284 = vld [vmem:[%s266 + $0x4] sm:$0xf]
      %v285 = vld [vmem:[%s266 + $0x8] sm:$0xf]
      %v286 = vld [vmem:[%s266 + $0xc] sm:$0xf]
      %v287 = vld [vmem:[%s266 + $0x10] sm:$0x7]
      %v288 = vunpack.c.l.bf16 %v283
      %v289 = vunpack.c.l.bf16 %v284
      %v290 = vunpack.c.l.bf16 %v285
      %v291 = vunpack.c.l.bf16 %v286
      %v292 = vunpack.c.l.bf16 %v287
      %v293 = vadd.f32 %v278, %v288
      %v294 = vadd.f32 %v279, %v289
      %v295 = vadd.f32 %v280, %v290
      %v296 = vadd.f32 %v281, %v291
      %v297 = vadd.f32 %v282, %v292
      %v298 = vpack.c.bf16 %v294, %v293
      %v299 = vpack.c.bf16 %v296, %v295
      %v300 = vpack.c.bf16 %v297, %v297
      %v301 = vld [vmem:[%s2] sm:$0xf]
      %v302 = vld [vmem:[%s3] sm:$0x1]
      %v304 = vlaneseq
      %v305 = vshrl.u32 %v304, 7
      %v306 = vsub.s32 0, %v305
      %v307 = vrot.slane %v302, %v306
      %vm309 = vcmask 64512
      %v311 = vsel %vm309, %v298, 0
      %v314 = vsel %vm309, %v299, 0
      %v317 = vsel %vm309, %v300, 0
      %vm319 = vcmask 1043456
      %v321 = vsel %vm319, %v301, 0
      %323 = vmatprep.subr.bf16.mxu0 0
      %324 = vmatpush1.bf16.msra.mxu0 %v321
      %325 = vmatprep.subr.bf16.mxu0 0
      %326 = vmatpush1.bf16.msra.mxu0 0
      %327 = vmatprep.subr.bf16.mxu0 0
      %328 = vmatpush1.bf16.msra.mxu0 0
      %329 = vmatprep.subr.bf16.mxu0 0
      %330 = vmatpush1.bf16.msra.mxu0 0
      %331 = vmatprep.subr.bf16.mxu0 0
      %332 = vmatpush1.bf16.msra.mxu0 0
      %333 = vmatprep.subr.bf16.mxu0 0
      %334 = vmatpush1.bf16.msra.mxu0 0
      %335 = vmatprep.subr.bf16.mxu0 0
      %336 = vmatpush1.bf16.msra.mxu0 0
      %337 = vmatprep.subr.bf16.mxu0 0
      %338 = vmatpush1.bf16.msra.mxu0 0
      %339 = vmatprep.subr.bf16.mxu0 0
      %340 = vmatpush1.bf16.msra.mxu0 0
      %341 = vmatprep.subr.bf16.mxu0 0
      %342 = vmatpush1.bf16.msra.mxu0 0
      %343 = vmatprep.subr.bf16.mxu0 0
      %344 = vmatpush1.bf16.msra.mxu0 0
      %345 = vmatprep.subr.bf16.mxu0 0
      %346 = vmatpush1.bf16.msra.mxu0 0
      %347 = vmatprep.subr.bf16.mxu0 0
      %348 = vmatpush1.bf16.msra.mxu0 0
      %349 = vmatprep.subr.bf16.mxu0 0
      %350 = vmatpush1.bf16.msra.mxu0 0
      %351 = vmatprep.subr.bf16.mxu0 0
      %352 = vmatpush1.bf16.msra.mxu0 0
      %353 = vmatprep.subr.bf16.mxu0 0
      %354 = vmatpush1.bf16.msra.mxu0 0
      %355 = vmatprep.mubr.bf16.mxu0 0
      %356 = vmatmul.mubr.bf16.gmra.mrb[0].mxu0 %v311
      %v357 = vpop.f32.mrb[0].mxu0
      %v358 = vadd.f32 %v307, %v357
      %v359 = vpop.f32.mrb[0].mxu0
      %v360 = vpop.f32.mrb[0].mxu0
      %v361 = vadd.f32 %v307, %v360
      %v362 = vpop.f32.mrb[0].mxu0
      %363 = vmatprep.mubr.bf16.mxu0 0
      %364 = vmatmul.mubr.bf16.gmra.mrb[0].mxu0 %v314
      %v365 = vpop.f32.mrb[0].mxu0
      %v366 = vadd.f32 %v307, %v365
      %v367 = vpop.f32.mrb[0].mxu0
      %v368 = vpop.f32.mrb[0].mxu0
      %v369 = vadd.f32 %v307, %v368
      %v370 = vpop.f32.mrb[0].mxu0
      %371 = vmatprep.mubr.bf16.mxu0 0
      %372 = vmatmul.mubr.bf16.gmra.mrb[0].mxu0 %v317
      %v373 = vpop.f32.mrb[0].mxu0
      %v374 = vadd.f32 %v307, %v373
      %v375 = vpop.f32.mrb[0].mxu0
      %v376 = vpop.f32.mrb[0].mxu0
      %v377 = vpop.f32.mrb[0].mxu0
      %378 = vdwg.mxu0
      %v379 = vsub.f32 0.0, %v358
      %v380 = vsub.f32 0.0, %v361
      %v381 = vsub.f32 0.0, %v366
      %v382 = vsub.f32 0.0, %v369
      %v383 = vsub.f32 0.0, %v374
      %v384 = vmul.f32 %v379, 1.442695
      %v385 = vpow.pop %v384
      %v386 = vmul.f32 %v380, 1.442695
      %v387 = vpow.pop %v386
      %v388 = vmul.f32 %v381, 1.442695
      %v389 = vpow.pop %v388
      %v390 = vmul.f32 %v382, 1.442695
      %v391 = vpow.pop %v390
      %v392 = vmul.f32 %v383, 1.442695
      %v393 = vpow.pop %v392
      %v394 = vadd.f32 %v385, 1.0
      %v395 = vadd.f32 %v387, 1.0
      %v396 = vadd.f32 %v389, 1.0
      %v397 = vadd.f32 %v391, 1.0
      %v398 = vadd.f32 %v393, 1.0
      %v399 = vrcp.pop %v394
      %v400 = vrcp.pop %v395
      %v401 = vrcp.pop %v396
      %v402 = vrcp.pop %v397
      %v403 = vrcp.pop %v398
      %409 = vrot.lane.b32.xlu0 %v399, 120
      %v410 = vpop.permute.xlu0 %409
      %411 = vrot.lane.b32.xlu0 %v400, 120
      %v412 = vpop.permute.xlu0 %411
      %413 = vrot.lane.b32.xlu0 %v401, 120
      %v414 = vpop.permute.xlu0 %413
      %415 = vrot.lane.b32.xlu0 %v402, 120
      %v416 = vpop.permute.xlu0 %415
      %417 = vrot.lane.b32.xlu0 %v403, 120
      %v418 = vpop.permute.xlu0 %417
      %v424 = vmul.f32 %v358, %v410
      %v425 = vmul.f32 %v361, %v412
      %v426 = vmul.f32 %v366, %v414
      %v427 = vmul.f32 %v369, %v416
      %v428 = vmul.f32 %v374, %v418
      %v429 = vpack.c.bf16 %v425, %v424
      %v430 = vpack.c.bf16 %v427, %v426
      %v431 = vpack.c.bf16 %v428, %v428
      %v432 = vld [vmem:[%s4] sm:$0xf]
      %v434 = vsel %vm309, %v429, 0
      %v437 = vsel %vm309, %v430, 0
      %v440 = vsel %vm309, %v431, 0
      %v443 = vsel %vm319, %v432, 0
      %445 = vmatprep.subr.bf16.mxu0 0
      %446 = vmatpush1.bf16.msra.mxu0 %v443
      %447 = vmatprep.subr.bf16.mxu0 0
      %448 = vmatpush1.bf16.msra.mxu0 0
      %449 = vmatprep.subr.bf16.mxu0 0
      %450 = vmatpush1.bf16.msra.mxu0 0
      %451 = vmatprep.subr.bf16.mxu0 0
      %452 = vmatpush1.bf16.msra.mxu0 0
      %453 = vmatprep.subr.bf16.mxu0 0
      %454 = vmatpush1.bf16.msra.mxu0 0
      %455 = vmatprep.subr.bf16.mxu0 0
      %456 = vmatpush1.bf16.msra.mxu0 0
      %457 = vmatprep.subr.bf16.mxu0 0
      %458 = vmatpush1.bf16.msra.mxu0 0
      %459 = vmatprep.subr.bf16.mxu0 0
      %460 = vmatpush1.bf16.msra.mxu0 0
      %461 = vmatprep.subr.bf16.mxu0 0
      %462 = vmatpush1.bf16.msra.mxu0 0
      %463 = vmatprep.subr.bf16.mxu0 0
      %464 = vmatpush1.bf16.msra.mxu0 0
      %465 = vmatprep.subr.bf16.mxu0 0
      %466 = vmatpush1.bf16.msra.mxu0 0
      %467 = vmatprep.subr.bf16.mxu0 0
      %468 = vmatpush1.bf16.msra.mxu0 0
      %469 = vmatprep.subr.bf16.mxu0 0
      %470 = vmatpush1.bf16.msra.mxu0 0
      %471 = vmatprep.subr.bf16.mxu0 0
      %472 = vmatpush1.bf16.msra.mxu0 0
      %473 = vmatprep.subr.bf16.mxu0 0
      %474 = vmatpush1.bf16.msra.mxu0 0
      %475 = vmatprep.subr.bf16.mxu0 0
      %476 = vmatpush1.bf16.msra.mxu0 0
      %477 = vmatprep.mubr.bf16.mxu0 0
      %478 = vmatmul.mubr.bf16.gmra.mrb[0].mxu0 %v434
      %v479 = vpop.f32.mrb[0].mxu0
      %v480 = vadd.f32 0.0, %v479
      %v481 = vpop.f32.mrb[0].mxu0
      %v482 = vpop.f32.mrb[0].mxu0
      %v483 = vadd.f32 0.0, %v482
      %v484 = vpop.f32.mrb[0].mxu0
      %485 = vmatprep.mubr.bf16.mxu0 0
      %486 = vmatmul.mubr.bf16.gmra.mrb[0].mxu0 %v437
      %v487 = vpop.f32.mrb[0].mxu0
      %v488 = vadd.f32 0.0, %v487
      %v489 = vpop.f32.mrb[0].mxu0
      %v490 = vpop.f32.mrb[0].mxu0
      %v491 = vadd.f32 0.0, %v490
      %v492 = vpop.f32.mrb[0].mxu0
      %493 = vmatprep.mubr.bf16.mxu0 0
      %494 = vmatmul.mubr.bf16.gmra.mrb[0].mxu0 %v440
      %v495 = vpop.f32.mrb[0].mxu0
      %v496 = vadd.f32 0.0, %v495
      %v497 = vpop.f32.mrb[0].mxu0
      %v498 = vpop.f32.mrb[0].mxu0
      %v499 = vpop.f32.mrb[0].mxu0
      %500 = vdwg.mxu0
      %v502 = vunpack.c.l.b16 %v432
      %v503 = vpack.c.b16 %v502, %v502
      %504 = vrot.lane.b32.xlu0 %v503, 122
      %v505 = vpop.permute.xlu0 %504
      %v507 = vsel %vm319, %v505, 0
      %509 = vmatprep.subr.bf16.mxu0 0
      %510 = vmatpush1.bf16.msra.mxu0 %v507
      %511 = vmatprep.subr.bf16.mxu0 0
      %512 = vmatpush1.bf16.msra.mxu0 0
      %513 = vmatprep.subr.bf16.mxu0 0
      %514 = vmatpush1.bf16.msra.mxu0 0
      %515 = vmatprep.subr.bf16.mxu0 0
      %516 = vmatpush1.bf16.msra.mxu0 0
      %517 = vmatprep.subr.bf16.mxu0 0
      %518 = vmatpush1.bf16.msra.mxu0 0
      %519 = vmatprep.subr.bf16.mxu0 0
      %520 = vmatpush1.bf16.msra.mxu0 0
      %521 = vmatprep.subr.bf16.mxu0 0
      %522 = vmatpush1.bf16.msra.mxu0 0
      %523 = vmatprep.subr.bf16.mxu0 0
      %524 = vmatpush1.bf16.msra.mxu0 0
      %525 = vmatprep.subr.bf16.mxu0 0
      %526 = vmatpush1.bf16.msra.mxu0 0
      %527 = vmatprep.subr.bf16.mxu0 0
      %528 = vmatpush1.bf16.msra.mxu0 0
      %529 = vmatprep.subr.bf16.mxu0 0
      %530 = vmatpush1.bf16.msra.mxu0 0
      %531 = vmatprep.subr.bf16.mxu0 0
      %532 = vmatpush1.bf16.msra.mxu0 0
      %533 = vmatprep.subr.bf16.mxu0 0
      %534 = vmatpush1.bf16.msra.mxu0 0
      %535 = vmatprep.subr.bf16.mxu0 0
      %536 = vmatpush1.bf16.msra.mxu0 0
      %537 = vmatprep.subr.bf16.mxu0 0
      %538 = vmatpush1.bf16.msra.mxu0 0
      %539 = vmatprep.subr.bf16.mxu0 0
      %540 = vmatpush1.bf16.msra.mxu0 0
      %541 = vmatprep.mubr.bf16.mxu0 0
      %542 = vmatmul.mubr.bf16.gmra.mrb[0].mxu0 %v434
      %v543 = vpop.f32.mrb[0].mxu0
      %v544 = vadd.f32 0.0, %v543
      %v545 = vpop.f32.mrb[0].mxu0
      %v546 = vpop.f32.mrb[0].mxu0
      %v547 = vadd.f32 0.0, %v546
      %v548 = vpop.f32.mrb[0].mxu0
      %549 = vmatprep.mubr.bf16.mxu0 0
      %550 = vmatmul.mubr.bf16.gmra.mrb[0].mxu0 %v437
      %v551 = vpop.f32.mrb[0].mxu0
      %v552 = vadd.f32 0.0, %v551
      %v553 = vpop.f32.mrb[0].mxu0
      %v554 = vpop.f32.mrb[0].mxu0
      %v555 = vadd.f32 0.0, %v554
      %v556 = vpop.f32.mrb[0].mxu0
      %557 = vmatprep.mubr.bf16.mxu0 0
      %558 = vmatmul.mubr.bf16.gmra.mrb[0].mxu0 %v440
      %v559 = vpop.f32.mrb[0].mxu0
      %v560 = vadd.f32 0.0, %v559
      %v561 = vpop.f32.mrb[0].mxu0
      %v562 = vpop.f32.mrb[0].mxu0
      %v563 = vpop.f32.mrb[0].mxu0
      %564 = vdwg.mxu0
      %v565 = vld [vmem:[%s5] sm:$0x1]
      %vm566 = vcmask 1045504
      %v567 = vsel %vm566, %v496, 0.0
      %v569 = vlaneseq
      %v570 = vshrl.u32 %v569, 7
      %v571 = vsub.s32 0, %v570
      %v572 = vrot.slane %v565, %v571
      %v574 = vadd.f32 %v572, %v480
      %v575 = vadd.f32 %v572, %v483
      %v576 = vadd.f32 %v572, %v488
      %v577 = vadd.f32 %v572, %v491
      %v578 = vadd.f32 %v572, %v567
      %vm584 = vcmask 1040384
      %v585 = vrot.slane %v544, 7
      %v586 = vrot.slane %v547, 7
      %v587 = vsel %vm584, %v585, %v586
      %v588 = vrot.slane %v552, 7
      %v589 = vsel %vm584, %v586, %v588
      %v590 = vrot.slane %v555, 7
      %v591 = vsel %vm584, %v588, %v590
      %v592 = vrot.slane %v560, 7
      %v593 = vsel %vm584, %v590, %v592
      %v599 = vsel %vm584, 0.0, %v585
      %v600 = vadd.f32 %v574, %v599
      %v601 = vadd.f32 %v575, %v587
      %v602 = vadd.f32 %v576, %v589
      %v603 = vadd.f32 %v577, %v591
      %v604 = vadd.f32 %v578, %v593
      %vm605 = vcmask 48128
      %606 = vst.msk [vmem:[%s271] sm:$0xff] %vm605, %v600
      %607 = vst.msk [vmem:[%s271 + $0x8] sm:$0xff] %vm605, %v601
      %608 = vst.msk [vmem:[%s271 + $0x10] sm:$0xff] %vm605, %v602
      %609 = vst.msk [vmem:[%s271 + $0x18] sm:$0xff] %vm605, %v603
      %vm610 = vcmask 47104
      %611 = vst.msk [vmem:[%s271 + $0x20] sm:$0x7f] %vm610, %v604
      %p612 = scmp.lt.s32.totalorder %s17, 1
      %s613 = scalar_select %p612, %s17, 1
      %s614 = smul.addr %s613, 5
      %s615 = smul.addr %s614, 8
      %s616 = scalar_lea.vmem %s6, %s615
      // Predicated region
      $region45: #{_lambda_.13} parent=43 // pred_check
        %p617 = pneg %p171
      $region46: #{_lambda_.13} parent=43 // pred_check_branch
        %619 = sbr.rel (%p617) target = $region48
      $region47: #{_lambda_.13} parent=43 // pred_region
        _
      $region48: #{_lambda_.13} parent=43 // pred_fallthru
        _
    $region44: #{_lambda_.13} parent=5 // pred_fallthru
      _
    %p620 = scmp.le.s32.totalorder 2, %s12
    // Predicated region
    $region49: #{_lambda_.13} parent=5 // pred_check
      %p621 = pneg %p620
    $region50: #{_lambda_.13} parent=5 // pred_check_branch
      %623 = sbr.rel (%p621) target = $region52
    $region51: #{_lambda_.13} parent=5 // pred_region
      %s624 = ssub.s32 %s12, 2
      // Predicated region
      $region53: #{_lambda_.13} parent=51 // pred_check
        %p625 = pneg %p177
      $region54: #{_lambda_.13} parent=51 // pred_check_branch
        %627 = sbr.rel (%p625) target = $region56
      $region55: #{_lambda_.13} parent=51 // pred_region
        %p628 = scmp.lt.s32.totalorder %s18, 1
        %s629 = scalar_select %p628, %s18, 1
        %s630 = smul.addr %s629, 5
        %s631 = smul.addr %s630, 8
        %s632 = scalar_lea.vmem %s6, %s631
      $region56: #{_lambda_.13} parent=51 // pred_fallthru
        _
    $region52: #{_lambda_.13} parent=5 // pred_fallthru
      _
  $region6: #{_lambda_.13} parent=0 // loop_footer
    %s16 = sadd.s32 1, %s12
  $region7: #{_lambda_.13} parent=0 // loop_footer_branch
    %11 = sbr.rel target = $region3
  $region8: #{_lambda_.13} parent=0 // loop_exit
    _

</llo_original>
